<compile_context>
chip_gen: v7x
topology: tpu7x:2x2x1
jax: 0.10.0
libtpu: 0.0.40
codegen_flags: <defaults>
</compile_context>

<pallas_src>
import jax
import jax.numpy as jnp
from jax.experimental import pallas as pl
from jax.experimental.pallas import tpu as pltpu

KH = KW = 5
PAD = 2
NPAD = 128                      # lane-dense output width (Cout / 10 padded to 128)
C1, C2, NOUT = 16, 32, 10       # fixed module architecture
VMEM_LIMIT = 32 * 1024 * 1024   # explicit scoped-VMEM budget (safe on v5e/v6e/v7x)


def _round_up(x, m):
    return (x + m - 1) // m * m


def _kpad(k):
    # contraction pad: multiple of 128 for large K, but only 32 for tiny K (layer 1: 25 -> 32).
    return _round_up(k, 128) if k > 128 else _round_up(k, 32)


def _tiles(m, tile_m):
    """Pick row-tile tm (mult of 16), padded rows Mp, grid size T with T >= 2 (v7x dual-TC)."""
    tile_m = max(16, _round_up(tile_m, 16))
    tm = min(tile_m, max(16, _round_up((m + 1) // 2, 16)))
    mp = max(_round_up(m, tm), 2 * tm)          # guarantee at least 2 grid steps
    return tm, mp, mp // tm


# ----------------------------- Pallas kernels -----------------------------

def conv_relu_pool_kernel(x_ref, w_ref, b_ref, o_ref):
    """Fused conv(+bias)+ReLU+2x2 max-pool on stacked im2col inputs.

    x_ref : (4*TM, Kp) bf16 -- rows [o*TM:(o+1)*TM] are the im2col rows for pooling offset o
    w_ref : (Kp, 128)  bf16 -- HWIO-flattened weight, zero-padded in K and N
    b_ref : (1, 128)   f32  -- bias, zero-padded
    o_ref : (TM, 128)  bf16 -- relu(max_offset(conv) + b)
    """
    tm = o_ref.shape[0]
    w = w_ref[...]
    # Four (TM,Kp)x(Kp,128) MXU dots with a running max: avoids a (4*TM,128) f32 intermediate that
    # spills the vreg file (worst on v5e's single store slot); bf16 in, f32 accumulate.
    m = jnp.dot(x_ref[pl.ds(0, tm), :], w, preferred_element_type=jnp.float32)
    for o in range(1, 4):
        m = jnp.maximum(
            m, jnp.dot(x_ref[pl.ds(o * tm, tm), :], w, preferred_element_type=jnp.float32))
    # bias + ReLU once after the max (exact: both monotone), cast to bf16 on store.
    o_ref[...] = jnp.maximum(m + b_ref[...], 0.0).astype(o_ref.dtype)


def linear_kernel(x_ref, w_ref, b_ref, o_ref):
    """o = x @ w + b ; x:(TM,Kp) bf16, w:(Kp,128) bf16, b:(1,128) f32, o:(TM,128) f32."""
    o_ref[...] = (
        jnp.dot(x_ref[...], w_ref[...], preferred_element_type=jnp.float32) + b_ref[...]
    )


# ------------------------------- glue (JAX) --------------------------------

def _im2col_stacked(x_nhwc, tm, mp):
    """Tile-interleaved stacked im2col matrix from an NHWC feature map.

    Returns x4 of shape (T*4*tm, Kp) bf16 where grid tile i occupies rows [i*4*tm, (i+1)*4*tm):
    4 contiguous (tm, Kp) slabs, one per 2x2 pooling offset.  Column order is (kh*5+kw)*C + c
    (matches the HWIO-flattened weight built in prepare_params).
    """
    B, H, W, C = x_nhwc.shape
    Ho, Wo = H // 2, W // 2
    M = B * Ho * Wo
    K = C * KH * KW
    Kp = _kpad(K)
    T = mp // tm

    xp = jnp.pad(x_nhwc, ((0, 0), (PAD, PAD), (PAD, PAD), (0, 0)))
    offs = []
    for dy in range(2):
        for dx in range(2):
            patches = []
            for kh in range(KH):
                for kw in range(KW):
                    patches.append(xp[:, dy + kh: dy + kh + 2 * Ho: 2,
                                       dx + kw: dx + kw + 2 * Wo: 2, :])   # (B,Ho,Wo,C)
            p = jnp.stack(patches, axis=3)                                  # (B,Ho,Wo,25,C)
            offs.append(p.reshape(M, K))
    x4 = jnp.stack(offs, axis=0)                                            # (4, M, K)
    x4 = jnp.pad(x4, ((0, 0), (0, mp - M), (0, Kp - K)))
    x4 = x4.reshape(4, T, tm, Kp).transpose(1, 0, 2, 3).reshape(T * 4 * tm, Kp)
    return x4.astype(jnp.bfloat16), Kp


def conv_relu_pool(x_nhwc, wm, bm, cout, tile_m=256):
    """Conv2d(5x5,s1,p2) + ReLU + MaxPool2d(2) on an NHWC input via one fused Pallas kernel.

    Returns the pooled feature map in NHWC, bf16.  (tile_m can be raised to 512-1024 for large
    batches on v6e/v7x; VMEM stays well under the 32 MiB scoped limit.)
    """
    B, H, W, C = x_nhwc.shape
    Ho, Wo = H // 2, W // 2
    M = B * Ho * Wo
    tm, Mp, T = _tiles(M, tile_m)
    x4, Kp = _im2col_stacked(x_nhwc, tm, Mp)

    out = pl.pallas_call(
        conv_relu_pool_kernel,
        out_shape=jax.ShapeDtypeStruct((Mp, NPAD), jnp.bfloat16),
        grid=(T,),
        in_specs=[pl.BlockSpec((4 * tm, Kp), lambda i: (i, 0)),
                  pl.BlockSpec((Kp, NPAD), lambda i: (0, 0)),
                  pl.BlockSpec((1, NPAD), lambda i: (0, 0))],
        out_specs=pl.BlockSpec((tm, NPAD), lambda i: (i, 0)),
        compiler_params=pltpu.CompilerParams(
            dimension_semantics=("parallel",),
            vmem_limit_bytes=VMEM_LIMIT),
    )(x4, wm, bm)

    out = out[:M, :cout]                                   # drop M / lane padding
    return out.reshape(B, Ho, Wo, cout)                    # stay NHWC (no transpose)


def linear(x, wm, bm, n_out, tile_m=256):
    """x:(M,K) -> (M,n_out); wm:(Kp,128) bf16 pre-transposed/permuted/padded, bm:(1,128) f32."""
    M, K = x.shape
    Kp = wm.shape[0]
    tm, Mp, T = _tiles(M, tile_m)
    xp = jnp.pad(x, ((0, Mp - M), (0, Kp - K))).astype(jnp.bfloat16)

    out = pl.pallas_call(
        linear_kernel,
        out_shape=jax.ShapeDtypeStruct((Mp, NPAD), jnp.float32),
        grid=(T,),
        in_specs=[pl.BlockSpec((tm, Kp), lambda i: (i, 0)),
                  pl.BlockSpec((Kp, NPAD), lambda i: (0, 0)),
                  pl.BlockSpec((1, NPAD), lambda i: (0, 0))],
        out_specs=pl.BlockSpec((tm, NPAD), lambda i: (i, 0)),
        compiler_params=pltpu.CompilerParams(
            dimension_semantics=("parallel",),
            vmem_limit_bytes=VMEM_LIMIT),
    )(xp, wm, bm)
    return out[:M, :n_out]


# -------------------- weight prep (hoisted, done once) ----------------------

def prepare_params(params):
    def conv_w(w_oihw):
        cout, cin = w_oihw.shape[0], w_oihw.shape[1]
        k = cin * KH * KW
        kp = _kpad(k)
        # HWIO flatten: row index = (kh*5+kw)*cin + ci, matching the NHWC im2col column order.
        wm = jnp.transpose(w_oihw, (2, 3, 1, 0)).reshape(k, cout)
        wm = jnp.pad(wm, ((0, kp - k), (0, NPAD - cout)))
        return wm.astype(jnp.bfloat16)

    def vec_b(b):
        return jnp.pad(b, (0, NPAD - b.shape[0])).reshape(1, NPAD).astype(jnp.float32)

    # Permute linear weight columns from NCHW-flatten order (c,h,w) to NHWC-flatten order (h,w,c)
    # so the conv2 output can be fed without transposing back to NCHW.
    wo = params["w_out"]                                      # (10, 1568), cols = c*49 + h*7 + w
    idx = jnp.arange(C2 * 7 * 7).reshape(C2, 7, 7)
    perm = jnp.transpose(idx, (1, 2, 0)).reshape(-1)          # NHWC col j -> NCHW col perm[j]
    wo_nhwc = wo[:, perm]
    n, k = wo_nhwc.shape
    kp = _round_up(k, 128)
    wo_m = jnp.pad(wo_nhwc.T, ((0, kp - k), (0, NPAD - n))).astype(jnp.bfloat16)

    return {
        "wm1": conv_w(params["w1"]), "bm1": vec_b(params["b1"]),
        "wm2": conv_w(params["w2"]), "bm2": vec_b(params["b2"]),
        "wm_out": wo_m, "bm_out": vec_b(params["b_out"]),
    }


def cnn_forward(x_nchw, prep):
    x_nhwc = jnp.transpose(x_nchw, (0, 2, 3, 1))              # C=1: effectively a reshape
    h1 = conv_relu_pool(x_nhwc, prep["wm1"], prep["bm1"], C1)  # (B,14,14,16) NHWC bf16
    h2 = conv_relu_pool(h1, prep["wm2"], prep["bm2"], C2)      # (B, 7, 7,32) NHWC bf16
    B = h2.shape[0]
    x_lin = h2.reshape(B, -1)                                  # NHWC-flat, matches permuted w_out
    logits = linear(x_lin, prep["wm_out"], prep["bm_out"], NOUT)
    # Module semantics: the returned features are the NCHW flatten (f32).  Only this tiny tensor
    # needs the transpose; the logits path stays NHWC throughout.
    x_flat = jnp.transpose(h2, (0, 3, 1, 2)).reshape(B, -1).astype(jnp.float32)
    return logits, x_flat


# ---------------------- deterministic parameter init -----------------------

def init_params(key):
    def uni(k, shape, fan_in):
        bound = 1.0 / jnp.sqrt(jnp.float32(fan_in))
        return jax.random.uniform(k, shape, jnp.float32, -bound, bound)

    ks = jax.random.split(key, 6)
    return {
        "w1": uni(ks[0], (C1, 1, 5, 5), 1 * 5 * 5),
        "b1": uni(ks[1], (C1,), 1 * 5 * 5),
        "w2": uni(ks[2], (C2, C1, 5, 5), C1 * 5 * 5),
        "b2": uni(ks[3], (C2,), C1 * 5 * 5),
        "w_out": uni(ks[4], (NOUT, C2 * 7 * 7), C2 * 7 * 7),
        "b_out": uni(ks[5], (NOUT,), C2 * 7 * 7),
    }


# --------------------------- pure-JAX reference -----------------------------

def _ref_forward(x, params):
    def conv(x, w, b):
        y = jax.lax.conv_general_dilated(
            x, w, window_strides=(1, 1), padding=((2, 2), (2, 2)),
            dimension_numbers=("NCHW", "OIHW", "NCHW"),
            precision=jax.lax.Precision.HIGHEST)
        return y + b[None, :, None, None]

    def pool(x):
        B, C, H, W = x.shape
        return x.reshape(B, C, H // 2, 2, W // 2, 2).max(axis=(3, 5))

    h = pool(jax.nn.relu(conv(x, params["w1"], params["b1"])))
    h = pool(jax.nn.relu(conv(h, params["w2"], params["b2"])))
    x_flat = h.reshape(h.shape[0], -1)
    out = x_flat @ params["w_out"].T + params["b_out"]
    return out, x_flat


# --------------------------------- main -------------------------------------

if __name__ == "__main__":
    key = jax.random.PRNGKey(0)
    k_x, k_p = jax.random.split(key)

    # Input must be (B,1,28,28) so that 32*7*7 matches the Linear layer.
    x = jax.random.normal(k_x, (2, 1, 28, 28), dtype=jnp.float32)
    params = init_params(k_p)
    prep = jax.tree_util.tree_map(jax.block_until_ready, prepare_params(params))  # hoisted, once

    fwd = jax.jit(cnn_forward)
    out, x_flat = fwd(x, prep)
    out = jax.block_until_ready(out)
    x_flat = jax.block_until_ready(x_flat)

    assert out.shape == (2, NOUT) and x_flat.shape == (2, C2 * 7 * 7)

    ref_out, ref_flat = _ref_forward(x, params)
    # bf16 MXU inputs / bf16 intermediate activations with f32 accumulation -> loose-ish tolerance.
    assert jnp.allclose(out, ref_out, rtol=2e-2, atol=2e-2), "logits mismatch vs reference"
    assert jnp.allclose(x_flat, ref_flat, rtol=2e-2, atol=2e-2), "features mismatch vs reference"

    print("KERNEL_OK")
</pallas_src>

<mosaic_0001>
module attributes {stable_mosaic.version = 11 : i64} {
  func.func @conv_relu_pool_kernel(%arg0: i32, %arg1: memref<832x32xbf16, #tpu.memory_space<vmem>>, %arg2: memref<32x128xbf16, #tpu.memory_space<vmem>>, %arg3: memref<1x128xf32, #tpu.memory_space<vmem>>, %arg4: memref<208x128xbf16, #tpu.memory_space<vmem>>) attributes {dimension_semantics = [#tpu.dimension_semantics<parallel>], iteration_bounds = array<i64: 2>, scalar_prefetch = 0 : i64, scratch_operands = 0 : i64, tpu.core_type = #tpu.core_type<tc>, window_params = [{transform_indices = @transform_0, window_bounds = array<i64: 832, 32>}, {pipeline_mode = #tpu.pipeline_mode<synchronous>, transform_indices = @transform_1, window_bounds = array<i64: 32, 128>}, {pipeline_mode = #tpu.pipeline_mode<synchronous>, transform_indices = @transform_2, window_bounds = array<i64: 1, 128>}, {transform_indices = @transform_3, window_bounds = array<i64: 208, 128>}]} {
    %c0 = arith.constant 0 : index
    %c0_0 = arith.constant 0 : index
    %0 = vector.load %arg2[%c0, %c0_0] : memref<32x128xbf16, #tpu.memory_space<vmem>>, vector<32x128xbf16>
    %c0_1 = arith.constant 0 : index
    %c0_2 = arith.constant 0 : index
    %1 = vector.load %arg1[%c0_1, %c0_2] : memref<832x32xbf16, #tpu.memory_space<vmem>>, vector<208x32xbf16>
    %cst = arith.constant dense<0.000000e+00> : vector<208x128xf32>
    %2 = tpu.matmul %1, %0, %cst {dimension_numbers = #tpu.dot_dimension_numbers<[1], [0], [0], [1], [0, 0, 1, 1], [], []>} : vector<208x32xbf16>, vector<32x128xbf16>, vector<208x128xf32> -> vector<208x128xf32>
    %c208 = arith.constant 208 : index
    %c0_3 = arith.constant 0 : index
    %3 = vector.load %arg1[%c208, %c0_3] : memref<832x32xbf16, #tpu.memory_space<vmem>>, vector<208x32xbf16>
    %cst_4 = arith.constant dense<0.000000e+00> : vector<208x128xf32>
    %4 = tpu.matmul %3, %0, %cst_4 {dimension_numbers = #tpu.dot_dimension_numbers<[1], [0], [0], [1], [0, 0, 1, 1], [], []>} : vector<208x32xbf16>, vector<32x128xbf16>, vector<208x128xf32> -> vector<208x128xf32>
    %5 = arith.maximumf %2, %4 : vector<208x128xf32>
    %c416 = arith.constant 416 : index
    %c0_5 = arith.constant 0 : index
    %6 = vector.load %arg1[%c416, %c0_5] : memref<832x32xbf16, #tpu.memory_space<vmem>>, vector<208x32xbf16>
    %cst_6 = arith.constant dense<0.000000e+00> : vector<208x128xf32>
    %7 = tpu.matmul %6, %0, %cst_6 {dimension_numbers = #tpu.dot_dimension_numbers<[1], [0], [0], [1], [0, 0, 1, 1], [], []>} : vector<208x32xbf16>, vector<32x128xbf16>, vector<208x128xf32> -> vector<208x128xf32>
    %8 = arith.maximumf %5, %7 : vector<208x128xf32>
    %c624 = arith.constant 624 : index
    %c0_7 = arith.constant 0 : index
    %9 = vector.load %arg1[%c624, %c0_7] : memref<832x32xbf16, #tpu.memory_space<vmem>>, vector<208x32xbf16>
    %cst_8 = arith.constant dense<0.000000e+00> : vector<208x128xf32>
    %10 = tpu.matmul %9, %0, %cst_8 {dimension_numbers = #tpu.dot_dimension_numbers<[1], [0], [0], [1], [0, 0, 1, 1], [], []>} : vector<208x32xbf16>, vector<32x128xbf16>, vector<208x128xf32> -> vector<208x128xf32>
    %11 = arith.maximumf %8, %10 : vector<208x128xf32>
    %c0_9 = arith.constant 0 : index
    %c0_10 = arith.constant 0 : index
    %12 = vector.load %arg3[%c0_9, %c0_10] : memref<1x128xf32, #tpu.memory_space<vmem>>, vector<1x128xf32>
    %13 = vector.broadcast %12 : vector<1x128xf32> to vector<208x128xf32>
    %14 = arith.addf %11, %13 : vector<208x128xf32>
    %cst_11 = arith.constant 0.000000e+00 : f32
    %15 = vector.broadcast %cst_11 : f32 to vector<208x128xf32>
    %16 = arith.maximumf %14, %15 : vector<208x128xf32>
    %17 = arith.truncf %16 : vector<208x128xf32> to vector<208x128xbf16>
    %c0_12 = arith.constant 0 : index
    %c0_13 = arith.constant 0 : index
    %18 = vector.load %arg4[%c0_12, %c0_13] : memref<208x128xbf16, #tpu.memory_space<vmem>>, vector<208x128xbf16>
    tpu.vector_store %arg4[%c0_12, %c0_13], %17 {strides = array<i32>} : memref<208x128xbf16, #tpu.memory_space<vmem>>, vector<208x128xbf16>,
    return
  }
  func.func @transform_0(%arg0: i32) -> (i32, i32) {
    %c0_i32 = arith.constant 0 : i32
    %c0_i32_0 = arith.constant 0 : i32
    return %arg0, %c0_i32 : i32, i32
  }
  func.func @transform_1(%arg0: i32) -> (i32, i32) {
    %c0_i32 = arith.constant 0 : i32
    %c0_i32_0 = arith.constant 0 : i32
    %c0_i32_1 = arith.constant 0 : i32
    return %c0_i32, %c0_i32_0 : i32, i32
  }
  func.func @transform_2(%arg0: i32) -> (i32, i32) {
    %c0_i32 = arith.constant 0 : i32
    %c0_i32_0 = arith.constant 0 : i32
    %c0_i32_1 = arith.constant 0 : i32
    return %c0_i32, %c0_i32_0 : i32, i32
  }
  func.func @transform_3(%arg0: i32) -> (i32, i32) {
    %c0_i32 = arith.constant 0 : i32
    %c0_i32_0 = arith.constant 0 : i32
    return %arg0, %c0_i32 : i32, i32
  }
}

module attributes {stable_mosaic.version = 11 : i64} {
  func.func @conv_relu_pool_kernel(%arg0: i32, %arg1: memref<256x512xbf16, #tpu.memory_space<vmem>>, %arg2: memref<512x128xbf16, #tpu.memory_space<vmem>>, %arg3: memref<1x128xf32, #tpu.memory_space<vmem>>, %arg4: memref<64x128xbf16, #tpu.memory_space<vmem>>) attributes {dimension_semantics = [#tpu.dimension_semantics<parallel>], iteration_bounds = array<i64: 2>, scalar_prefetch = 0 : i64, scratch_operands = 0 : i64, tpu.core_type = #tpu.core_type<tc>, window_params = [{transform_indices = @transform_0, window_bounds = array<i64: 256, 512>}, {pipeline_mode = #tpu.pipeline_mode<synchronous>, transform_indices = @transform_1, window_bounds = array<i64: 512, 128>}, {pipeline_mode = #tpu.pipeline_mode<synchronous>, transform_indices = @transform_2, window_bounds = array<i64: 1, 128>}, {transform_indices = @transform_3, window_bounds = array<i64: 64, 128>}]} {
    %c0 = arith.constant 0 : index
    %c0_0 = arith.constant 0 : index
    %0 = vector.load %arg2[%c0, %c0_0] : memref<512x128xbf16, #tpu.memory_space<vmem>>, vector<512x128xbf16>
    %c0_1 = arith.constant 0 : index
    %c0_2 = arith.constant 0 : index
    %1 = vector.load %arg1[%c0_1, %c0_2] : memref<256x512xbf16, #tpu.memory_space<vmem>>, vector<64x512xbf16>
    %cst = arith.constant dense<0.000000e+00> : vector<64x128xf32>
    %2 = tpu.matmul %1, %0, %cst {dimension_numbers = #tpu.dot_dimension_numbers<[1], [0], [0], [1], [0, 0, 1, 1], [], []>} : vector<64x512xbf16>, vector<512x128xbf16>, vector<64x128xf32> -> vector<64x128xf32>
    %c64 = arith.constant 64 : index
    %c0_3 = arith.constant 0 : index
    %3 = vector.load %arg1[%c64, %c0_3] : memref<256x512xbf16, #tpu.memory_space<vmem>>, vector<64x512xbf16>
    %cst_4 = arith.constant dense<0.000000e+00> : vector<64x128xf32>
    %4 = tpu.matmul %3, %0, %cst_4 {dimension_numbers = #tpu.dot_dimension_numbers<[1], [0], [0], [1], [0, 0, 1, 1], [], []>} : vector<64x512xbf16>, vector<512x128xbf16>, vector<64x128xf32> -> vector<64x128xf32>
    %5 = arith.maximumf %2, %4 : vector<64x128xf32>
    %c128 = arith.constant 128 : index
    %c0_5 = arith.constant 0 : index
    %6 = vector.load %arg1[%c128, %c0_5] : memref<256x512xbf16, #tpu.memory_space<vmem>>, vector<64x512xbf16>
    %cst_6 = arith.constant dense<0.000000e+00> : vector<64x128xf32>
    %7 = tpu.matmul %6, %0, %cst_6 {dimension_numbers = #tpu.dot_dimension_numbers<[1], [0], [0], [1], [0, 0, 1, 1], [], []>} : vector<64x512xbf16>, vector<512x128xbf16>, vector<64x128xf32> -> vector<64x128xf32>
    %8 = arith.maximumf %5, %7 : vector<64x128xf32>
    %c192 = arith.constant 192 : index
    %c0_7 = arith.constant 0 : index
    %9 = vector.load %arg1[%c192, %c0_7] : memref<256x512xbf16, #tpu.memory_space<vmem>>, vector<64x512xbf16>
    %cst_8 = arith.constant dense<0.000000e+00> : vector<64x128xf32>
    %10 = tpu.matmul %9, %0, %cst_8 {dimension_numbers = #tpu.dot_dimension_numbers<[1], [0], [0], [1], [0, 0, 1, 1], [], []>} : vector<64x512xbf16>, vector<512x128xbf16>, vector<64x128xf32> -> vector<64x128xf32>
    %11 = arith.maximumf %8, %10 : vector<64x128xf32>
    %c0_9 = arith.constant 0 : index
    %c0_10 = arith.constant 0 : index
    %12 = vector.load %arg3[%c0_9, %c0_10] : memref<1x128xf32, #tpu.memory_space<vmem>>, vector<1x128xf32>
    %13 = vector.broadcast %12 : vector<1x128xf32> to vector<64x128xf32>
    %14 = arith.addf %11, %13 : vector<64x128xf32>
    %cst_11 = arith.constant 0.000000e+00 : f32
    %15 = vector.broadcast %cst_11 : f32 to vector<64x128xf32>
    %16 = arith.maximumf %14, %15 : vector<64x128xf32>
    %17 = arith.truncf %16 : vector<64x128xf32> to vector<64x128xbf16>
    %c0_12 = arith.constant 0 : index
    %c0_13 = arith.constant 0 : index
    %18 = vector.load %arg4[%c0_12, %c0_13] : memref<64x128xbf16, #tpu.memory_space<vmem>>, vector<64x128xbf16>
    tpu.vector_store %arg4[%c0_12, %c0_13], %17 {strides = array<i32>} : memref<64x128xbf16, #tpu.memory_space<vmem>>, vector<64x128xbf16>,
    return
  }
  func.func @transform_0(%arg0: i32) -> (i32, i32) {
    %c0_i32 = arith.constant 0 : i32
    %c0_i32_0 = arith.constant 0 : i32
    return %arg0, %c0_i32 : i32, i32
  }
  func.func @transform_1(%arg0: i32) -> (i32, i32) {
    %c0_i32 = arith.constant 0 : i32
    %c0_i32_0 = arith.constant 0 : i32
    %c0_i32_1 = arith.constant 0 : i32
    return %c0_i32, %c0_i32_0 : i32, i32
  }
  func.func @transform_2(%arg0: i32) -> (i32, i32) {
    %c0_i32 = arith.constant 0 : i32
    %c0_i32_0 = arith.constant 0 : i32
    %c0_i32_1 = arith.constant 0 : i32
    return %c0_i32, %c0_i32_0 : i32, i32
  }
  func.func @transform_3(%arg0: i32) -> (i32, i32) {
    %c0_i32 = arith.constant 0 : i32
    %c0_i32_0 = arith.constant 0 : i32
    return %arg0, %c0_i32 : i32, i32
  }
}

module attributes {stable_mosaic.version = 11 : i64} {
  func.func @linear_kernel(%arg0: i32, %arg1: memref<16x1664xbf16, #tpu.memory_space<vmem>>, %arg2: memref<1664x128xbf16, #tpu.memory_space<vmem>>, %arg3: memref<1x128xf32, #tpu.memory_space<vmem>>, %arg4: memref<16x128xf32, #tpu.memory_space<vmem>>) attributes {dimension_semantics = [#tpu.dimension_semantics<parallel>], iteration_bounds = array<i64: 2>, scalar_prefetch = 0 : i64, scratch_operands = 0 : i64, tpu.core_type = #tpu.core_type<tc>, window_params = [{transform_indices = @transform_0, window_bounds = array<i64: 16, 1664>}, {pipeline_mode = #tpu.pipeline_mode<synchronous>, transform_indices = @transform_1, window_bounds = array<i64: 1664, 128>}, {pipeline_mode = #tpu.pipeline_mode<synchronous>, transform_indices = @transform_2, window_bounds = array<i64: 1, 128>}, {transform_indices = @transform_3, window_bounds = array<i64: 16, 128>}]} {
    %c0 = arith.constant 0 : index
    %c0_0 = arith.constant 0 : index
    %0 = vector.load %arg1[%c0, %c0_0] : memref<16x1664xbf16, #tpu.memory_space<vmem>>, vector<16x1664xbf16>
    %c0_1 = arith.constant 0 : index
    %c0_2 = arith.constant 0 : index
    %1 = vector.load %arg2[%c0_1, %c0_2] : memref<1664x128xbf16, #tpu.memory_space<vmem>>, vector<1664x128xbf16>
    %cst = arith.constant dense<0.000000e+00> : vector<16x128xf32>
    %2 = tpu.matmul %0, %1, %cst {dimension_numbers = #tpu.dot_dimension_numbers<[1], [0], [0], [1], [0, 0, 1, 1], [], []>} : vector<16x1664xbf16>, vector<1664x128xbf16>, vector<16x128xf32> -> vector<16x128xf32>
    %c0_3 = arith.constant 0 : index
    %c0_4 = arith.constant 0 : index
    %3 = vector.load %arg3[%c0_3, %c0_4] : memref<1x128xf32, #tpu.memory_space<vmem>>, vector<1x128xf32>
    %4 = vector.broadcast %3 : vector<1x128xf32> to vector<16x128xf32>
    %5 = arith.addf %2, %4 : vector<16x128xf32>
    %c0_5 = arith.constant 0 : index
    %c0_6 = arith.constant 0 : index
    %6 = vector.load %arg4[%c0_5, %c0_6] : memref<16x128xf32, #tpu.memory_space<vmem>>, vector<16x128xf32>
    tpu.vector_store %arg4[%c0_5, %c0_6], %5 {strides = array<i32>} : memref<16x128xf32, #tpu.memory_space<vmem>>, vector<16x128xf32>,
    return
  }
  func.func @transform_0(%arg0: i32) -> (i32, i32) {
    %c0_i32 = arith.constant 0 : i32
    %c0_i32_0 = arith.constant 0 : i32
    return %arg0, %c0_i32 : i32, i32
  }
  func.func @transform_1(%arg0: i32) -> (i32, i32) {
    %c0_i32 = arith.constant 0 : i32
    %c0_i32_0 = arith.constant 0 : i32
    %c0_i32_1 = arith.constant 0 : i32
    return %c0_i32, %c0_i32_0 : i32, i32
  }
  func.func @transform_2(%arg0: i32) -> (i32, i32) {
    %c0_i32 = arith.constant 0 : i32
    %c0_i32_0 = arith.constant 0 : i32
    %c0_i32_1 = arith.constant 0 : i32
    return %c0_i32, %c0_i32_0 : i32, i32
  }
  func.func @transform_3(%arg0: i32) -> (i32, i32) {
    %c0_i32 = arith.constant 0 : i32
    %c0_i32_0 = arith.constant 0 : i32
    return %arg0, %c0_i32 : i32, i32
  }
}

</mosaic_0001>

<llo_original>
// kernel: cnn_forward.3
$region0: #{cnn_forward.3}
  #allocation0 [shape = 'u32[]', space=smem, size = 0x4, offset = 0x4, fixed_abs, tag = 'smem constant byte address 0x4 - core index']
  #allocation1 [shape = 'u32[144,128]{1,0:T(1,128)}', space=vmem, size = 0x12000, scoped, tag = 'internal scratch']
  %s0 = inlined_call_operand.vmem [shape: bf16[1664,32], index: 0, kind: input, shape index: {}]
  %s1 = inlined_call_operand.vmem [shape: bf16[32,128], index: 1, kind: input, shape index: {}]
  %s2 = inlined_call_operand.vmem [shape: f32[1,128], index: 2, kind: input, shape index: {}]
  %s3 = inlined_call_operand.vmem [shape: bf16[416,128], index: 3, kind: output, shape index: {}]
  %s4 = sld [smem:[#allocation0]]
  $region45: #{cnn_forward.3} parent=0
    _
  %s6 = ssub.s32 1, %s4
  %s7 = scalar_select 0, %s6, %s4
  loop: start=0, step=1, limit=4
  $region2: #{cnn_forward.3} parent=0 // loop_pre_header
    _
  $region3: #{cnn_forward.3} parent=0 // loop_header
    %s9 = sphi 0, %s13
    %p10 = scmp.ge.s32.totalorder %s9, 4
    %s19 = sphi 0, %s21
    %s22 = sphi 0, %s19
    %s23 = sphi 0, %s22
    %s39 = sphi 0, %s23
    %s43 = sphi 0, %s43
    %s45 = sphi 0, %s43
    %s46 = sphi 0, %s45
    %s60 = sphi 0, %s46
    %s64 = sphi 0, %s64
    %s66 = sphi 0, %s64
    %s67 = sphi 0, %s66
    %s81 = sphi 0, %s67
    %s87 = sphi 0, %s89
    %s90 = sphi 0, %s87
    %s91 = sphi 0, %s90
    %s107 = sphi 0, %s91
  $region4: #{cnn_forward.3} parent=0 // loop_header_branch
    %12 = sbr.rel (%p10) target = $region8
  $region5: #{cnn_forward.3} parent=0 // loop_body
    %s14 = ssub.s32 %s9, 1
    %s15 = ssub.s32 %s9, 2
    %s16 = sadd.s32 %s9, 1
    %s17 = ssub.s32 %s9, %s16
    %p18 = scmp.eq.s32.totalorder %s17, 0
    %s20 = sadd.s32 %s19, 1
    %s21 = scalar_select %p18, %s19, %s20
    %p24 = pneg %p18
    %p25 = scmp.eq.s32.totalorder %s9, 1
    %p26 = por %p24, %p25
    %p27 = scmp.ne.s32.totalorder %s19, %s22
    %p28 = scmp.eq.s32.totalorder %s9, 0
    %p29 = por %p27, %p28
    %p30 = scmp.ne.s32.totalorder %s19, %s22
    %p31 = scmp.eq.s32.totalorder %s14, 1
    %p32 = por %p30, %p31
    %p33 = scmp.ne.s32.totalorder %s22, %s23
    %p34 = scmp.eq.s32.totalorder %s14, 0
    %p35 = por %p33, %p34
    %p36 = scmp.ne.s32.totalorder %s22, %s23
    %p37 = scmp.eq.s32.totalorder %s15, 1
    %p38 = por %p36, %p37
    %p40 = scmp.ne.s32.totalorder %s23, %s39
    %p41 = scmp.eq.s32.totalorder %s15, 0
    %p42 = por %p40, %p41
    %s44 = sadd.s32 %s43, 1
    %p47 = scmp.eq.s32.totalorder %s9, 1
    %p48 = scmp.ne.s32.totalorder %s43, %s45
    %p49 = scmp.eq.s32.totalorder %s9, 0
    %p50 = por %p48, %p49
    %p51 = scmp.ne.s32.totalorder %s43, %s45
    %p52 = scmp.eq.s32.totalorder %s14, 1
    %p53 = por %p51, %p52
    %p54 = scmp.ne.s32.totalorder %s45, %s46
    %p55 = scmp.eq.s32.totalorder %s14, 0
    %p56 = por %p54, %p55
    %p57 = scmp.ne.s32.totalorder %s45, %s46
    %p58 = scmp.eq.s32.totalorder %s15, 1
    %p59 = por %p57, %p58
    %p61 = scmp.ne.s32.totalorder %s46, %s60
    %p62 = scmp.eq.s32.totalorder %s15, 0
    %p63 = por %p61, %p62
    %s65 = sadd.s32 %s64, 1
    %p68 = scmp.eq.s32.totalorder %s9, 1
    %p69 = scmp.ne.s32.totalorder %s64, %s66
    %p70 = scmp.eq.s32.totalorder %s9, 0
    %p71 = por %p69, %p70
    %p72 = scmp.ne.s32.totalorder %s64, %s66
    %p73 = scmp.eq.s32.totalorder %s14, 1
    %p74 = por %p72, %p73
    %p75 = scmp.ne.s32.totalorder %s66, %s67
    %p76 = scmp.eq.s32.totalorder %s14, 0
    %p77 = por %p75, %p76
    %p78 = scmp.ne.s32.totalorder %s66, %s67
    %p79 = scmp.eq.s32.totalorder %s15, 1
    %p80 = por %p78, %p79
    %p82 = scmp.ne.s32.totalorder %s67, %s81
    %p83 = scmp.eq.s32.totalorder %s15, 0
    %p84 = por %p82, %p83
    %s85 = ssub.s32 %s9, %s16
    %p86 = scmp.eq.s32.totalorder %s85, 0
    %s88 = sadd.s32 %s87, 1
    %s89 = scalar_select %p86, %s87, %s88
    %p92 = pneg %p86
    %p93 = scmp.eq.s32.totalorder %s9, 1
    %p94 = por %p92, %p93
    %p95 = scmp.ne.s32.totalorder %s87, %s90
    %p96 = scmp.eq.s32.totalorder %s9, 0
    %p97 = por %p95, %p96
    %p98 = scmp.ne.s32.totalorder %s87, %s90
    %p99 = scmp.eq.s32.totalorder %s14, 1
    %p100 = por %p98, %p99
    %p101 = scmp.ne.s32.totalorder %s90, %s91
    %p102 = scmp.eq.s32.totalorder %s14, 0
    %p103 = por %p101, %p102
    %p104 = scmp.ne.s32.totalorder %s90, %s91
    %p105 = scmp.eq.s32.totalorder %s15, 1
    %p106 = por %p104, %p105
    %p108 = scmp.ne.s32.totalorder %s91, %s107
    %p109 = scmp.eq.s32.totalorder %s15, 0
    %p110 = por %p108, %p109
    %p111 = scmp.le.s32.totalorder 1, %s9
    %p112 = scmp.lt.s32.totalorder %s9, 3
    %p113 = pnand %p111, %p112
    %p114 = pneg %p113
    // Predicated region
    $region9: #{cnn_forward.3} parent=5 // pred_check
      _
    $region10: #{cnn_forward.3} parent=5 // pred_check_branch
      %116 = sbr.rel (%p113) target = $region12
    $region11: #{cnn_forward.3} parent=5 // pred_region
      %s117 = ssub.s32 %s9, 1
      // Predicated region
      $region13: #{cnn_forward.3} parent=11 // pred_check
        %p118 = pneg %p56
      $region14: #{cnn_forward.3} parent=11 // pred_check_branch
        %120 = sbr.rel (%p118) target = $region16
      $region15: #{cnn_forward.3} parent=11 // pred_region
        _
      $region16: #{cnn_forward.3} parent=11 // pred_fallthru
        _
      // Predicated region
      $region17: #{cnn_forward.3} parent=11 // pred_check
        %p121 = pneg %p77
      $region18: #{cnn_forward.3} parent=11 // pred_check_branch
        %123 = sbr.rel (%p121) target = $region20
      $region19: #{cnn_forward.3} parent=11 // pred_region
        _
      $region20: #{cnn_forward.3} parent=11 // pred_fallthru
        _
    $region12: #{cnn_forward.3} parent=5 // pred_fallthru
      _
    %p124 = scmp.lt.s32.totalorder %s9, 2
    // Predicated region
    $region21: #{cnn_forward.3} parent=5 // pred_check
      %p125 = pneg %p124
    $region22: #{cnn_forward.3} parent=5 // pred_check_branch
      %127 = sbr.rel (%p125) target = $region24
    $region23: #{cnn_forward.3} parent=5 // pred_region
      // Predicated region
      $region25: #{cnn_forward.3} parent=23 // pred_check
        %p128 = pneg %p29
      $region26: #{cnn_forward.3} parent=23 // pred_check_branch
        %130 = sbr.rel (%p128) target = $region28
      $region27: #{cnn_forward.3} parent=23 // pred_region
        %s131 = smul.u32 104, %s9
        %p132 = scmp.lt.s32.totalorder %s131, 207
        %s133 = scalar_select %p132, %s131, 207
        %s134 = smul.addr %s133, 4
        %s135 = scalar_lea.vmem %s0, %s134
        %s136 = smul.u32 104, %s9
      $region28: #{cnn_forward.3} parent=23 // pred_fallthru
        _
    $region24: #{cnn_forward.3} parent=5 // pred_fallthru
      _
    %p137 = scmp.le.s32.totalorder 1, %s9
    %p138 = scmp.lt.s32.totalorder %s9, 3
    %p139 = pnand %p137, %p138
    %p140 = pneg %p139
    // Predicated region
    $region29: #{cnn_forward.3} parent=5 // pred_check
      _
    $region30: #{cnn_forward.3} parent=5 // pred_check_branch
      %142 = sbr.rel (%p139) target = $region32
    $region31: #{cnn_forward.3} parent=5 // pred_region
      %s143 = ssub.s32 %s9, 1
      %s144 = smul.u32 104, %s14
      %p145 = scmp.lt.s32.totalorder %s144, 207
      %s146 = scalar_select %p145, %s144, 207
      %s147 = smul.addr %s146, 4
      %s148 = scalar_lea.vmem %s0, %s147
      %p149 = pneg %p35
      %p150 = pneg %p32
      %p151 = pneg %p56
      %p152 = pneg %p53
      %p153 = pneg %p77
      %p154 = pneg %p74
      %p155 = pneg %p103
      %p156 = pneg %p100
      %s157 = smul.u32 26, %s14
      %p158 = scmp.lt.s32.totalorder %s157, 51
      %s159 = scalar_select %p158, %s157, 51
      %s160 = smul.addr %s159, 4
      %s161 = scalar_lea.vmem %s3, %s160
      %s162 = smul.u32 104, %s14
      %p163 = scmp.lt.s32.totalorder %s162, 207
      %s164 = scalar_select %p163, %s162, 207
      %s165 = smul.addr %s164, 4
      %s166 = scalar_lea.vmem %s0, %s165
      %s167 = smul.u32 104, %s14
      %s168 = smul.u32 26, %s14
      %p169 = scmp.lt.s32.totalorder %s168, 51
      %s170 = scalar_select %p169, %s168, 51
      %s171 = smul.addr %s170, 4
      %s172 = scalar_lea.vmem %s3, %s171
      %s173 = smul.u32 26, %s14
      %v175 = vld [vmem:[%s1] sm:$0xf]
      %v176 = vld [vmem:[%s1 + $0x4] sm:$0xf]
      %v177 = vld [vmem:[%s1 + $0x8] sm:$0xf]
      %v178 = vld [vmem:[%s1 + $0xc] sm:$0xf]
      %v179 = vld [vmem:[%s166] sm:$0xf]
      %v180 = vld [vmem:[%s166 + $0x4] sm:$0xf]
      %v181 = vld [vmem:[%s166 + $0x8] sm:$0xf]
      %v182 = vld [vmem:[%s166 + $0xc] sm:$0xf]
      %v183 = vld [vmem:[%s166 + $0x10] sm:$0xf]
      %v184 = vld [vmem:[%s166 + $0x14] sm:$0xf]
      %v185 = vld [vmem:[%s166 + $0x18] sm:$0xf]
      %v186 = vld [vmem:[%s166 + $0x1c] sm:$0xf]
      %v187 = vld [vmem:[%s166 + $0x20] sm:$0xf]
      %v188 = vld [vmem:[%s166 + $0x24] sm:$0xf]
      %v189 = vld [vmem:[%s166 + $0x28] sm:$0xf]
      %v190 = vld [vmem:[%s166 + $0x2c] sm:$0xf]
      %v191 = vld [vmem:[%s166 + $0x30] sm:$0xf]
      %v192 = vld [vmem:[%s166 + $0x34] sm:$0xf]
      %v193 = vld [vmem:[%s166 + $0x38] sm:$0xf]
      %v194 = vld [vmem:[%s166 + $0x3c] sm:$0xf]
      %v195 = vld [vmem:[%s166 + $0x40] sm:$0xf]
      %v196 = vld [vmem:[%s166 + $0x44] sm:$0xf]
      %v197 = vld [vmem:[%s166 + $0x48] sm:$0xf]
      %v198 = vld [vmem:[%s166 + $0x4c] sm:$0xf]
      %v199 = vld [vmem:[%s166 + $0x50] sm:$0xf]
      %v200 = vld [vmem:[%s166 + $0x54] sm:$0xf]
      %v201 = vld [vmem:[%s166 + $0x58] sm:$0xf]
      %v202 = vld [vmem:[%s166 + $0x5c] sm:$0xf]
      %v203 = vld [vmem:[%s166 + $0x60] sm:$0xf]
      %v204 = vld [vmem:[%s166 + $0x64] sm:$0xf]
      %v231 = vunpack.c.l.b16 %v179
      %v232 = vunpack.c.l.b16 %v180
      %v233 = vunpack.c.l.b16 %v181
      %v234 = vunpack.c.l.b16 %v182
      %v235 = vunpack.c.l.b16 %v183
      %v236 = vunpack.c.l.b16 %v184
      %v237 = vunpack.c.l.b16 %v185
      %v238 = vunpack.c.l.b16 %v186
      %v239 = vunpack.c.l.b16 %v187
      %v240 = vunpack.c.l.b16 %v188
      %v241 = vunpack.c.l.b16 %v189
      %v242 = vunpack.c.l.b16 %v190
      %v243 = vunpack.c.l.b16 %v191
      %v244 = vunpack.c.l.b16 %v192
      %v245 = vunpack.c.l.b16 %v193
      %v246 = vunpack.c.l.b16 %v194
      %v247 = vunpack.c.l.b16 %v195
      %v248 = vunpack.c.l.b16 %v196
      %v249 = vunpack.c.l.b16 %v197
      %v250 = vunpack.c.l.b16 %v198
      %v251 = vunpack.c.l.b16 %v199
      %v252 = vunpack.c.l.b16 %v200
      %v253 = vunpack.c.l.b16 %v201
      %v254 = vunpack.c.l.b16 %v202
      %v255 = vunpack.c.l.b16 %v203
      %v256 = vunpack.c.l.b16 %v204
      %v257 = vpack.c.b16 %v232, %v231
      %v258 = vpack.c.b16 %v234, %v233
      %v259 = vpack.c.b16 %v236, %v235
      %v260 = vpack.c.b16 %v238, %v237
      %v261 = vpack.c.b16 %v240, %v239
      %v262 = vpack.c.b16 %v242, %v241
      %v263 = vpack.c.b16 %v244, %v243
      %v264 = vpack.c.b16 %v246, %v245
      %v265 = vpack.c.b16 %v248, %v247
      %v266 = vpack.c.b16 %v250, %v249
      %v267 = vpack.c.b16 %v252, %v251
      %v268 = vpack.c.b16 %v254, %v253
      %v269 = vpack.c.b16 %v256, %v255
      %v274 = vunpack.c.l.b16 %v175
      %v275 = vunpack.c.l.b16 %v176
      %v276 = vunpack.c.l.b16 %v177
      %v277 = vunpack.c.l.b16 %v178
      %v278 = vpack.c.b16 %v275, %v274
      %v279 = vpack.c.b16 %v277, %v276
      %vm282 = vcmask 261120
      %v284 = vsel %vm282, %v257, 0
      %v287 = vsel %vm282, %v258, 0
      %v290 = vsel %vm282, %v259, 0
      %v293 = vsel %vm282, %v260, 0
      %v296 = vsel %vm282, %v261, 0
      %v299 = vsel %vm282, %v262, 0
      %v302 = vsel %vm282, %v263, 0
      %v305 = vsel %vm282, %v264, 0
      %v308 = vsel %vm282, %v265, 0
      %v311 = vsel %vm282, %v266, 0
      %v314 = vsel %vm282, %v267, 0
      %v317 = vsel %vm282, %v268, 0
      %v320 = vsel %vm282, %v269, 0
      %322 = vmatprep.subr.bf16.mxu0 0
      %323 = vmatpush1.bf16.msra.mxu0 %v278
      %324 = vmatprep.subr.bf16.mxu0 0
      %325 = vmatpush1.bf16.msra.mxu0 %v279
      %326 = vmatprep.subr.bf16.mxu0 0
      %327 = vmatpush1.bf16.msra.mxu0 0
      %328 = vmatprep.subr.bf16.mxu0 0
      %329 = vmatpush1.bf16.msra.mxu0 0
      %330 = vmatprep.subr.bf16.mxu0 0
      %331 = vmatpush1.bf16.msra.mxu0 0
      %332 = vmatprep.subr.bf16.mxu0 0
      %333 = vmatpush1.bf16.msra.mxu0 0
      %334 = vmatprep.subr.bf16.mxu0 0
      %335 = vmatpush1.bf16.msra.mxu0 0
      %336 = vmatprep.subr.bf16.mxu0 0
      %337 = vmatpush1.bf16.msra.mxu0 0
      %338 = vmatprep.subr.bf16.mxu0 0
      %339 = vmatpush1.bf16.msra.mxu0 0
      %340 = vmatprep.subr.bf16.mxu0 0
      %341 = vmatpush1.bf16.msra.mxu0 0
      %342 = vmatprep.subr.bf16.mxu0 0
      %343 = vmatpush1.bf16.msra.mxu0 0
      %344 = vmatprep.subr.bf16.mxu0 0
      %345 = vmatpush1.bf16.msra.mxu0 0
      %346 = vmatprep.subr.bf16.mxu0 0
      %347 = vmatpush1.bf16.msra.mxu0 0
      %348 = vmatprep.subr.bf16.mxu0 0
      %349 = vmatpush1.bf16.msra.mxu0 0
      %350 = vmatprep.subr.bf16.mxu0 0
      %351 = vmatpush1.bf16.msra.mxu0 0
      %352 = vmatprep.subr.bf16.mxu0 0
      %353 = vmatpush1.bf16.msra.mxu0 0
      %354 = vmatprep.mubr.bf16.mxu0 0
      %355 = vmatmul.mubr.bf16.gmra.mrb[0].mxu0 %v284
      %v356 = vpop.f32.mrb[0].mxu0
      %v357 = vadd.f32 0.0, %v356
      %v358 = vpop.f32.mrb[0].mxu0
      %v359 = vpop.f32.mrb[0].mxu0
      %v360 = vadd.f32 0.0, %v359
      %v361 = vpop.f32.mrb[0].mxu0
      %362 = vmatprep.mubr.bf16.mxu0 0
      %363 = vmatmul.mubr.bf16.gmra.mrb[0].mxu0 %v287
      %v364 = vpop.f32.mrb[0].mxu0
      %v365 = vadd.f32 0.0, %v364
      %v366 = vpop.f32.mrb[0].mxu0
      %v367 = vpop.f32.mrb[0].mxu0
      %v368 = vadd.f32 0.0, %v367
      %v369 = vpop.f32.mrb[0].mxu0
      %370 = vmatprep.mubr.bf16.mxu0 0
      %371 = vmatmul.mubr.bf16.gmra.mrb[0].mxu0 %v290
      %v372 = vpop.f32.mrb[0].mxu0
      %v373 = vadd.f32 0.0, %v372
      %v374 = vpop.f32.mrb[0].mxu0
      %v375 = vpop.f32.mrb[0].mxu0
      %v376 = vadd.f32 0.0, %v375
      %v377 = vpop.f32.mrb[0].mxu0
      %378 = vmatprep.mubr.bf16.mxu0 0
      %379 = vmatmul.mubr.bf16.gmra.mrb[0].mxu0 %v293
      %v380 = vpop.f32.mrb[0].mxu0
      %v381 = vadd.f32 0.0, %v380
      %v382 = vpop.f32.mrb[0].mxu0
      %v383 = vpop.f32.mrb[0].mxu0
      %v384 = vadd.f32 0.0, %v383
      %v385 = vpop.f32.mrb[0].mxu0
      %386 = vmatprep.mubr.bf16.mxu0 0
      %387 = vmatmul.mubr.bf16.gmra.mrb[0].mxu0 %v296
      %v388 = vpop.f32.mrb[0].mxu0
      %v389 = vadd.f32 0.0, %v388
      %v390 = vpop.f32.mrb[0].mxu0
      %v391 = vpop.f32.mrb[0].mxu0
      %v392 = vadd.f32 0.0, %v391
      %v393 = vpop.f32.mrb[0].mxu0
      %394 = vmatprep.mubr.bf16.mxu0 0
      %395 = vmatmul.mubr.bf16.gmra.mrb[0].mxu0 %v299
      %v396 = vpop.f32.mrb[0].mxu0
      %v397 = vadd.f32 0.0, %v396
      %v398 = vpop.f32.mrb[0].mxu0
      %v399 = vpop.f32.mrb[0].mxu0
      %v400 = vadd.f32 0.0, %v399
      %v401 = vpop.f32.mrb[0].mxu0
      %402 = vmatprep.mubr.bf16.mxu0 0
      %403 = vmatmul.mubr.bf16.gmra.mrb[0].mxu0 %v302
      %v404 = vpop.f32.mrb[0].mxu0
      %v405 = vadd.f32 0.0, %v404
      %v406 = vpop.f32.mrb[0].mxu0
      %v407 = vpop.f32.mrb[0].mxu0
      %v408 = vadd.f32 0.0, %v407
      %v409 = vpop.f32.mrb[0].mxu0
      %410 = vmatprep.mubr.bf16.mxu0 0
      %411 = vmatmul.mubr.bf16.gmra.mrb[0].mxu0 %v305
      %v412 = vpop.f32.mrb[0].mxu0
      %v413 = vadd.f32 0.0, %v412
      %v414 = vpop.f32.mrb[0].mxu0
      %v415 = vpop.f32.mrb[0].mxu0
      %v416 = vadd.f32 0.0, %v415
      %v417 = vpop.f32.mrb[0].mxu0
      %418 = vmatprep.mubr.bf16.mxu0 0
      %419 = vmatmul.mubr.bf16.gmra.mrb[0].mxu0 %v308
      %v420 = vpop.f32.mrb[0].mxu0
      %v421 = vadd.f32 0.0, %v420
      %v422 = vpop.f32.mrb[0].mxu0
      %v423 = vpop.f32.mrb[0].mxu0
      %v424 = vadd.f32 0.0, %v423
      %v425 = vpop.f32.mrb[0].mxu0
      %426 = vmatprep.mubr.bf16.mxu0 0
      %427 = vmatmul.mubr.bf16.gmra.mrb[0].mxu0 %v311
      %v428 = vpop.f32.mrb[0].mxu0
      %v429 = vadd.f32 0.0, %v428
      %v430 = vpop.f32.mrb[0].mxu0
      %v431 = vpop.f32.mrb[0].mxu0
      %v432 = vadd.f32 0.0, %v431
      %v433 = vpop.f32.mrb[0].mxu0
      %434 = vmatprep.mubr.bf16.mxu0 0
      %435 = vmatmul.mubr.bf16.gmra.mrb[0].mxu0 %v314
      %v436 = vpop.f32.mrb[0].mxu0
      %v437 = vadd.f32 0.0, %v436
      %v438 = vpop.f32.mrb[0].mxu0
      %v439 = vpop.f32.mrb[0].mxu0
      %v440 = vadd.f32 0.0, %v439
      %v441 = vpop.f32.mrb[0].mxu0
      %442 = vmatprep.mubr.bf16.mxu0 0
      %443 = vmatmul.mubr.bf16.gmra.mrb[0].mxu0 %v317
      %v444 = vpop.f32.mrb[0].mxu0
      %v445 = vadd.f32 0.0, %v444
      %v446 = vpop.f32.mrb[0].mxu0
      %v447 = vpop.f32.mrb[0].mxu0
      %v448 = vadd.f32 0.0, %v447
      %v449 = vpop.f32.mrb[0].mxu0
      %450 = vmatprep.mubr.bf16.mxu0 0
      %451 = vmatmul.mubr.bf16.gmra.mrb[0].mxu0 %v320
      %v452 = vpop.f32.mrb[0].mxu0
      %v453 = vadd.f32 0.0, %v452
      %v454 = vpop.f32.mrb[0].mxu0
      %v455 = vpop.f32.mrb[0].mxu0
      %v456 = vadd.f32 0.0, %v455
      %v457 = vpop.f32.mrb[0].mxu0
      %458 = vdwg.mxu0
      %v459 = vld [vmem:[%s166 + $0x68] sm:$0xf]
      %v460 = vld [vmem:[%s166 + $0x6c] sm:$0xf]
      %v461 = vld [vmem:[%s166 + $0x70] sm:$0xf]
      %v462 = vld [vmem:[%s166 + $0x74] sm:$0xf]
      %v463 = vld [vmem:[%s166 + $0x78] sm:$0xf]
      %v464 = vld [vmem:[%s166 + $0x7c] sm:$0xf]
      %v465 = vld [vmem:[%s166 + $0x80] sm:$0xf]
      %v466 = vld [vmem:[%s166 + $0x84] sm:$0xf]
      %v467 = vld [vmem:[%s166 + $0x88] sm:$0xf]
      %v468 = vld [vmem:[%s166 + $0x8c] sm:$0xf]
      %v469 = vld [vmem:[%s166 + $0x90] sm:$0xf]
      %v470 = vld [vmem:[%s166 + $0x94] sm:$0xf]
      %v471 = vld [vmem:[%s166 + $0x98] sm:$0xf]
      %v472 = vld [vmem:[%s166 + $0x9c] sm:$0xf]
      %v473 = vld [vmem:[%s166 + $0xa0] sm:$0xf]
      %v474 = vld [vmem:[%s166 + $0xa4] sm:$0xf]
      %v475 = vld [vmem:[%s166 + $0xa8] sm:$0xf]
      %v476 = vld [vmem:[%s166 + $0xac] sm:$0xf]
      %v477 = vld [vmem:[%s166 + $0xb0] sm:$0xf]
      %v478 = vld [vmem:[%s166 + $0xb4] sm:$0xf]
      %v479 = vld [vmem:[%s166 + $0xb8] sm:$0xf]
      %v480 = vld [vmem:[%s166 + $0xbc] sm:$0xf]
      %v481 = vld [vmem:[%s166 + $0xc0] sm:$0xf]
      %v482 = vld [vmem:[%s166 + $0xc4] sm:$0xf]
      %v483 = vld [vmem:[%s166 + $0xc8] sm:$0xf]
      %v484 = vld [vmem:[%s166 + $0xcc] sm:$0xf]
      %v511 = vunpack.c.l.b16 %v459
      %v512 = vunpack.c.l.b16 %v460
      %v513 = vunpack.c.l.b16 %v461
      %v514 = vunpack.c.l.b16 %v462
      %v515 = vunpack.c.l.b16 %v463
      %v516 = vunpack.c.l.b16 %v464
      %v517 = vunpack.c.l.b16 %v465
      %v518 = vunpack.c.l.b16 %v466
      %v519 = vunpack.c.l.b16 %v467
      %v520 = vunpack.c.l.b16 %v468
      %v521 = vunpack.c.l.b16 %v469
      %v522 = vunpack.c.l.b16 %v470
      %v523 = vunpack.c.l.b16 %v471
      %v524 = vunpack.c.l.b16 %v472
      %v525 = vunpack.c.l.b16 %v473
      %v526 = vunpack.c.l.b16 %v474
      %v527 = vunpack.c.l.b16 %v475
      %v528 = vunpack.c.l.b16 %v476
      %v529 = vunpack.c.l.b16 %v477
      %v530 = vunpack.c.l.b16 %v478
      %v531 = vunpack.c.l.b16 %v479
      %v532 = vunpack.c.l.b16 %v480
      %v533 = vunpack.c.l.b16 %v481
      %v534 = vunpack.c.l.b16 %v482
      %v535 = vunpack.c.l.b16 %v483
      %v536 = vunpack.c.l.b16 %v484
      %v537 = vpack.c.b16 %v512, %v511
      %v538 = vpack.c.b16 %v514, %v513
      %v539 = vpack.c.b16 %v516, %v515
      %v540 = vpack.c.b16 %v518, %v517
      %v541 = vpack.c.b16 %v520, %v519
      %v542 = vpack.c.b16 %v522, %v521
      %v543 = vpack.c.b16 %v524, %v523
      %v544 = vpack.c.b16 %v526, %v525
      %v545 = vpack.c.b16 %v528, %v527
      %v546 = vpack.c.b16 %v530, %v529
      %v547 = vpack.c.b16 %v532, %v531
      %v548 = vpack.c.b16 %v534, %v533
      %v549 = vpack.c.b16 %v536, %v535
      %v551 = vsel %vm282, %v537, 0
      %v554 = vsel %vm282, %v538, 0
      %v557 = vsel %vm282, %v539, 0
      %v560 = vsel %vm282, %v540, 0
      %v563 = vsel %vm282, %v541, 0
      %v566 = vsel %vm282, %v542, 0
      %v569 = vsel %vm282, %v543, 0
      %v572 = vsel %vm282, %v544, 0
      %v575 = vsel %vm282, %v545, 0
      %v578 = vsel %vm282, %v546, 0
      %v581 = vsel %vm282, %v547, 0
      %v584 = vsel %vm282, %v548, 0
      %v587 = vsel %vm282, %v549, 0
      %589 = vmatprep.subr.bf16.mxu0 0
      %590 = vmatpush1.bf16.msra.mxu0 %v278
      %591 = vmatprep.subr.bf16.mxu0 0
      %592 = vmatpush1.bf16.msra.mxu0 %v279
      %593 = vmatprep.subr.bf16.mxu0 0
      %594 = vmatpush1.bf16.msra.mxu0 0
      %595 = vmatprep.subr.bf16.mxu0 0
      %596 = vmatpush1.bf16.msra.mxu0 0
      %597 = vmatprep.subr.bf16.mxu0 0
      %598 = vmatpush1.bf16.msra.mxu0 0
      %599 = vmatprep.subr.bf16.mxu0 0
      %600 = vmatpush1.bf16.msra.mxu0 0
      %601 = vmatprep.subr.bf16.mxu0 0
      %602 = vmatpush1.bf16.msra.mxu0 0
      %603 = vmatprep.subr.bf16.mxu0 0
      %604 = vmatpush1.bf16.msra.mxu0 0
      %605 = vmatprep.subr.bf16.mxu0 0
      %606 = vmatpush1.bf16.msra.mxu0 0
      %607 = vmatprep.subr.bf16.mxu0 0
      %608 = vmatpush1.bf16.msra.mxu0 0
      %609 = vmatprep.subr.bf16.mxu0 0
      %610 = vmatpush1.bf16.msra.mxu0 0
      %611 = vmatprep.subr.bf16.mxu0 0
      %612 = vmatpush1.bf16.msra.mxu0 0
      %613 = vmatprep.subr.bf16.mxu0 0
      %614 = vmatpush1.bf16.msra.mxu0 0
      %615 = vmatprep.subr.bf16.mxu0 0
      %616 = vmatpush1.bf16.msra.mxu0 0
      %617 = vmatprep.subr.bf16.mxu0 0
      %618 = vmatpush1.bf16.msra.mxu0 0
      %619 = vmatprep.subr.bf16.mxu0 0
      %620 = vmatpush1.bf16.msra.mxu0 0
      %621 = vmatprep.mubr.bf16.mxu0 0
      %622 = vmatmul.mubr.bf16.gmra.mrb[0].mxu0 %v551
      %v623 = vpop.f32.mrb[0].mxu0
      %v624 = vadd.f32 0.0, %v623
      %v625 = vpop.f32.mrb[0].mxu0
      %v626 = vpop.f32.mrb[0].mxu0
      %v627 = vadd.f32 0.0, %v626
      %v628 = vpop.f32.mrb[0].mxu0
      %629 = vmatprep.mubr.bf16.mxu0 0
      %630 = vmatmul.mubr.bf16.gmra.mrb[0].mxu0 %v554
      %v631 = vpop.f32.mrb[0].mxu0
      %v632 = vadd.f32 0.0, %v631
      %v633 = vpop.f32.mrb[0].mxu0
      %v634 = vpop.f32.mrb[0].mxu0
      %v635 = vadd.f32 0.0, %v634
      %v636 = vpop.f32.mrb[0].mxu0
      %637 = vmatprep.mubr.bf16.mxu0 0
      %638 = vmatmul.mubr.bf16.gmra.mrb[0].mxu0 %v557
      %v639 = vpop.f32.mrb[0].mxu0
      %v640 = vadd.f32 0.0, %v639
      %v641 = vpop.f32.mrb[0].mxu0
      %v642 = vpop.f32.mrb[0].mxu0
      %v643 = vadd.f32 0.0, %v642
      %v644 = vpop.f32.mrb[0].mxu0
      %645 = vmatprep.mubr.bf16.mxu0 0
      %646 = vmatmul.mubr.bf16.gmra.mrb[0].mxu0 %v560
      %v647 = vpop.f32.mrb[0].mxu0
      %v648 = vadd.f32 0.0, %v647
      %v649 = vpop.f32.mrb[0].mxu0
      %v650 = vpop.f32.mrb[0].mxu0
      %v651 = vadd.f32 0.0, %v650
      %v652 = vpop.f32.mrb[0].mxu0
      %653 = vmatprep.mubr.bf16.mxu0 0
      %654 = vmatmul.mubr.bf16.gmra.mrb[0].mxu0 %v563
      %v655 = vpop.f32.mrb[0].mxu0
      %v656 = vadd.f32 0.0, %v655
      %v657 = vpop.f32.mrb[0].mxu0
      %v658 = vpop.f32.mrb[0].mxu0
      %v659 = vadd.f32 0.0, %v658
      %v660 = vpop.f32.mrb[0].mxu0
      %661 = vmatprep.mubr.bf16.mxu0 0
      %662 = vmatmul.mubr.bf16.gmra.mrb[0].mxu0 %v566
      %v663 = vpop.f32.mrb[0].mxu0
      %v664 = vadd.f32 0.0, %v663
      %v665 = vpop.f32.mrb[0].mxu0
      %v666 = vpop.f32.mrb[0].mxu0
      %v667 = vadd.f32 0.0, %v666
      %v668 = vpop.f32.mrb[0].mxu0
      %669 = vmatprep.mubr.bf16.mxu0 0
      %670 = vmatmul.mubr.bf16.gmra.mrb[0].mxu0 %v569
      %v671 = vpop.f32.mrb[0].mxu0
      %v672 = vadd.f32 0.0, %v671
      %v673 = vpop.f32.mrb[0].mxu0
      %v674 = vpop.f32.mrb[0].mxu0
      %v675 = vadd.f32 0.0, %v674
      %v676 = vpop.f32.mrb[0].mxu0
      %677 = vmatprep.mubr.bf16.mxu0 0
      %678 = vmatmul.mubr.bf16.gmra.mrb[0].mxu0 %v572
      %v679 = vpop.f32.mrb[0].mxu0
      %v680 = vadd.f32 0.0, %v679
      %v681 = vpop.f32.mrb[0].mxu0
      %v682 = vpop.f32.mrb[0].mxu0
      %v683 = vadd.f32 0.0, %v682
      %v684 = vpop.f32.mrb[0].mxu0
      %685 = vmatprep.mubr.bf16.mxu0 0
      %686 = vmatmul.mubr.bf16.gmra.mrb[0].mxu0 %v575
      %v687 = vpop.f32.mrb[0].mxu0
      %v688 = vadd.f32 0.0, %v687
      %v689 = vpop.f32.mrb[0].mxu0
      %v690 = vpop.f32.mrb[0].mxu0
      %v691 = vadd.f32 0.0, %v690
      %v692 = vpop.f32.mrb[0].mxu0
      %693 = vmatprep.mubr.bf16.mxu0 0
      %694 = vmatmul.mubr.bf16.gmra.mrb[0].mxu0 %v578
      %v695 = vpop.f32.mrb[0].mxu0
      %v696 = vadd.f32 0.0, %v695
      %v697 = vpop.f32.mrb[0].mxu0
      %v698 = vpop.f32.mrb[0].mxu0
      %v699 = vadd.f32 0.0, %v698
      %v700 = vpop.f32.mrb[0].mxu0
      %701 = vmatprep.mubr.bf16.mxu0 0
      %702 = vmatmul.mubr.bf16.gmra.mrb[0].mxu0 %v581
      %v703 = vpop.f32.mrb[0].mxu0
      %v704 = vadd.f32 0.0, %v703
      %v705 = vpop.f32.mrb[0].mxu0
      %v706 = vpop.f32.mrb[0].mxu0
      %v707 = vadd.f32 0.0, %v706
      %v708 = vpop.f32.mrb[0].mxu0
      %709 = vmatprep.mubr.bf16.mxu0 0
      %710 = vmatmul.mubr.bf16.gmra.mrb[0].mxu0 %v584
      %v711 = vpop.f32.mrb[0].mxu0
      %v712 = vadd.f32 0.0, %v711
      %v713 = vpop.f32.mrb[0].mxu0
      %v714 = vpop.f32.mrb[0].mxu0
      %v715 = vadd.f32 0.0, %v714
      %v716 = vpop.f32.mrb[0].mxu0
      %717 = vmatprep.mubr.bf16.mxu0 0
      %718 = vmatmul.mubr.bf16.gmra.mrb[0].mxu0 %v587
      %v719 = vpop.f32.mrb[0].mxu0
      %v720 = vadd.f32 0.0, %v719
      %v721 = vpop.f32.mrb[0].mxu0
      %v722 = vpop.f32.mrb[0].mxu0
      %v723 = vadd.f32 0.0, %v722
      %v724 = vpop.f32.mrb[0].mxu0
      %725 = vdwg.mxu0
      %v726 = vmax.f32 %v357, %v624
      %v727 = vmax.f32 %v360, %v627
      %v728 = vmax.f32 %v365, %v632
      %v729 = vmax.f32 %v368, %v635
      %v730 = vmax.f32 %v373, %v640
      %v731 = vmax.f32 %v376, %v643
      %v732 = vmax.f32 %v381, %v648
      %v733 = vmax.f32 %v384, %v651
      %v734 = vmax.f32 %v389, %v656
      %v735 = vmax.f32 %v392, %v659
      %v736 = vmax.f32 %v397, %v664
      %v737 = vmax.f32 %v400, %v667
      %v738 = vmax.f32 %v405, %v672
      %v739 = vmax.f32 %v408, %v675
      %v740 = vmax.f32 %v413, %v680
      %v741 = vmax.f32 %v416, %v683
      %v742 = vmax.f32 %v421, %v688
      %v743 = vmax.f32 %v424, %v691
      %v744 = vmax.f32 %v429, %v696
      %v745 = vmax.f32 %v432, %v699
      %v746 = vmax.f32 %v437, %v704
      %v747 = vmax.f32 %v440, %v707
      %v748 = vmax.f32 %v445, %v712
      %v749 = vmax.f32 %v448, %v715
      %v750 = vmax.f32 %v453, %v720
      %v751 = vmax.f32 %v456, %v723
      %v752 = vld [vmem:[%s166 + $0xd0] sm:$0xf]
      %v753 = vld [vmem:[%s166 + $0xd4] sm:$0xf]
      %v754 = vld [vmem:[%s166 + $0xd8] sm:$0xf]
      %v755 = vld [vmem:[%s166 + $0xdc] sm:$0xf]
      %v756 = vld [vmem:[%s166 + $0xe0] sm:$0xf]
      %v757 = vld [vmem:[%s166 + $0xe4] sm:$0xf]
      %v758 = vld [vmem:[%s166 + $0xe8] sm:$0xf]
      %v759 = vld [vmem:[%s166 + $0xec] sm:$0xf]
      %v760 = vld [vmem:[%s166 + $0xf0] sm:$0xf]
      %v761 = vld [vmem:[%s166 + $0xf4] sm:$0xf]
      %v762 = vld [vmem:[%s166 + $0xf8] sm:$0xf]
      %v763 = vld [vmem:[%s166 + $0xfc] sm:$0xf]
      %v764 = vld [vmem:[%s166 + $0x100] sm:$0xf]
      %v765 = vld [vmem:[%s166 + $0x104] sm:$0xf]
      %v766 = vld [vmem:[%s166 + $0x108] sm:$0xf]
      %v767 = vld [vmem:[%s166 + $0x10c] sm:$0xf]
      %v768 = vld [vmem:[%s166 + $0x110] sm:$0xf]
      %v769 = vld [vmem:[%s166 + $0x114] sm:$0xf]
      %v770 = vld [vmem:[%s166 + $0x118] sm:$0xf]
      %v771 = vld [vmem:[%s166 + $0x11c] sm:$0xf]
      %v772 = vld [vmem:[%s166 + $0x120] sm:$0xf]
      %v773 = vld [vmem:[%s166 + $0x124] sm:$0xf]
      %v774 = vld [vmem:[%s166 + $0x128] sm:$0xf]
      %v775 = vld [vmem:[%s166 + $0x12c] sm:$0xf]
      %v776 = vld [vmem:[%s166 + $0x130] sm:$0xf]
      %v777 = vld [vmem:[%s166 + $0x134] sm:$0xf]
      %v804 = vunpack.c.l.b16 %v752
      %v805 = vunpack.c.l.b16 %v753
      %v806 = vunpack.c.l.b16 %v754
      %v807 = vunpack.c.l.b16 %v755
      %v808 = vunpack.c.l.b16 %v756
      %v809 = vunpack.c.l.b16 %v757
      %v810 = vunpack.c.l.b16 %v758
      %v811 = vunpack.c.l.b16 %v759
      %v812 = vunpack.c.l.b16 %v760
      %v813 = vunpack.c.l.b16 %v761
      %v814 = vunpack.c.l.b16 %v762
      %v815 = vunpack.c.l.b16 %v763
      %v816 = vunpack.c.l.b16 %v764
      %v817 = vunpack.c.l.b16 %v765
      %v818 = vunpack.c.l.b16 %v766
      %v819 = vunpack.c.l.b16 %v767
      %v820 = vunpack.c.l.b16 %v768
      %v821 = vunpack.c.l.b16 %v769
      %v822 = vunpack.c.l.b16 %v770
      %v823 = vunpack.c.l.b16 %v771
      %v824 = vunpack.c.l.b16 %v772
      %v825 = vunpack.c.l.b16 %v773
      %v826 = vunpack.c.l.b16 %v774
      %v827 = vunpack.c.l.b16 %v775
      %v828 = vunpack.c.l.b16 %v776
      %v829 = vunpack.c.l.b16 %v777
      %v830 = vpack.c.b16 %v805, %v804
      %v831 = vpack.c.b16 %v807, %v806
      %v832 = vpack.c.b16 %v809, %v808
      %v833 = vpack.c.b16 %v811, %v810
      %v834 = vpack.c.b16 %v813, %v812
      %v835 = vpack.c.b16 %v815, %v814
      %v836 = vpack.c.b16 %v817, %v816
      %v837 = vpack.c.b16 %v819, %v818
      %v838 = vpack.c.b16 %v821, %v820
      %v839 = vpack.c.b16 %v823, %v822
      %v840 = vpack.c.b16 %v825, %v824
      %v841 = vpack.c.b16 %v827, %v826
      %v842 = vpack.c.b16 %v829, %v828
      %v844 = vsel %vm282, %v830, 0
      %v847 = vsel %vm282, %v831, 0
      %v850 = vsel %vm282, %v832, 0
      %v853 = vsel %vm282, %v833, 0
      %v856 = vsel %vm282, %v834, 0
      %v859 = vsel %vm282, %v835, 0
      %v862 = vsel %vm282, %v836, 0
      %v865 = vsel %vm282, %v837, 0
      %v868 = vsel %vm282, %v838, 0
      %v871 = vsel %vm282, %v839, 0
      %v874 = vsel %vm282, %v840, 0
      %v877 = vsel %vm282, %v841, 0
      %v880 = vsel %vm282, %v842, 0
      %882 = vmatprep.subr.bf16.mxu0 0
      %883 = vmatpush1.bf16.msra.mxu0 %v278
      %884 = vmatprep.subr.bf16.mxu0 0
      %885 = vmatpush1.bf16.msra.mxu0 %v279
      %886 = vmatprep.subr.bf16.mxu0 0
      %887 = vmatpush1.bf16.msra.mxu0 0
      %888 = vmatprep.subr.bf16.mxu0 0
      %889 = vmatpush1.bf16.msra.mxu0 0
      %890 = vmatprep.subr.bf16.mxu0 0
      %891 = vmatpush1.bf16.msra.mxu0 0
      %892 = vmatprep.subr.bf16.mxu0 0
      %893 = vmatpush1.bf16.msra.mxu0 0
      %894 = vmatprep.subr.bf16.mxu0 0
      %895 = vmatpush1.bf16.msra.mxu0 0
      %896 = vmatprep.subr.bf16.mxu0 0
      %897 = vmatpush1.bf16.msra.mxu0 0
      %898 = vmatprep.subr.bf16.mxu0 0
      %899 = vmatpush1.bf16.msra.mxu0 0
      %900 = vmatprep.subr.bf16.mxu0 0
      %901 = vmatpush1.bf16.msra.mxu0 0
      %902 = vmatprep.subr.bf16.mxu0 0
      %903 = vmatpush1.bf16.msra.mxu0 0
      %904 = vmatprep.subr.bf16.mxu0 0
      %905 = vmatpush1.bf16.msra.mxu0 0
      %906 = vmatprep.subr.bf16.mxu0 0
      %907 = vmatpush1.bf16.msra.mxu0 0
      %908 = vmatprep.subr.bf16.mxu0 0
      %909 = vmatpush1.bf16.msra.mxu0 0
      %910 = vmatprep.subr.bf16.mxu0 0
      %911 = vmatpush1.bf16.msra.mxu0 0
      %912 = vmatprep.subr.bf16.mxu0 0
      %913 = vmatpush1.bf16.msra.mxu0 0
      %914 = vmatprep.mubr.bf16.mxu0 0
      %915 = vmatmul.mubr.bf16.gmra.mrb[0].mxu0 %v844
      %v916 = vpop.f32.mrb[0].mxu0
      %v917 = vadd.f32 0.0, %v916
      %v918 = vpop.f32.mrb[0].mxu0
      %v919 = vpop.f32.mrb[0].mxu0
      %v920 = vadd.f32 0.0, %v919
      %v921 = vpop.f32.mrb[0].mxu0
      %922 = vmatprep.mubr.bf16.mxu0 0
      %923 = vmatmul.mubr.bf16.gmra.mrb[0].mxu0 %v847
      %v924 = vpop.f32.mrb[0].mxu0
      %v925 = vadd.f32 0.0, %v924
      %v926 = vpop.f32.mrb[0].mxu0
      %v927 = vpop.f32.mrb[0].mxu0
      %v928 = vadd.f32 0.0, %v927
      %v929 = vpop.f32.mrb[0].mxu0
      %930 = vmatprep.mubr.bf16.mxu0 0
      %931 = vmatmul.mubr.bf16.gmra.mrb[0].mxu0 %v850
      %v932 = vpop.f32.mrb[0].mxu0
      %v933 = vadd.f32 0.0, %v932
      %v934 = vpop.f32.mrb[0].mxu0
      %v935 = vpop.f32.mrb[0].mxu0
      %v936 = vadd.f32 0.0, %v935
      %v937 = vpop.f32.mrb[0].mxu0
      %938 = vmatprep.mubr.bf16.mxu0 0
      %939 = vmatmul.mubr.bf16.gmra.mrb[0].mxu0 %v853
      %v940 = vpop.f32.mrb[0].mxu0
      %v941 = vadd.f32 0.0, %v940
      %v942 = vpop.f32.mrb[0].mxu0
      %v943 = vpop.f32.mrb[0].mxu0
      %v944 = vadd.f32 0.0, %v943
      %v945 = vpop.f32.mrb[0].mxu0
      %946 = vmatprep.mubr.bf16.mxu0 0
      %947 = vmatmul.mubr.bf16.gmra.mrb[0].mxu0 %v856
      %v948 = vpop.f32.mrb[0].mxu0
      %v949 = vadd.f32 0.0, %v948
      %v950 = vpop.f32.mrb[0].mxu0
      %v951 = vpop.f32.mrb[0].mxu0
      %v952 = vadd.f32 0.0, %v951
      %v953 = vpop.f32.mrb[0].mxu0
      %954 = vmatprep.mubr.bf16.mxu0 0
      %955 = vmatmul.mubr.bf16.gmra.mrb[0].mxu0 %v859
      %v956 = vpop.f32.mrb[0].mxu0
      %v957 = vadd.f32 0.0, %v956
      %v958 = vpop.f32.mrb[0].mxu0
      %v959 = vpop.f32.mrb[0].mxu0
      %v960 = vadd.f32 0.0, %v959
      %v961 = vpop.f32.mrb[0].mxu0
      %962 = vmatprep.mubr.bf16.mxu0 0
      %963 = vmatmul.mubr.bf16.gmra.mrb[0].mxu0 %v862
      %v964 = vpop.f32.mrb[0].mxu0
      %v965 = vadd.f32 0.0, %v964
      %v966 = vpop.f32.mrb[0].mxu0
      %v967 = vpop.f32.mrb[0].mxu0
      %v968 = vadd.f32 0.0, %v967
      %v969 = vpop.f32.mrb[0].mxu0
      %970 = vmatprep.mubr.bf16.mxu0 0
      %971 = vmatmul.mubr.bf16.gmra.mrb[0].mxu0 %v865
      %v972 = vpop.f32.mrb[0].mxu0
      %v973 = vadd.f32 0.0, %v972
      %v974 = vpop.f32.mrb[0].mxu0
      %v975 = vpop.f32.mrb[0].mxu0
      %v976 = vadd.f32 0.0, %v975
      %v977 = vpop.f32.mrb[0].mxu0
      %978 = vmatprep.mubr.bf16.mxu0 0
      %979 = vmatmul.mubr.bf16.gmra.mrb[0].mxu0 %v868
      %v980 = vpop.f32.mrb[0].mxu0
      %v981 = vadd.f32 0.0, %v980
      %v982 = vpop.f32.mrb[0].mxu0
      %v983 = vpop.f32.mrb[0].mxu0
      %v984 = vadd.f32 0.0, %v983
      %v985 = vpop.f32.mrb[0].mxu0
      %986 = vmatprep.mubr.bf16.mxu0 0
      %987 = vmatmul.mubr.bf16.gmra.mrb[0].mxu0 %v871
      %v988 = vpop.f32.mrb[0].mxu0
      %v989 = vadd.f32 0.0, %v988
      %v990 = vpop.f32.mrb[0].mxu0
      %v991 = vpop.f32.mrb[0].mxu0
      %v992 = vadd.f32 0.0, %v991
      %v993 = vpop.f32.mrb[0].mxu0
      %994 = vmatprep.mubr.bf16.mxu0 0
      %995 = vmatmul.mubr.bf16.gmra.mrb[0].mxu0 %v874
      %v996 = vpop.f32.mrb[0].mxu0
      %v997 = vadd.f32 0.0, %v996
      %v998 = vpop.f32.mrb[0].mxu0
      %v999 = vpop.f32.mrb[0].mxu0
      %v1000 = vadd.f32 0.0, %v999
      %v1001 = vpop.f32.mrb[0].mxu0
      %1002 = vmatprep.mubr.bf16.mxu0 0
      %1003 = vmatmul.mubr.bf16.gmra.mrb[0].mxu0 %v877
      %v1004 = vpop.f32.mrb[0].mxu0
      %v1005 = vadd.f32 0.0, %v1004
      %v1006 = vpop.f32.mrb[0].mxu0
      %v1007 = vpop.f32.mrb[0].mxu0
      %v1008 = vadd.f32 0.0, %v1007
      %v1009 = vpop.f32.mrb[0].mxu0
      %1010 = vmatprep.mubr.bf16.mxu0 0
      %1011 = vmatmul.mubr.bf16.gmra.mrb[0].mxu0 %v880
      %v1012 = vpop.f32.mrb[0].mxu0
      %v1013 = vadd.f32 0.0, %v1012
      %v1014 = vpop.f32.mrb[0].mxu0
      %v1015 = vpop.f32.mrb[0].mxu0
      %v1016 = vadd.f32 0.0, %v1015
      %v1017 = vpop.f32.mrb[0].mxu0
      %1018 = vdwg.mxu0
      %v1019 = vmax.f32 %v726, %v917
      %v1020 = vmax.f32 %v727, %v920
      %v1021 = vmax.f32 %v728, %v925
      %v1022 = vmax.f32 %v729, %v928
      %v1023 = vmax.f32 %v730, %v933
      %v1024 = vmax.f32 %v731, %v936
      %v1025 = vmax.f32 %v732, %v941
      %v1026 = vmax.f32 %v733, %v944
      %v1027 = vmax.f32 %v734, %v949
      %v1028 = vmax.f32 %v735, %v952
      %v1029 = vmax.f32 %v736, %v957
      %v1030 = vmax.f32 %v737, %v960
      %v1031 = vmax.f32 %v738, %v965
      %v1032 = vmax.f32 %v739, %v968
      %v1033 = vmax.f32 %v740, %v973
      %v1034 = vmax.f32 %v741, %v976
      %v1035 = vmax.f32 %v742, %v981
      %v1036 = vmax.f32 %v743, %v984
      %v1037 = vmax.f32 %v744, %v989
      %v1038 = vmax.f32 %v745, %v992
      %v1039 = vmax.f32 %v746, %v997
      %v1040 = vmax.f32 %v747, %v1000
      %v1041 = vmax.f32 %v748, %v1005
      %v1042 = vmax.f32 %v749, %v1008
      %v1043 = vmax.f32 %v750, %v1013
      %v1044 = vmax.f32 %v751, %v1016
      %v1045 = vld [vmem:[%s166 + $0x138] sm:$0xf]
      %v1046 = vld [vmem:[%s166 + $0x13c] sm:$0xf]
      %v1047 = vld [vmem:[%s166 + $0x140] sm:$0xf]
      %v1048 = vld [vmem:[%s166 + $0x144] sm:$0xf]
      %v1049 = vld [vmem:[%s166 + $0x148] sm:$0xf]
      %v1050 = vld [vmem:[%s166 + $0x14c] sm:$0xf]
      %v1051 = vld [vmem:[%s166 + $0x150] sm:$0xf]
      %v1052 = vld [vmem:[%s166 + $0x154] sm:$0xf]
      %v1053 = vld [vmem:[%s166 + $0x158] sm:$0xf]
      %v1054 = vld [vmem:[%s166 + $0x15c] sm:$0xf]
      %v1055 = vld [vmem:[%s166 + $0x160] sm:$0xf]
      %v1056 = vld [vmem:[%s166 + $0x164] sm:$0xf]
      %v1057 = vld [vmem:[%s166 + $0x168] sm:$0xf]
      %v1058 = vld [vmem:[%s166 + $0x16c] sm:$0xf]
      %v1059 = vld [vmem:[%s166 + $0x170] sm:$0xf]
      %v1060 = vld [vmem:[%s166 + $0x174] sm:$0xf]
      %v1061 = vld [vmem:[%s166 + $0x178] sm:$0xf]
      %v1062 = vld [vmem:[%s166 + $0x17c] sm:$0xf]
      %v1063 = vld [vmem:[%s166 + $0x180] sm:$0xf]
      %v1064 = vld [vmem:[%s166 + $0x184] sm:$0xf]
      %v1065 = vld [vmem:[%s166 + $0x188] sm:$0xf]
      %v1066 = vld [vmem:[%s166 + $0x18c] sm:$0xf]
      %v1067 = vld [vmem:[%s166 + $0x190] sm:$0xf]
      %v1068 = vld [vmem:[%s166 + $0x194] sm:$0xf]
      %v1069 = vld [vmem:[%s166 + $0x198] sm:$0xf]
      %v1070 = vld [vmem:[%s166 + $0x19c] sm:$0xf]
      %v1097 = vunpack.c.l.b16 %v1045
      %v1098 = vunpack.c.l.b16 %v1046
      %v1099 = vunpack.c.l.b16 %v1047
      %v1100 = vunpack.c.l.b16 %v1048
      %v1101 = vunpack.c.l.b16 %v1049
      %v1102 = vunpack.c.l.b16 %v1050
      %v1103 = vunpack.c.l.b16 %v1051
      %v1104 = vunpack.c.l.b16 %v1052
      %v1105 = vunpack.c.l.b16 %v1053
      %v1106 = vunpack.c.l.b16 %v1054
      %v1107 = vunpack.c.l.b16 %v1055
      %v1108 = vunpack.c.l.b16 %v1056
      %v1109 = vunpack.c.l.b16 %v1057
      %v1110 = vunpack.c.l.b16 %v1058
      %v1111 = vunpack.c.l.b16 %v1059
      %v1112 = vunpack.c.l.b16 %v1060
      %v1113 = vunpack.c.l.b16 %v1061
      %v1114 = vunpack.c.l.b16 %v1062
      %v1115 = vunpack.c.l.b16 %v1063
      %v1116 = vunpack.c.l.b16 %v1064
      %v1117 = vunpack.c.l.b16 %v1065
      %v1118 = vunpack.c.l.b16 %v1066
      %v1119 = vunpack.c.l.b16 %v1067
      %v1120 = vunpack.c.l.b16 %v1068
      %v1121 = vunpack.c.l.b16 %v1069
      %v1122 = vunpack.c.l.b16 %v1070
      %v1123 = vpack.c.b16 %v1098, %v1097
      %v1124 = vpack.c.b16 %v1100, %v1099
      %v1125 = vpack.c.b16 %v1102, %v1101
      %v1126 = vpack.c.b16 %v1104, %v1103
      %v1127 = vpack.c.b16 %v1106, %v1105
      %v1128 = vpack.c.b16 %v1108, %v1107
      %v1129 = vpack.c.b16 %v1110, %v1109
      %v1130 = vpack.c.b16 %v1112, %v1111
      %v1131 = vpack.c.b16 %v1114, %v1113
      %v1132 = vpack.c.b16 %v1116, %v1115
      %v1133 = vpack.c.b16 %v1118, %v1117
      %v1134 = vpack.c.b16 %v1120, %v1119
      %v1135 = vpack.c.b16 %v1122, %v1121
      %v1137 = vsel %vm282, %v1123, 0
      %v1140 = vsel %vm282, %v1124, 0
      %v1143 = vsel %vm282, %v1125, 0
      %v1146 = vsel %vm282, %v1126, 0
      %v1149 = vsel %vm282, %v1127, 0
      %v1152 = vsel %vm282, %v1128, 0
      %v1155 = vsel %vm282, %v1129, 0
      %v1158 = vsel %vm282, %v1130, 0
      %v1161 = vsel %vm282, %v1131, 0
      %v1164 = vsel %vm282, %v1132, 0
      %v1167 = vsel %vm282, %v1133, 0
      %v1170 = vsel %vm282, %v1134, 0
      %v1173 = vsel %vm282, %v1135, 0
      %1175 = vmatprep.subr.bf16.mxu0 0
      %1176 = vmatpush1.bf16.msra.mxu0 %v278
      %1177 = vmatprep.subr.bf16.mxu0 0
      %1178 = vmatpush1.bf16.msra.mxu0 %v279
      %1179 = vmatprep.subr.bf16.mxu0 0
      %1180 = vmatpush1.bf16.msra.mxu0 0
      %1181 = vmatprep.subr.bf16.mxu0 0
      %1182 = vmatpush1.bf16.msra.mxu0 0
      %1183 = vmatprep.subr.bf16.mxu0 0
      %1184 = vmatpush1.bf16.msra.mxu0 0
      %1185 = vmatprep.subr.bf16.mxu0 0
      %1186 = vmatpush1.bf16.msra.mxu0 0
      %1187 = vmatprep.subr.bf16.mxu0 0
      %1188 = vmatpush1.bf16.msra.mxu0 0
      %1189 = vmatprep.subr.bf16.mxu0 0
      %1190 = vmatpush1.bf16.msra.mxu0 0
      %1191 = vmatprep.subr.bf16.mxu0 0
      %1192 = vmatpush1.bf16.msra.mxu0 0
      %1193 = vmatprep.subr.bf16.mxu0 0
      %1194 = vmatpush1.bf16.msra.mxu0 0
      %1195 = vmatprep.subr.bf16.mxu0 0
      %1196 = vmatpush1.bf16.msra.mxu0 0
      %1197 = vmatprep.subr.bf16.mxu0 0
      %1198 = vmatpush1.bf16.msra.mxu0 0
      %1199 = vmatprep.subr.bf16.mxu0 0
      %1200 = vmatpush1.bf16.msra.mxu0 0
      %1201 = vmatprep.subr.bf16.mxu0 0
      %1202 = vmatpush1.bf16.msra.mxu0 0
      %1203 = vmatprep.subr.bf16.mxu0 0
      %1204 = vmatpush1.bf16.msra.mxu0 0
      %1205 = vmatprep.subr.bf16.mxu0 0
      %1206 = vmatpush1.bf16.msra.mxu0 0
      %1207 = vmatprep.mubr.bf16.mxu0 0
      %1208 = vmatmul.mubr.bf16.gmra.mrb[0].mxu0 %v1137
      %v1209 = vpop.f32.mrb[0].mxu0
      %v1210 = vadd.f32 0.0, %v1209
      %v1211 = vpop.f32.mrb[0].mxu0
      %v1212 = vpop.f32.mrb[0].mxu0
      %v1213 = vadd.f32 0.0, %v1212
      %v1214 = vpop.f32.mrb[0].mxu0
      %1215 = vmatprep.mubr.bf16.mxu0 0
      %1216 = vmatmul.mubr.bf16.gmra.mrb[0].mxu0 %v1140
      %v1217 = vpop.f32.mrb[0].mxu0
      %v1218 = vadd.f32 0.0, %v1217
      %v1219 = vpop.f32.mrb[0].mxu0
      %v1220 = vpop.f32.mrb[0].mxu0
      %v1221 = vadd.f32 0.0, %v1220
      %v1222 = vpop.f32.mrb[0].mxu0
      %1223 = vmatprep.mubr.bf16.mxu0 0
      %1224 = vmatmul.mubr.bf16.gmra.mrb[0].mxu0 %v1143
      %v1225 = vpop.f32.mrb[0].mxu0
      %v1226 = vadd.f32 0.0, %v1225
      %v1227 = vpop.f32.mrb[0].mxu0
      %v1228 = vpop.f32.mrb[0].mxu0
      %v1229 = vadd.f32 0.0, %v1228
      %v1230 = vpop.f32.mrb[0].mxu0
      %1231 = vmatprep.mubr.bf16.mxu0 0
      %1232 = vmatmul.mubr.bf16.gmra.mrb[0].mxu0 %v1146
      %v1233 = vpop.f32.mrb[0].mxu0
      %v1234 = vadd.f32 0.0, %v1233
      %v1235 = vpop.f32.mrb[0].mxu0
      %v1236 = vpop.f32.mrb[0].mxu0
      %v1237 = vadd.f32 0.0, %v1236
      %v1238 = vpop.f32.mrb[0].mxu0
      %1239 = vmatprep.mubr.bf16.mxu0 0
      %1240 = vmatmul.mubr.bf16.gmra.mrb[0].mxu0 %v1149
      %v1241 = vpop.f32.mrb[0].mxu0
      %v1242 = vadd.f32 0.0, %v1241
      %v1243 = vpop.f32.mrb[0].mxu0
      %v1244 = vpop.f32.mrb[0].mxu0
      %v1245 = vadd.f32 0.0, %v1244
      %v1246 = vpop.f32.mrb[0].mxu0
      %1247 = vmatprep.mubr.bf16.mxu0 0
      %1248 = vmatmul.mubr.bf16.gmra.mrb[0].mxu0 %v1152
      %v1249 = vpop.f32.mrb[0].mxu0
      %v1250 = vadd.f32 0.0, %v1249
      %v1251 = vpop.f32.mrb[0].mxu0
      %v1252 = vpop.f32.mrb[0].mxu0
      %v1253 = vadd.f32 0.0, %v1252
      %v1254 = vpop.f32.mrb[0].mxu0
      %1255 = vmatprep.mubr.bf16.mxu0 0
      %1256 = vmatmul.mubr.bf16.gmra.mrb[0].mxu0 %v1155
      %v1257 = vpop.f32.mrb[0].mxu0
      %v1258 = vadd.f32 0.0, %v1257
      %v1259 = vpop.f32.mrb[0].mxu0
      %v1260 = vpop.f32.mrb[0].mxu0
      %v1261 = vadd.f32 0.0, %v1260
      %v1262 = vpop.f32.mrb[0].mxu0
      %1263 = vmatprep.mubr.bf16.mxu0 0
      %1264 = vmatmul.mubr.bf16.gmra.mrb[0].mxu0 %v1158
      %v1265 = vpop.f32.mrb[0].mxu0
      %v1266 = vadd.f32 0.0, %v1265
      %v1267 = vpop.f32.mrb[0].mxu0
      %v1268 = vpop.f32.mrb[0].mxu0
      %v1269 = vadd.f32 0.0, %v1268
      %v1270 = vpop.f32.mrb[0].mxu0
      %1271 = vmatprep.mubr.bf16.mxu0 0
      %1272 = vmatmul.mubr.bf16.gmra.mrb[0].mxu0 %v1161
      %v1273 = vpop.f32.mrb[0].mxu0
      %v1274 = vadd.f32 0.0, %v1273
      %v1275 = vpop.f32.mrb[0].mxu0
      %v1276 = vpop.f32.mrb[0].mxu0
      %v1277 = vadd.f32 0.0, %v1276
      %v1278 = vpop.f32.mrb[0].mxu0
      %1279 = vmatprep.mubr.bf16.mxu0 0
      %1280 = vmatmul.mubr.bf16.gmra.mrb[0].mxu0 %v1164
      %v1281 = vpop.f32.mrb[0].mxu0
      %v1282 = vadd.f32 0.0, %v1281
      %v1283 = vpop.f32.mrb[0].mxu0
      %v1284 = vpop.f32.mrb[0].mxu0
      %v1285 = vadd.f32 0.0, %v1284
      %v1286 = vpop.f32.mrb[0].mxu0
      %1287 = vmatprep.mubr.bf16.mxu0 0
      %1288 = vmatmul.mubr.bf16.gmra.mrb[0].mxu0 %v1167
      %v1289 = vpop.f32.mrb[0].mxu0
      %v1290 = vadd.f32 0.0, %v1289
      %v1291 = vpop.f32.mrb[0].mxu0
      %v1292 = vpop.f32.mrb[0].mxu0
      %v1293 = vadd.f32 0.0, %v1292
      %v1294 = vpop.f32.mrb[0].mxu0
      %1295 = vmatprep.mubr.bf16.mxu0 0
      %1296 = vmatmul.mubr.bf16.gmra.mrb[0].mxu0 %v1170
      %v1297 = vpop.f32.mrb[0].mxu0
      %v1298 = vadd.f32 0.0, %v1297
      %v1299 = vpop.f32.mrb[0].mxu0
      %v1300 = vpop.f32.mrb[0].mxu0
      %v1301 = vadd.f32 0.0, %v1300
      %v1302 = vpop.f32.mrb[0].mxu0
      %1303 = vmatprep.mubr.bf16.mxu0 0
      %1304 = vmatmul.mubr.bf16.gmra.mrb[0].mxu0 %v1173
      %v1305 = vpop.f32.mrb[0].mxu0
      %v1306 = vadd.f32 0.0, %v1305
      %v1307 = vpop.f32.mrb[0].mxu0
      %v1308 = vpop.f32.mrb[0].mxu0
      %v1309 = vadd.f32 0.0, %v1308
      %v1310 = vpop.f32.mrb[0].mxu0
      %1311 = vdwg.mxu0
      %v1312 = vmax.f32 %v1019, %v1210
      %v1313 = vmax.f32 %v1020, %v1213
      %v1314 = vmax.f32 %v1021, %v1218
      %v1315 = vmax.f32 %v1022, %v1221
      %v1316 = vmax.f32 %v1023, %v1226
      %v1317 = vmax.f32 %v1024, %v1229
      %v1318 = vmax.f32 %v1025, %v1234
      %v1319 = vmax.f32 %v1026, %v1237
      %v1320 = vmax.f32 %v1027, %v1242
      %v1321 = vmax.f32 %v1028, %v1245
      %v1322 = vmax.f32 %v1029, %v1250
      %v1323 = vmax.f32 %v1030, %v1253
      %v1324 = vmax.f32 %v1031, %v1258
      %v1325 = vmax.f32 %v1032, %v1261
      %v1326 = vmax.f32 %v1033, %v1266
      %v1327 = vmax.f32 %v1034, %v1269
      %v1328 = vmax.f32 %v1035, %v1274
      %v1329 = vmax.f32 %v1036, %v1277
      %v1330 = vmax.f32 %v1037, %v1282
      %v1331 = vmax.f32 %v1038, %v1285
      %v1332 = vmax.f32 %v1039, %v1290
      %v1333 = vmax.f32 %v1040, %v1293
      %v1334 = vmax.f32 %v1041, %v1298
      %v1335 = vmax.f32 %v1042, %v1301
      %v1336 = vmax.f32 %v1043, %v1306
      %v1337 = vmax.f32 %v1044, %v1309
      %v1338 = vld [vmem:[%s2] sm:$0x1]
      %v1340 = vlaneseq
      %v1341 = vshrl.u32 %v1340, 7
      %v1342 = vsub.s32 0, %v1341
      %v1343 = vrot.slane %v1338, %v1342
      %v1345 = vadd.f32 %v1312, %v1343
      %v1346 = vadd.f32 %v1313, %v1343
      %v1347 = vadd.f32 %v1314, %v1343
      %v1348 = vadd.f32 %v1315, %v1343
      %v1349 = vadd.f32 %v1316, %v1343
      %v1350 = vadd.f32 %v1317, %v1343
      %v1351 = vadd.f32 %v1318, %v1343
      %v1352 = vadd.f32 %v1319, %v1343
      %v1353 = vadd.f32 %v1320, %v1343
      %v1354 = vadd.f32 %v1321, %v1343
      %v1355 = vadd.f32 %v1322, %v1343
      %v1356 = vadd.f32 %v1323, %v1343
      %v1357 = vadd.f32 %v1324, %v1343
      %v1358 = vadd.f32 %v1325, %v1343
      %v1359 = vadd.f32 %v1326, %v1343
      %v1360 = vadd.f32 %v1327, %v1343
      %v1361 = vadd.f32 %v1328, %v1343
      %v1362 = vadd.f32 %v1329, %v1343
      %v1363 = vadd.f32 %v1330, %v1343
      %v1364 = vadd.f32 %v1331, %v1343
      %v1365 = vadd.f32 %v1332, %v1343
      %v1366 = vadd.f32 %v1333, %v1343
      %v1367 = vadd.f32 %v1334, %v1343
      %v1368 = vadd.f32 %v1335, %v1343
      %v1369 = vadd.f32 %v1336, %v1343
      %v1370 = vadd.f32 %v1337, %v1343
      %v1371 = vmax.f32 %v1345, 0.0
      %v1372 = vmax.f32 %v1346, 0.0
      %v1373 = vmax.f32 %v1347, 0.0
      %v1374 = vmax.f32 %v1348, 0.0
      %v1375 = vmax.f32 %v1349, 0.0
      %v1376 = vmax.f32 %v1350, 0.0
      %v1377 = vmax.f32 %v1351, 0.0
      %v1378 = vmax.f32 %v1352, 0.0
      %v1379 = vmax.f32 %v1353, 0.0
      %v1380 = vmax.f32 %v1354, 0.0
      %v1381 = vmax.f32 %v1355, 0.0
      %v1382 = vmax.f32 %v1356, 0.0
      %v1383 = vmax.f32 %v1357, 0.0
      %v1384 = vmax.f32 %v1358, 0.0
      %v1385 = vmax.f32 %v1359, 0.0
      %v1386 = vmax.f32 %v1360, 0.0
      %v1387 = vmax.f32 %v1361, 0.0
      %v1388 = vmax.f32 %v1362, 0.0
      %v1389 = vmax.f32 %v1363, 0.0
      %v1390 = vmax.f32 %v1364, 0.0
      %v1391 = vmax.f32 %v1365, 0.0
      %v1392 = vmax.f32 %v1366, 0.0
      %v1393 = vmax.f32 %v1367, 0.0
      %v1394 = vmax.f32 %v1368, 0.0
      %v1395 = vmax.f32 %v1369, 0.0
      %v1396 = vmax.f32 %v1370, 0.0
      %v1397 = vpack.c.bf16 %v1372, %v1371
      %v1398 = vpack.c.bf16 %v1374, %v1373
      %v1399 = vpack.c.bf16 %v1376, %v1375
      %v1400 = vpack.c.bf16 %v1378, %v1377
      %v1401 = vpack.c.bf16 %v1380, %v1379
      %v1402 = vpack.c.bf16 %v1382, %v1381
      %v1403 = vpack.c.bf16 %v1384, %v1383
      %v1404 = vpack.c.bf16 %v1386, %v1385
      %v1405 = vpack.c.bf16 %v1388, %v1387
      %v1406 = vpack.c.bf16 %v1390, %v1389
      %v1407 = vpack.c.bf16 %v1392, %v1391
      %v1408 = vpack.c.bf16 %v1394, %v1393
      %v1409 = vpack.c.bf16 %v1396, %v1395
      %v1423 = vunpack.c.l.b16 %v1397
      %v1424 = vunpack.c.h.b16 %v1397
      %v1425 = vunpack.c.l.b16 %v1398
      %v1426 = vunpack.c.h.b16 %v1398
      %v1427 = vunpack.c.l.b16 %v1399
      %v1428 = vunpack.c.h.b16 %v1399
      %v1429 = vunpack.c.l.b16 %v1400
      %v1430 = vunpack.c.h.b16 %v1400
      %v1431 = vunpack.c.l.b16 %v1401
      %v1432 = vunpack.c.h.b16 %v1401
      %v1433 = vunpack.c.l.b16 %v1402
      %v1434 = vunpack.c.h.b16 %v1402
      %v1435 = vunpack.c.l.b16 %v1403
      %v1436 = vunpack.c.h.b16 %v1403
      %v1437 = vunpack.c.l.b16 %v1404
      %v1438 = vunpack.c.h.b16 %v1404
      %v1439 = vunpack.c.l.b16 %v1405
      %v1440 = vunpack.c.h.b16 %v1405
      %v1441 = vunpack.c.l.b16 %v1406
      %v1442 = vunpack.c.h.b16 %v1406
      %v1443 = vunpack.c.l.b16 %v1407
      %v1444 = vunpack.c.h.b16 %v1407
      %v1445 = vunpack.c.l.b16 %v1408
      %v1446 = vunpack.c.h.b16 %v1408
      %v1447 = vunpack.c.l.b16 %v1409
      %v1448 = vunpack.c.h.b16 %v1409
      %v1449 = vpack.c.b16 %v1423, %v1423
      %v1450 = vpack.c.b16 %v1424, %v1424
      %v1451 = vpack.c.b16 %v1425, %v1425
      %v1452 = vpack.c.b16 %v1426, %v1426
      %v1453 = vpack.c.b16 %v1427, %v1427
      %v1454 = vpack.c.b16 %v1428, %v1428
      %v1455 = vpack.c.b16 %v1429, %v1429
      %v1456 = vpack.c.b16 %v1430, %v1430
      %v1457 = vpack.c.b16 %v1431, %v1431
      %v1458 = vpack.c.b16 %v1432, %v1432
      %v1459 = vpack.c.b16 %v1433, %v1433
      %v1460 = vpack.c.b16 %v1434, %v1434
      %v1461 = vpack.c.b16 %v1435, %v1435
      %v1462 = vpack.c.b16 %v1436, %v1436
      %v1463 = vpack.c.b16 %v1437, %v1437
      %v1464 = vpack.c.b16 %v1438, %v1438
      %v1465 = vpack.c.b16 %v1439, %v1439
      %v1466 = vpack.c.b16 %v1440, %v1440
      %v1467 = vpack.c.b16 %v1441, %v1441
      %v1468 = vpack.c.b16 %v1442, %v1442
      %v1469 = vpack.c.b16 %v1443, %v1443
      %v1470 = vpack.c.b16 %v1444, %v1444
      %v1471 = vpack.c.b16 %v1445, %v1445
      %v1472 = vpack.c.b16 %v1446, %v1446
      %v1473 = vpack.c.b16 %v1447, %v1447
      %v1474 = vpack.c.b16 %v1448, %v1448
      %1501 = vst [vmem:[%s172] sm:$0xf] %v1449
      %1502 = vst [vmem:[%s172 + $0x4] sm:$0xf] %v1450
      %1503 = vst [vmem:[%s172 + $0x8] sm:$0xf] %v1451
      %1504 = vst [vmem:[%s172 + $0xc] sm:$0xf] %v1452
      %1505 = vst [vmem:[%s172 + $0x10] sm:$0xf] %v1453
      %1506 = vst [vmem:[%s172 + $0x14] sm:$0xf] %v1454
      %1507 = vst [vmem:[%s172 + $0x18] sm:$0xf] %v1455
      %1508 = vst [vmem:[%s172 + $0x1c] sm:$0xf] %v1456
      %1509 = vst [vmem:[%s172 + $0x20] sm:$0xf] %v1457
      %1510 = vst [vmem:[%s172 + $0x24] sm:$0xf] %v1458
      %1511 = vst [vmem:[%s172 + $0x28] sm:$0xf] %v1459
      %1512 = vst [vmem:[%s172 + $0x2c] sm:$0xf] %v1460
      %1513 = vst [vmem:[%s172 + $0x30] sm:$0xf] %v1461
      %1514 = vst [vmem:[%s172 + $0x34] sm:$0xf] %v1462
      %1515 = vst [vmem:[%s172 + $0x38] sm:$0xf] %v1463
      %1516 = vst [vmem:[%s172 + $0x3c] sm:$0xf] %v1464
      %1517 = vst [vmem:[%s172 + $0x40] sm:$0xf] %v1465
      %1518 = vst [vmem:[%s172 + $0x44] sm:$0xf] %v1466
      %1519 = vst [vmem:[%s172 + $0x48] sm:$0xf] %v1467
      %1520 = vst [vmem:[%s172 + $0x4c] sm:$0xf] %v1468
      %1521 = vst [vmem:[%s172 + $0x50] sm:$0xf] %v1469
      %1522 = vst [vmem:[%s172 + $0x54] sm:$0xf] %v1470
      %1523 = vst [vmem:[%s172 + $0x58] sm:$0xf] %v1471
      %1524 = vst [vmem:[%s172 + $0x5c] sm:$0xf] %v1472
      %1525 = vst [vmem:[%s172 + $0x60] sm:$0xf] %v1473
      %1526 = vst [vmem:[%s172 + $0x64] sm:$0xf] %v1474
      %s1527 = smul.u32 26, %s14
      %p1528 = scmp.lt.s32.totalorder %s1527, 51
      %s1529 = scalar_select %p1528, %s1527, 51
      %s1530 = smul.addr %s1529, 4
      %s1531 = scalar_lea.vmem %s3, %s1530
      // Predicated region
      $region33: #{cnn_forward.3} parent=31 // pred_check
        %p1532 = pneg %p100
      $region34: #{cnn_forward.3} parent=31 // pred_check_branch
        %1534 = sbr.rel (%p1532) target = $region36
      $region35: #{cnn_forward.3} parent=31 // pred_region
        %s1535 = smul.u32 26, %s14
      $region36: #{cnn_forward.3} parent=31 // pred_fallthru
        _
    $region32: #{cnn_forward.3} parent=5 // pred_fallthru
      _
    %p1536 = scmp.le.s32.totalorder 2, %s9
    // Predicated region
    $region37: #{cnn_forward.3} parent=5 // pred_check
      %p1537 = pneg %p1536
    $region38: #{cnn_forward.3} parent=5 // pred_check_branch
      %1539 = sbr.rel (%p1537) target = $region40
    $region39: #{cnn_forward.3} parent=5 // pred_region
      %s1540 = ssub.s32 %s9, 2
      // Predicated region
      $region41: #{cnn_forward.3} parent=39 // pred_check
        %p1541 = pneg %p106
      $region42: #{cnn_forward.3} parent=39 // pred_check_branch
        %1543 = sbr.rel (%p1541) target = $region44
      $region43: #{cnn_forward.3} parent=39 // pred_region
        %s1544 = smul.u32 26, %s15
        %p1545 = scmp.lt.s32.totalorder %s1544, 51
        %s1546 = scalar_select %p1545, %s1544, 51
        %s1547 = smul.addr %s1546, 4
        %s1548 = scalar_lea.vmem %s3, %s1547
      $region44: #{cnn_forward.3} parent=39 // pred_fallthru
        _
    $region40: #{cnn_forward.3} parent=5 // pred_fallthru
      _
  $region6: #{cnn_forward.3} parent=0 // loop_footer
    %s13 = sadd.s32 1, %s9
  $region7: #{cnn_forward.3} parent=0 // loop_footer_branch
    %8 = sbr.rel target = $region3
  $region8: #{cnn_forward.3} parent=0 // loop_exit
    _

// kernel: cnn_forward.4
$region0: #{cnn_forward.4}
  #allocation0 [shape = 'u32[]', space=smem, size = 0x4, offset = 0x4, fixed_abs, tag = 'smem constant byte address 0x4 - core index']
  #allocation1 [shape = 'u32[144,128]{1,0:T(1,128)}', space=vmem, size = 0x12000, scoped, tag = 'internal scratch']
  %s0 = inlined_call_operand.vmem [shape: bf16[512,512], index: 0, kind: input, shape index: {}]
  %s1 = inlined_call_operand.vmem [shape: bf16[512,128], index: 1, kind: input, shape index: {}]
  %s2 = inlined_call_operand.vmem [shape: f32[1,128], index: 2, kind: input, shape index: {}]
  %s3 = inlined_call_operand.vmem [shape: bf16[128,128], index: 3, kind: output, shape index: {}]
  %s4 = sld [smem:[#allocation0]]
  $region45: #{cnn_forward.4} parent=0
    _
  %s6 = ssub.s32 1, %s4
  %s7 = scalar_select 0, %s6, %s4
  loop: start=0, step=1, limit=4
  $region2: #{cnn_forward.4} parent=0 // loop_pre_header
    _
  $region3: #{cnn_forward.4} parent=0 // loop_header
    %s9 = sphi 0, %s13
    %p10 = scmp.ge.s32.totalorder %s9, 4
    %s19 = sphi 0, %s21
    %s22 = sphi 0, %s19
    %s23 = sphi 0, %s22
    %s39 = sphi 0, %s23
    %s43 = sphi 0, %s43
    %s45 = sphi 0, %s43
    %s46 = sphi 0, %s45
    %s60 = sphi 0, %s46
    %s64 = sphi 0, %s64
    %s66 = sphi 0, %s64
    %s67 = sphi 0, %s66
    %s81 = sphi 0, %s67
    %s87 = sphi 0, %s89
    %s90 = sphi 0, %s87
    %s91 = sphi 0, %s90
    %s107 = sphi 0, %s91
  $region4: #{cnn_forward.4} parent=0 // loop_header_branch
    %12 = sbr.rel (%p10) target = $region8
  $region5: #{cnn_forward.4} parent=0 // loop_body
    %s14 = ssub.s32 %s9, 1
    %s15 = ssub.s32 %s9, 2
    %s16 = sadd.s32 %s9, 1
    %s17 = ssub.s32 %s9, %s16
    %p18 = scmp.eq.s32.totalorder %s17, 0
    %s20 = sadd.s32 %s19, 1
    %s21 = scalar_select %p18, %s19, %s20
    %p24 = pneg %p18
    %p25 = scmp.eq.s32.totalorder %s9, 1
    %p26 = por %p24, %p25
    %p27 = scmp.ne.s32.totalorder %s19, %s22
    %p28 = scmp.eq.s32.totalorder %s9, 0
    %p29 = por %p27, %p28
    %p30 = scmp.ne.s32.totalorder %s19, %s22
    %p31 = scmp.eq.s32.totalorder %s14, 1
    %p32 = por %p30, %p31
    %p33 = scmp.ne.s32.totalorder %s22, %s23
    %p34 = scmp.eq.s32.totalorder %s14, 0
    %p35 = por %p33, %p34
    %p36 = scmp.ne.s32.totalorder %s22, %s23
    %p37 = scmp.eq.s32.totalorder %s15, 1
    %p38 = por %p36, %p37
    %p40 = scmp.ne.s32.totalorder %s23, %s39
    %p41 = scmp.eq.s32.totalorder %s15, 0
    %p42 = por %p40, %p41
    %s44 = sadd.s32 %s43, 1
    %p47 = scmp.eq.s32.totalorder %s9, 1
    %p48 = scmp.ne.s32.totalorder %s43, %s45
    %p49 = scmp.eq.s32.totalorder %s9, 0
    %p50 = por %p48, %p49
    %p51 = scmp.ne.s32.totalorder %s43, %s45
    %p52 = scmp.eq.s32.totalorder %s14, 1
    %p53 = por %p51, %p52
    %p54 = scmp.ne.s32.totalorder %s45, %s46
    %p55 = scmp.eq.s32.totalorder %s14, 0
    %p56 = por %p54, %p55
    %p57 = scmp.ne.s32.totalorder %s45, %s46
    %p58 = scmp.eq.s32.totalorder %s15, 1
    %p59 = por %p57, %p58
    %p61 = scmp.ne.s32.totalorder %s46, %s60
    %p62 = scmp.eq.s32.totalorder %s15, 0
    %p63 = por %p61, %p62
    %s65 = sadd.s32 %s64, 1
    %p68 = scmp.eq.s32.totalorder %s9, 1
    %p69 = scmp.ne.s32.totalorder %s64, %s66
    %p70 = scmp.eq.s32.totalorder %s9, 0
    %p71 = por %p69, %p70
    %p72 = scmp.ne.s32.totalorder %s64, %s66
    %p73 = scmp.eq.s32.totalorder %s14, 1
    %p74 = por %p72, %p73
    %p75 = scmp.ne.s32.totalorder %s66, %s67
    %p76 = scmp.eq.s32.totalorder %s14, 0
    %p77 = por %p75, %p76
    %p78 = scmp.ne.s32.totalorder %s66, %s67
    %p79 = scmp.eq.s32.totalorder %s15, 1
    %p80 = por %p78, %p79
    %p82 = scmp.ne.s32.totalorder %s67, %s81
    %p83 = scmp.eq.s32.totalorder %s15, 0
    %p84 = por %p82, %p83
    %s85 = ssub.s32 %s9, %s16
    %p86 = scmp.eq.s32.totalorder %s85, 0
    %s88 = sadd.s32 %s87, 1
    %s89 = scalar_select %p86, %s87, %s88
    %p92 = pneg %p86
    %p93 = scmp.eq.s32.totalorder %s9, 1
    %p94 = por %p92, %p93
    %p95 = scmp.ne.s32.totalorder %s87, %s90
    %p96 = scmp.eq.s32.totalorder %s9, 0
    %p97 = por %p95, %p96
    %p98 = scmp.ne.s32.totalorder %s87, %s90
    %p99 = scmp.eq.s32.totalorder %s14, 1
    %p100 = por %p98, %p99
    %p101 = scmp.ne.s32.totalorder %s90, %s91
    %p102 = scmp.eq.s32.totalorder %s14, 0
    %p103 = por %p101, %p102
    %p104 = scmp.ne.s32.totalorder %s90, %s91
    %p105 = scmp.eq.s32.totalorder %s15, 1
    %p106 = por %p104, %p105
    %p108 = scmp.ne.s32.totalorder %s91, %s107
    %p109 = scmp.eq.s32.totalorder %s15, 0
    %p110 = por %p108, %p109
    %p111 = scmp.le.s32.totalorder 1, %s9
    %p112 = scmp.lt.s32.totalorder %s9, 3
    %p113 = pnand %p111, %p112
    %p114 = pneg %p113
    // Predicated region
    $region9: #{cnn_forward.4} parent=5 // pred_check
      _
    $region10: #{cnn_forward.4} parent=5 // pred_check_branch
      %116 = sbr.rel (%p113) target = $region12
    $region11: #{cnn_forward.4} parent=5 // pred_region
      %s117 = ssub.s32 %s9, 1
      // Predicated region
      $region13: #{cnn_forward.4} parent=11 // pred_check
        %p118 = pneg %p56
      $region14: #{cnn_forward.4} parent=11 // pred_check_branch
        %120 = sbr.rel (%p118) target = $region16
      $region15: #{cnn_forward.4} parent=11 // pred_region
        _
      $region16: #{cnn_forward.4} parent=11 // pred_fallthru
        _
      // Predicated region
      $region17: #{cnn_forward.4} parent=11 // pred_check
        %p121 = pneg %p77
      $region18: #{cnn_forward.4} parent=11 // pred_check_branch
        %123 = sbr.rel (%p121) target = $region20
      $region19: #{cnn_forward.4} parent=11 // pred_region
        _
      $region20: #{cnn_forward.4} parent=11 // pred_fallthru
        _
    $region12: #{cnn_forward.4} parent=5 // pred_fallthru
      _
    %p124 = scmp.lt.s32.totalorder %s9, 2
    // Predicated region
    $region21: #{cnn_forward.4} parent=5 // pred_check
      %p125 = pneg %p124
    $region22: #{cnn_forward.4} parent=5 // pred_check_branch
      %127 = sbr.rel (%p125) target = $region24
    $region23: #{cnn_forward.4} parent=5 // pred_region
      // Predicated region
      $region25: #{cnn_forward.4} parent=23 // pred_check
        %p128 = pneg %p29
      $region26: #{cnn_forward.4} parent=23 // pred_check_branch
        %130 = sbr.rel (%p128) target = $region28
      $region27: #{cnn_forward.4} parent=23 // pred_region
        %s131 = smul.u32 32, %s9
        %p132 = scmp.lt.s32.totalorder %s131, 63
        %s133 = scalar_select %p132, %s131, 63
        %s134 = smul.addr %s133, 4
        %s135 = smul.addr %s134, 4
        %s136 = scalar_lea.vmem %s0, %s135
        %s137 = smul.u32 32, %s9
      $region28: #{cnn_forward.4} parent=23 // pred_fallthru
        _
    $region24: #{cnn_forward.4} parent=5 // pred_fallthru
      _
    %p138 = scmp.le.s32.totalorder 1, %s9
    %p139 = scmp.lt.s32.totalorder %s9, 3
    %p140 = pnand %p138, %p139
    %p141 = pneg %p140
    // Predicated region
    $region29: #{cnn_forward.4} parent=5 // pred_check
      _
    $region30: #{cnn_forward.4} parent=5 // pred_check_branch
      %143 = sbr.rel (%p140) target = $region32
    $region31: #{cnn_forward.4} parent=5 // pred_region
      %s144 = ssub.s32 %s9, 1
      %s145 = smul.u32 32, %s14
      %p146 = scmp.lt.s32.totalorder %s145, 63
      %s147 = scalar_select %p146, %s145, 63
      %s148 = smul.addr %s147, 4
      %s149 = smul.addr %s148, 4
      %s150 = scalar_lea.vmem %s0, %s149
      %p151 = pneg %p35
      %p152 = pneg %p32
      %p153 = pneg %p56
      %p154 = pneg %p53
      %p155 = pneg %p77
      %p156 = pneg %p74
      %p157 = pneg %p103
      %p158 = pneg %p100
      %s159 = smul.u32 8, %s14
      %p160 = scmp.lt.s32.totalorder %s159, 15
      %s161 = scalar_select %p160, %s159, 15
      %s162 = smul.addr %s161, 4
      %s163 = scalar_lea.vmem %s3, %s162
      %s164 = smul.u32 32, %s14
      %p165 = scmp.lt.s32.totalorder %s164, 63
      %s166 = scalar_select %p165, %s164, 63
      %s167 = smul.addr %s166, 4
      %s168 = smul.addr %s167, 4
      %s169 = scalar_lea.vmem %s0, %s168
      %s170 = smul.u32 32, %s14
      %s171 = smul.u32 8, %s14
      %p172 = scmp.lt.s32.totalorder %s171, 15
      %s173 = scalar_select %p172, %s171, 15
      %s174 = smul.addr %s173, 4
      %s175 = scalar_lea.vmem %s3, %s174
      %s176 = smul.u32 8, %s14
      %v178 = vld [vmem:[%s1] sm:$0xf]
      %v179 = vld [vmem:[%s1 + $0x4] sm:$0xf]
      %v180 = vld [vmem:[%s1 + $0x8] sm:$0xf]
      %v181 = vld [vmem:[%s1 + $0xc] sm:$0xf]
      %v182 = vld [vmem:[%s1 + $0x10] sm:$0xf]
      %v183 = vld [vmem:[%s1 + $0x14] sm:$0xf]
      %v184 = vld [vmem:[%s1 + $0x18] sm:$0xf]
      %v185 = vld [vmem:[%s1 + $0x1c] sm:$0xf]
      %v186 = vld [vmem:[%s1 + $0x20] sm:$0xf]
      %v187 = vld [vmem:[%s1 + $0x24] sm:$0xf]
      %v188 = vld [vmem:[%s1 + $0x28] sm:$0xf]
      %v189 = vld [vmem:[%s1 + $0x2c] sm:$0xf]
      %v190 = vld [vmem:[%s1 + $0x30] sm:$0xf]
      %v191 = vld [vmem:[%s1 + $0x34] sm:$0xf]
      %v192 = vld [vmem:[%s1 + $0x38] sm:$0xf]
      %v193 = vld [vmem:[%s1 + $0x3c] sm:$0xf]
      %v194 = vld [vmem:[%s1 + $0x40] sm:$0xf]
      %v195 = vld [vmem:[%s1 + $0x44] sm:$0xf]
      %v196 = vld [vmem:[%s1 + $0x48] sm:$0xf]
      %v197 = vld [vmem:[%s1 + $0x4c] sm:$0xf]
      %v198 = vld [vmem:[%s1 + $0x50] sm:$0xf]
      %v199 = vld [vmem:[%s1 + $0x54] sm:$0xf]
      %v200 = vld [vmem:[%s1 + $0x58] sm:$0xf]
      %v201 = vld [vmem:[%s1 + $0x5c] sm:$0xf]
      %v202 = vld [vmem:[%s1 + $0x60] sm:$0xf]
      %v203 = vld [vmem:[%s1 + $0x64] sm:$0xf]
      %v204 = vld [vmem:[%s1 + $0x68] sm:$0xf]
      %v205 = vld [vmem:[%s1 + $0x6c] sm:$0xf]
      %v206 = vld [vmem:[%s1 + $0x70] sm:$0xf]
      %v207 = vld [vmem:[%s1 + $0x74] sm:$0xf]
      %v208 = vld [vmem:[%s1 + $0x78] sm:$0xf]
      %v209 = vld [vmem:[%s1 + $0x7c] sm:$0xf]
      %v210 = vld [vmem:[%s1 + $0x80] sm:$0xf]
      %v211 = vld [vmem:[%s1 + $0x84] sm:$0xf]
      %v212 = vld [vmem:[%s1 + $0x88] sm:$0xf]
      %v213 = vld [vmem:[%s1 + $0x8c] sm:$0xf]
      %v214 = vld [vmem:[%s1 + $0x90] sm:$0xf]
      %v215 = vld [vmem:[%s1 + $0x94] sm:$0xf]
      %v216 = vld [vmem:[%s1 + $0x98] sm:$0xf]
      %v217 = vld [vmem:[%s1 + $0x9c] sm:$0xf]
      %v218 = vld [vmem:[%s1 + $0xa0] sm:$0xf]
      %v219 = vld [vmem:[%s1 + $0xa4] sm:$0xf]
      %v220 = vld [vmem:[%s1 + $0xa8] sm:$0xf]
      %v221 = vld [vmem:[%s1 + $0xac] sm:$0xf]
      %v222 = vld [vmem:[%s1 + $0xb0] sm:$0xf]
      %v223 = vld [vmem:[%s1 + $0xb4] sm:$0xf]
      %v224 = vld [vmem:[%s1 + $0xb8] sm:$0xf]
      %v225 = vld [vmem:[%s1 + $0xbc] sm:$0xf]
      %v226 = vld [vmem:[%s1 + $0xc0] sm:$0xf]
      %v227 = vld [vmem:[%s1 + $0xc4] sm:$0xf]
      %v228 = vld [vmem:[%s1 + $0xc8] sm:$0xf]
      %v229 = vld [vmem:[%s1 + $0xcc] sm:$0xf]
      %v230 = vld [vmem:[%s1 + $0xd0] sm:$0xf]
      %v231 = vld [vmem:[%s1 + $0xd4] sm:$0xf]
      %v232 = vld [vmem:[%s1 + $0xd8] sm:$0xf]
      %v233 = vld [vmem:[%s1 + $0xdc] sm:$0xf]
      %v234 = vld [vmem:[%s1 + $0xe0] sm:$0xf]
      %v235 = vld [vmem:[%s1 + $0xe4] sm:$0xf]
      %v236 = vld [vmem:[%s1 + $0xe8] sm:$0xf]
      %v237 = vld [vmem:[%s1 + $0xec] sm:$0xf]
      %v238 = vld [vmem:[%s1 + $0xf0] sm:$0xf]
      %v239 = vld [vmem:[%s1 + $0xf4] sm:$0xf]
      %v240 = vld [vmem:[%s1 + $0xf8] sm:$0xf]
      %v241 = vld [vmem:[%s1 + $0xfc] sm:$0xf]
      %v242 = vld [vmem:[%s169] sm:$0xff]
      %v243 = vld [vmem:[%s169 + $0x8] sm:$0xff]
      %v244 = vld [vmem:[%s169 + $0x10] sm:$0xff]
      %v245 = vld [vmem:[%s169 + $0x18] sm:$0xff]
      %v246 = vld [vmem:[%s169 + $0x20] sm:$0xff]
      %v247 = vld [vmem:[%s169 + $0x28] sm:$0xff]
      %v248 = vld [vmem:[%s169 + $0x30] sm:$0xff]
      %v249 = vld [vmem:[%s169 + $0x38] sm:$0xff]
      %v250 = vld [vmem:[%s169 + $0x40] sm:$0xff]
      %v251 = vld [vmem:[%s169 + $0x48] sm:$0xff]
      %v252 = vld [vmem:[%s169 + $0x50] sm:$0xff]
      %v253 = vld [vmem:[%s169 + $0x58] sm:$0xff]
      %v254 = vld [vmem:[%s169 + $0x60] sm:$0xff]
      %v255 = vld [vmem:[%s169 + $0x68] sm:$0xff]
      %v256 = vld [vmem:[%s169 + $0x70] sm:$0xff]
      %v257 = vld [vmem:[%s169 + $0x78] sm:$0xff]
      %v274 = vunpack.c.l.b16 %v242
      %v275 = vunpack.c.h.b16 %v242
      %v276 = vunpack.c.l.b16 %v243
      %v277 = vunpack.c.h.b16 %v243
      %v278 = vunpack.c.l.b16 %v244
      %v279 = vunpack.c.h.b16 %v244
      %v280 = vunpack.c.l.b16 %v245
      %v281 = vunpack.c.h.b16 %v245
      %v282 = vunpack.c.l.b16 %v246
      %v283 = vunpack.c.h.b16 %v246
      %v284 = vunpack.c.l.b16 %v247
      %v285 = vunpack.c.h.b16 %v247
      %v286 = vunpack.c.l.b16 %v248
      %v287 = vunpack.c.h.b16 %v248
      %v288 = vunpack.c.l.b16 %v249
      %v289 = vunpack.c.h.b16 %v249
      %v290 = vunpack.c.l.b16 %v250
      %v291 = vunpack.c.h.b16 %v250
      %v292 = vunpack.c.l.b16 %v251
      %v293 = vunpack.c.h.b16 %v251
      %v294 = vunpack.c.l.b16 %v252
      %v295 = vunpack.c.h.b16 %v252
      %v296 = vunpack.c.l.b16 %v253
      %v297 = vunpack.c.h.b16 %v253
      %v298 = vunpack.c.l.b16 %v254
      %v299 = vunpack.c.h.b16 %v254
      %v300 = vunpack.c.l.b16 %v255
      %v301 = vunpack.c.h.b16 %v255
      %v302 = vunpack.c.l.b16 %v256
      %v303 = vunpack.c.h.b16 %v256
      %v304 = vunpack.c.l.b16 %v257
      %v305 = vunpack.c.h.b16 %v257
      %v306 = vpack.c.b16 %v278, %v274
      %v307 = vpack.c.b16 %v279, %v275
      %v308 = vpack.c.b16 %v280, %v276
      %v309 = vpack.c.b16 %v281, %v277
      %v310 = vpack.c.b16 %v286, %v282
      %v311 = vpack.c.b16 %v287, %v283
      %v312 = vpack.c.b16 %v288, %v284
      %v313 = vpack.c.b16 %v289, %v285
      %v314 = vpack.c.b16 %v294, %v290
      %v315 = vpack.c.b16 %v295, %v291
      %v316 = vpack.c.b16 %v296, %v292
      %v317 = vpack.c.b16 %v297, %v293
      %v318 = vpack.c.b16 %v302, %v298
      %v319 = vpack.c.b16 %v303, %v299
      %v320 = vpack.c.b16 %v304, %v300
      %v321 = vpack.c.b16 %v305, %v301
      %v402 = vunpack.c.l.b16 %v178
      %v403 = vunpack.c.l.b16 %v179
      %v404 = vunpack.c.l.b16 %v180
      %v405 = vunpack.c.l.b16 %v181
      %v406 = vunpack.c.l.b16 %v182
      %v407 = vunpack.c.l.b16 %v183
      %v408 = vunpack.c.l.b16 %v184
      %v409 = vunpack.c.l.b16 %v185
      %v410 = vunpack.c.l.b16 %v186
      %v411 = vunpack.c.l.b16 %v187
      %v412 = vunpack.c.l.b16 %v188
      %v413 = vunpack.c.l.b16 %v189
      %v414 = vunpack.c.l.b16 %v190
      %v415 = vunpack.c.l.b16 %v191
      %v416 = vunpack.c.l.b16 %v192
      %v417 = vunpack.c.l.b16 %v193
      %v418 = vunpack.c.l.b16 %v194
      %v419 = vunpack.c.l.b16 %v195
      %v420 = vunpack.c.l.b16 %v196
      %v421 = vunpack.c.l.b16 %v197
      %v422 = vunpack.c.l.b16 %v198
      %v423 = vunpack.c.l.b16 %v199
      %v424 = vunpack.c.l.b16 %v200
      %v425 = vunpack.c.l.b16 %v201
      %v426 = vunpack.c.l.b16 %v202
      %v427 = vunpack.c.l.b16 %v203
      %v428 = vunpack.c.l.b16 %v204
      %v429 = vunpack.c.l.b16 %v205
      %v430 = vunpack.c.l.b16 %v206
      %v431 = vunpack.c.l.b16 %v207
      %v432 = vunpack.c.l.b16 %v208
      %v433 = vunpack.c.l.b16 %v209
      %v434 = vunpack.c.l.b16 %v210
      %v435 = vunpack.c.l.b16 %v211
      %v436 = vunpack.c.l.b16 %v212
      %v437 = vunpack.c.l.b16 %v213
      %v438 = vunpack.c.l.b16 %v214
      %v439 = vunpack.c.l.b16 %v215
      %v440 = vunpack.c.l.b16 %v216
      %v441 = vunpack.c.l.b16 %v217
      %v442 = vunpack.c.l.b16 %v218
      %v443 = vunpack.c.l.b16 %v219
      %v444 = vunpack.c.l.b16 %v220
      %v445 = vunpack.c.l.b16 %v221
      %v446 = vunpack.c.l.b16 %v222
      %v447 = vunpack.c.l.b16 %v223
      %v448 = vunpack.c.l.b16 %v224
      %v449 = vunpack.c.l.b16 %v225
      %v450 = vunpack.c.l.b16 %v226
      %v451 = vunpack.c.l.b16 %v227
      %v452 = vunpack.c.l.b16 %v228
      %v453 = vunpack.c.l.b16 %v229
      %v454 = vunpack.c.l.b16 %v230
      %v455 = vunpack.c.l.b16 %v231
      %v456 = vunpack.c.l.b16 %v232
      %v457 = vunpack.c.l.b16 %v233
      %v458 = vunpack.c.l.b16 %v234
      %v459 = vunpack.c.l.b16 %v235
      %v460 = vunpack.c.l.b16 %v236
      %v461 = vunpack.c.l.b16 %v237
      %v462 = vunpack.c.l.b16 %v238
      %v463 = vunpack.c.l.b16 %v239
      %v464 = vunpack.c.l.b16 %v240
      %v465 = vunpack.c.l.b16 %v241
      %v466 = vpack.c.b16 %v403, %v402
      %v467 = vpack.c.b16 %v405, %v404
      %v468 = vpack.c.b16 %v407, %v406
      %v469 = vpack.c.b16 %v409, %v408
      %v470 = vpack.c.b16 %v411, %v410
      %v471 = vpack.c.b16 %v413, %v412
      %v472 = vpack.c.b16 %v415, %v414
      %v473 = vpack.c.b16 %v417, %v416
      %v474 = vpack.c.b16 %v419, %v418
      %v475 = vpack.c.b16 %v421, %v420
      %v476 = vpack.c.b16 %v423, %v422
      %v477 = vpack.c.b16 %v425, %v424
      %v478 = vpack.c.b16 %v427, %v426
      %v479 = vpack.c.b16 %v429, %v428
      %v480 = vpack.c.b16 %v431, %v430
      %v481 = vpack.c.b16 %v433, %v432
      %v482 = vpack.c.b16 %v435, %v434
      %v483 = vpack.c.b16 %v437, %v436
      %v484 = vpack.c.b16 %v439, %v438
      %v485 = vpack.c.b16 %v441, %v440
      %v486 = vpack.c.b16 %v443, %v442
      %v487 = vpack.c.b16 %v445, %v444
      %v488 = vpack.c.b16 %v447, %v446
      %v489 = vpack.c.b16 %v449, %v448
      %v490 = vpack.c.b16 %v451, %v450
      %v491 = vpack.c.b16 %v453, %v452
      %v492 = vpack.c.b16 %v455, %v454
      %v493 = vpack.c.b16 %v457, %v456
      %v494 = vpack.c.b16 %v459, %v458
      %v495 = vpack.c.b16 %v461, %v460
      %v496 = vpack.c.b16 %v463, %v462
      %v497 = vpack.c.b16 %v465, %v464
      %530 = vmatprep.subr.bf16.mxu0 0
      %531 = vmatpush1.bf16.msra.mxu0 %v466
      %532 = vmatprep.subr.bf16.mxu0 0
      %533 = vmatpush1.bf16.msra.mxu0 %v467
      %534 = vmatprep.subr.bf16.mxu0 0
      %535 = vmatpush1.bf16.msra.mxu0 %v468
      %536 = vmatprep.subr.bf16.mxu0 0
      %537 = vmatpush1.bf16.msra.mxu0 %v469
      %538 = vmatprep.subr.bf16.mxu0 0
      %539 = vmatpush1.bf16.msra.mxu0 %v470
      %540 = vmatprep.subr.bf16.mxu0 0
      %541 = vmatpush1.bf16.msra.mxu0 %v471
      %542 = vmatprep.subr.bf16.mxu0 0
      %543 = vmatpush1.bf16.msra.mxu0 %v472
      %544 = vmatprep.subr.bf16.mxu0 0
      %545 = vmatpush1.bf16.msra.mxu0 %v473
      %546 = vmatprep.subr.bf16.mxu0 0
      %547 = vmatpush1.bf16.msra.mxu0 %v474
      %548 = vmatprep.subr.bf16.mxu0 0
      %549 = vmatpush1.bf16.msra.mxu0 %v475
      %550 = vmatprep.subr.bf16.mxu0 0
      %551 = vmatpush1.bf16.msra.mxu0 %v476
      %552 = vmatprep.subr.bf16.mxu0 0
      %553 = vmatpush1.bf16.msra.mxu0 %v477
      %554 = vmatprep.subr.bf16.mxu0 0
      %555 = vmatpush1.bf16.msra.mxu0 %v478
      %556 = vmatprep.subr.bf16.mxu0 0
      %557 = vmatpush1.bf16.msra.mxu0 %v479
      %558 = vmatprep.subr.bf16.mxu0 0
      %559 = vmatpush1.bf16.msra.mxu0 %v480
      %560 = vmatprep.subr.bf16.mxu0 0
      %561 = vmatpush1.bf16.msra.mxu0 %v481
      %562 = vmatprep.mubr.bf16.mxu0 %v307
      %563 = vmatmul.mubr.bf16.gmra.mrb[0].mxu0 %v306
      %v564 = vpop.f32.mrb[0].mxu0
      %v565 = vadd.f32 0.0, %v564
      %v566 = vpop.f32.mrb[0].mxu0
      %v567 = vpop.f32.mrb[0].mxu0
      %v568 = vadd.f32 0.0, %v567
      %v569 = vpop.f32.mrb[0].mxu0
      %570 = vmatprep.mubr.bf16.mxu0 %v311
      %571 = vmatmul.mubr.bf16.gmra.mrb[0].mxu0 %v310
      %v572 = vpop.f32.mrb[0].mxu0
      %v573 = vadd.f32 0.0, %v572
      %v574 = vpop.f32.mrb[0].mxu0
      %v575 = vpop.f32.mrb[0].mxu0
      %v576 = vadd.f32 0.0, %v575
      %v577 = vpop.f32.mrb[0].mxu0
      %578 = vmatprep.mubr.bf16.mxu0 %v315
      %579 = vmatmul.mubr.bf16.gmra.mrb[0].mxu0 %v314
      %v580 = vpop.f32.mrb[0].mxu0
      %v581 = vadd.f32 0.0, %v580
      %v582 = vpop.f32.mrb[0].mxu0
      %v583 = vpop.f32.mrb[0].mxu0
      %v584 = vadd.f32 0.0, %v583
      %v585 = vpop.f32.mrb[0].mxu0
      %586 = vmatprep.mubr.bf16.mxu0 %v319
      %587 = vmatmul.mubr.bf16.gmra.mrb[0].mxu0 %v318
      %v588 = vpop.f32.mrb[0].mxu0
      %v589 = vadd.f32 0.0, %v588
      %v590 = vpop.f32.mrb[0].mxu0
      %v591 = vpop.f32.mrb[0].mxu0
      %v592 = vadd.f32 0.0, %v591
      %v593 = vpop.f32.mrb[0].mxu0
      %594 = vdwg.mxu0
      %595 = vmatprep.subr.bf16.mxu0 0
      %596 = vmatpush1.bf16.msra.mxu0 %v482
      %597 = vmatprep.subr.bf16.mxu0 0
      %598 = vmatpush1.bf16.msra.mxu0 %v483
      %599 = vmatprep.subr.bf16.mxu0 0
      %600 = vmatpush1.bf16.msra.mxu0 %v484
      %601 = vmatprep.subr.bf16.mxu0 0
      %602 = vmatpush1.bf16.msra.mxu0 %v485
      %603 = vmatprep.subr.bf16.mxu0 0
      %604 = vmatpush1.bf16.msra.mxu0 %v486
      %605 = vmatprep.subr.bf16.mxu0 0
      %606 = vmatpush1.bf16.msra.mxu0 %v487
      %607 = vmatprep.subr.bf16.mxu0 0
      %608 = vmatpush1.bf16.msra.mxu0 %v488
      %609 = vmatprep.subr.bf16.mxu0 0
      %610 = vmatpush1.bf16.msra.mxu0 %v489
      %611 = vmatprep.subr.bf16.mxu0 0
      %612 = vmatpush1.bf16.msra.mxu0 %v490
      %613 = vmatprep.subr.bf16.mxu0 0
      %614 = vmatpush1.bf16.msra.mxu0 %v491
      %615 = vmatprep.subr.bf16.mxu0 0
      %616 = vmatpush1.bf16.msra.mxu0 %v492
      %617 = vmatprep.subr.bf16.mxu0 0
      %618 = vmatpush1.bf16.msra.mxu0 %v493
      %619 = vmatprep.subr.bf16.mxu0 0
      %620 = vmatpush1.bf16.msra.mxu0 %v494
      %621 = vmatprep.subr.bf16.mxu0 0
      %622 = vmatpush1.bf16.msra.mxu0 %v495
      %623 = vmatprep.subr.bf16.mxu0 0
      %624 = vmatpush1.bf16.msra.mxu0 %v496
      %625 = vmatprep.subr.bf16.mxu0 0
      %626 = vmatpush1.bf16.msra.mxu0 %v497
      %627 = vmatprep.mubr.bf16.mxu0 %v309
      %628 = vmatmul.mubr.bf16.gmra.mrb[0].mxu0 %v308
      %v629 = vpop.f32.mrb[0].mxu0
      %v630 = vadd.f32 %v565, %v629
      %v631 = vpop.f32.mrb[0].mxu0
      %v632 = vpop.f32.mrb[0].mxu0
      %v633 = vadd.f32 %v568, %v632
      %v634 = vpop.f32.mrb[0].mxu0
      %635 = vmatprep.mubr.bf16.mxu0 %v313
      %636 = vmatmul.mubr.bf16.gmra.mrb[0].mxu0 %v312
      %v637 = vpop.f32.mrb[0].mxu0
      %v638 = vadd.f32 %v573, %v637
      %v639 = vpop.f32.mrb[0].mxu0
      %v640 = vpop.f32.mrb[0].mxu0
      %v641 = vadd.f32 %v576, %v640
      %v642 = vpop.f32.mrb[0].mxu0
      %643 = vmatprep.mubr.bf16.mxu0 %v317
      %644 = vmatmul.mubr.bf16.gmra.mrb[0].mxu0 %v316
      %v645 = vpop.f32.mrb[0].mxu0
      %v646 = vadd.f32 %v581, %v645
      %v647 = vpop.f32.mrb[0].mxu0
      %v648 = vpop.f32.mrb[0].mxu0
      %v649 = vadd.f32 %v584, %v648
      %v650 = vpop.f32.mrb[0].mxu0
      %651 = vmatprep.mubr.bf16.mxu0 %v321
      %652 = vmatmul.mubr.bf16.gmra.mrb[0].mxu0 %v320
      %v653 = vpop.f32.mrb[0].mxu0
      %v654 = vadd.f32 %v589, %v653
      %v655 = vpop.f32.mrb[0].mxu0
      %v656 = vpop.f32.mrb[0].mxu0
      %v657 = vadd.f32 %v592, %v656
      %v658 = vpop.f32.mrb[0].mxu0
      %659 = vdwg.mxu0
      %v660 = vld [vmem:[%s169 + $0x80] sm:$0xff]
      %v661 = vld [vmem:[%s169 + $0x88] sm:$0xff]
      %v662 = vld [vmem:[%s169 + $0x90] sm:$0xff]
      %v663 = vld [vmem:[%s169 + $0x98] sm:$0xff]
      %v664 = vld [vmem:[%s169 + $0xa0] sm:$0xff]
      %v665 = vld [vmem:[%s169 + $0xa8] sm:$0xff]
      %v666 = vld [vmem:[%s169 + $0xb0] sm:$0xff]
      %v667 = vld [vmem:[%s169 + $0xb8] sm:$0xff]
      %v668 = vld [vmem:[%s169 + $0xc0] sm:$0xff]
      %v669 = vld [vmem:[%s169 + $0xc8] sm:$0xff]
      %v670 = vld [vmem:[%s169 + $0xd0] sm:$0xff]
      %v671 = vld [vmem:[%s169 + $0xd8] sm:$0xff]
      %v672 = vld [vmem:[%s169 + $0xe0] sm:$0xff]
      %v673 = vld [vmem:[%s169 + $0xe8] sm:$0xff]
      %v674 = vld [vmem:[%s169 + $0xf0] sm:$0xff]
      %v675 = vld [vmem:[%s169 + $0xf8] sm:$0xff]
      %v692 = vunpack.c.l.b16 %v660
      %v693 = vunpack.c.h.b16 %v660
      %v694 = vunpack.c.l.b16 %v661
      %v695 = vunpack.c.h.b16 %v661
      %v696 = vunpack.c.l.b16 %v662
      %v697 = vunpack.c.h.b16 %v662
      %v698 = vunpack.c.l.b16 %v663
      %v699 = vunpack.c.h.b16 %v663
      %v700 = vunpack.c.l.b16 %v664
      %v701 = vunpack.c.h.b16 %v664
      %v702 = vunpack.c.l.b16 %v665
      %v703 = vunpack.c.h.b16 %v665
      %v704 = vunpack.c.l.b16 %v666
      %v705 = vunpack.c.h.b16 %v666
      %v706 = vunpack.c.l.b16 %v667
      %v707 = vunpack.c.h.b16 %v667
      %v708 = vunpack.c.l.b16 %v668
      %v709 = vunpack.c.h.b16 %v668
      %v710 = vunpack.c.l.b16 %v669
      %v711 = vunpack.c.h.b16 %v669
      %v712 = vunpack.c.l.b16 %v670
      %v713 = vunpack.c.h.b16 %v670
      %v714 = vunpack.c.l.b16 %v671
      %v715 = vunpack.c.h.b16 %v671
      %v716 = vunpack.c.l.b16 %v672
      %v717 = vunpack.c.h.b16 %v672
      %v718 = vunpack.c.l.b16 %v673
      %v719 = vunpack.c.h.b16 %v673
      %v720 = vunpack.c.l.b16 %v674
      %v721 = vunpack.c.h.b16 %v674
      %v722 = vunpack.c.l.b16 %v675
      %v723 = vunpack.c.h.b16 %v675
      %v724 = vpack.c.b16 %v696, %v692
      %v725 = vpack.c.b16 %v697, %v693
      %v726 = vpack.c.b16 %v698, %v694
      %v727 = vpack.c.b16 %v699, %v695
      %v728 = vpack.c.b16 %v704, %v700
      %v729 = vpack.c.b16 %v705, %v701
      %v730 = vpack.c.b16 %v706, %v702
      %v731 = vpack.c.b16 %v707, %v703
      %v732 = vpack.c.b16 %v712, %v708
      %v733 = vpack.c.b16 %v713, %v709
      %v734 = vpack.c.b16 %v714, %v710
      %v735 = vpack.c.b16 %v715, %v711
      %v736 = vpack.c.b16 %v720, %v716
      %v737 = vpack.c.b16 %v721, %v717
      %v738 = vpack.c.b16 %v722, %v718
      %v739 = vpack.c.b16 %v723, %v719
      %756 = vmatprep.subr.bf16.mxu0 0
      %757 = vmatpush1.bf16.msra.mxu0 %v466
      %758 = vmatprep.subr.bf16.mxu0 0
      %759 = vmatpush1.bf16.msra.mxu0 %v467
      %760 = vmatprep.subr.bf16.mxu0 0
      %761 = vmatpush1.bf16.msra.mxu0 %v468
      %762 = vmatprep.subr.bf16.mxu0 0
      %763 = vmatpush1.bf16.msra.mxu0 %v469
      %764 = vmatprep.subr.bf16.mxu0 0
      %765 = vmatpush1.bf16.msra.mxu0 %v470
      %766 = vmatprep.subr.bf16.mxu0 0
      %767 = vmatpush1.bf16.msra.mxu0 %v471
      %768 = vmatprep.subr.bf16.mxu0 0
      %769 = vmatpush1.bf16.msra.mxu0 %v472
      %770 = vmatprep.subr.bf16.mxu0 0
      %771 = vmatpush1.bf16.msra.mxu0 %v473
      %772 = vmatprep.subr.bf16.mxu0 0
      %773 = vmatpush1.bf16.msra.mxu0 %v474
      %774 = vmatprep.subr.bf16.mxu0 0
      %775 = vmatpush1.bf16.msra.mxu0 %v475
      %776 = vmatprep.subr.bf16.mxu0 0
      %777 = vmatpush1.bf16.msra.mxu0 %v476
      %778 = vmatprep.subr.bf16.mxu0 0
      %779 = vmatpush1.bf16.msra.mxu0 %v477
      %780 = vmatprep.subr.bf16.mxu0 0
      %781 = vmatpush1.bf16.msra.mxu0 %v478
      %782 = vmatprep.subr.bf16.mxu0 0
      %783 = vmatpush1.bf16.msra.mxu0 %v479
      %784 = vmatprep.subr.bf16.mxu0 0
      %785 = vmatpush1.bf16.msra.mxu0 %v480
      %786 = vmatprep.subr.bf16.mxu0 0
      %787 = vmatpush1.bf16.msra.mxu0 %v481
      %788 = vmatprep.mubr.bf16.mxu0 %v725
      %789 = vmatmul.mubr.bf16.gmra.mrb[0].mxu0 %v724
      %v790 = vpop.f32.mrb[0].mxu0
      %v791 = vadd.f32 0.0, %v790
      %v792 = vpop.f32.mrb[0].mxu0
      %v793 = vpop.f32.mrb[0].mxu0
      %v794 = vadd.f32 0.0, %v793
      %v795 = vpop.f32.mrb[0].mxu0
      %796 = vmatprep.mubr.bf16.mxu0 %v729
      %797 = vmatmul.mubr.bf16.gmra.mrb[0].mxu0 %v728
      %v798 = vpop.f32.mrb[0].mxu0
      %v799 = vadd.f32 0.0, %v798
      %v800 = vpop.f32.mrb[0].mxu0
      %v801 = vpop.f32.mrb[0].mxu0
      %v802 = vadd.f32 0.0, %v801
      %v803 = vpop.f32.mrb[0].mxu0
      %804 = vmatprep.mubr.bf16.mxu0 %v733
      %805 = vmatmul.mubr.bf16.gmra.mrb[0].mxu0 %v732
      %v806 = vpop.f32.mrb[0].mxu0
      %v807 = vadd.f32 0.0, %v806
      %v808 = vpop.f32.mrb[0].mxu0
      %v809 = vpop.f32.mrb[0].mxu0
      %v810 = vadd.f32 0.0, %v809
      %v811 = vpop.f32.mrb[0].mxu0
      %812 = vmatprep.mubr.bf16.mxu0 %v737
      %813 = vmatmul.mubr.bf16.gmra.mrb[0].mxu0 %v736
      %v814 = vpop.f32.mrb[0].mxu0
      %v815 = vadd.f32 0.0, %v814
      %v816 = vpop.f32.mrb[0].mxu0
      %v817 = vpop.f32.mrb[0].mxu0
      %v818 = vadd.f32 0.0, %v817
      %v819 = vpop.f32.mrb[0].mxu0
      %820 = vdwg.mxu0
      %821 = vmatprep.subr.bf16.mxu0 0
      %822 = vmatpush1.bf16.msra.mxu0 %v482
      %823 = vmatprep.subr.bf16.mxu0 0
      %824 = vmatpush1.bf16.msra.mxu0 %v483
      %825 = vmatprep.subr.bf16.mxu0 0
      %826 = vmatpush1.bf16.msra.mxu0 %v484
      %827 = vmatprep.subr.bf16.mxu0 0
      %828 = vmatpush1.bf16.msra.mxu0 %v485
      %829 = vmatprep.subr.bf16.mxu0 0
      %830 = vmatpush1.bf16.msra.mxu0 %v486
      %831 = vmatprep.subr.bf16.mxu0 0
      %832 = vmatpush1.bf16.msra.mxu0 %v487
      %833 = vmatprep.subr.bf16.mxu0 0
      %834 = vmatpush1.bf16.msra.mxu0 %v488
      %835 = vmatprep.subr.bf16.mxu0 0
      %836 = vmatpush1.bf16.msra.mxu0 %v489
      %837 = vmatprep.subr.bf16.mxu0 0
      %838 = vmatpush1.bf16.msra.mxu0 %v490
      %839 = vmatprep.subr.bf16.mxu0 0
      %840 = vmatpush1.bf16.msra.mxu0 %v491
      %841 = vmatprep.subr.bf16.mxu0 0
      %842 = vmatpush1.bf16.msra.mxu0 %v492
      %843 = vmatprep.subr.bf16.mxu0 0
      %844 = vmatpush1.bf16.msra.mxu0 %v493
      %845 = vmatprep.subr.bf16.mxu0 0
      %846 = vmatpush1.bf16.msra.mxu0 %v494
      %847 = vmatprep.subr.bf16.mxu0 0
      %848 = vmatpush1.bf16.msra.mxu0 %v495
      %849 = vmatprep.subr.bf16.mxu0 0
      %850 = vmatpush1.bf16.msra.mxu0 %v496
      %851 = vmatprep.subr.bf16.mxu0 0
      %852 = vmatpush1.bf16.msra.mxu0 %v497
      %853 = vmatprep.mubr.bf16.mxu0 %v727
      %854 = vmatmul.mubr.bf16.gmra.mrb[0].mxu0 %v726
      %v855 = vpop.f32.mrb[0].mxu0
      %v856 = vadd.f32 %v791, %v855
      %v857 = vpop.f32.mrb[0].mxu0
      %v858 = vpop.f32.mrb[0].mxu0
      %v859 = vadd.f32 %v794, %v858
      %v860 = vpop.f32.mrb[0].mxu0
      %861 = vmatprep.mubr.bf16.mxu0 %v731
      %862 = vmatmul.mubr.bf16.gmra.mrb[0].mxu0 %v730
      %v863 = vpop.f32.mrb[0].mxu0
      %v864 = vadd.f32 %v799, %v863
      %v865 = vpop.f32.mrb[0].mxu0
      %v866 = vpop.f32.mrb[0].mxu0
      %v867 = vadd.f32 %v802, %v866
      %v868 = vpop.f32.mrb[0].mxu0
      %869 = vmatprep.mubr.bf16.mxu0 %v735
      %870 = vmatmul.mubr.bf16.gmra.mrb[0].mxu0 %v734
      %v871 = vpop.f32.mrb[0].mxu0
      %v872 = vadd.f32 %v807, %v871
      %v873 = vpop.f32.mrb[0].mxu0
      %v874 = vpop.f32.mrb[0].mxu0
      %v875 = vadd.f32 %v810, %v874
      %v876 = vpop.f32.mrb[0].mxu0
      %877 = vmatprep.mubr.bf16.mxu0 %v739
      %878 = vmatmul.mubr.bf16.gmra.mrb[0].mxu0 %v738
      %v879 = vpop.f32.mrb[0].mxu0
      %v880 = vadd.f32 %v815, %v879
      %v881 = vpop.f32.mrb[0].mxu0
      %v882 = vpop.f32.mrb[0].mxu0
      %v883 = vadd.f32 %v818, %v882
      %v884 = vpop.f32.mrb[0].mxu0
      %885 = vdwg.mxu0
      %v886 = vmax.f32 %v630, %v856
      %v887 = vmax.f32 %v633, %v859
      %v888 = vmax.f32 %v638, %v864
      %v889 = vmax.f32 %v641, %v867
      %v890 = vmax.f32 %v646, %v872
      %v891 = vmax.f32 %v649, %v875
      %v892 = vmax.f32 %v654, %v880
      %v893 = vmax.f32 %v657, %v883
      %v894 = vld [vmem:[%s169 + $0x100] sm:$0xff]
      %v895 = vld [vmem:[%s169 + $0x108] sm:$0xff]
      %v896 = vld [vmem:[%s169 + $0x110] sm:$0xff]
      %v897 = vld [vmem:[%s169 + $0x118] sm:$0xff]
      %v898 = vld [vmem:[%s169 + $0x120] sm:$0xff]
      %v899 = vld [vmem:[%s169 + $0x128] sm:$0xff]
      %v900 = vld [vmem:[%s169 + $0x130] sm:$0xff]
      %v901 = vld [vmem:[%s169 + $0x138] sm:$0xff]
      %v902 = vld [vmem:[%s169 + $0x140] sm:$0xff]
      %v903 = vld [vmem:[%s169 + $0x148] sm:$0xff]
      %v904 = vld [vmem:[%s169 + $0x150] sm:$0xff]
      %v905 = vld [vmem:[%s169 + $0x158] sm:$0xff]
      %v906 = vld [vmem:[%s169 + $0x160] sm:$0xff]
      %v907 = vld [vmem:[%s169 + $0x168] sm:$0xff]
      %v908 = vld [vmem:[%s169 + $0x170] sm:$0xff]
      %v909 = vld [vmem:[%s169 + $0x178] sm:$0xff]
      %v926 = vunpack.c.l.b16 %v894
      %v927 = vunpack.c.h.b16 %v894
      %v928 = vunpack.c.l.b16 %v895
      %v929 = vunpack.c.h.b16 %v895
      %v930 = vunpack.c.l.b16 %v896
      %v931 = vunpack.c.h.b16 %v896
      %v932 = vunpack.c.l.b16 %v897
      %v933 = vunpack.c.h.b16 %v897
      %v934 = vunpack.c.l.b16 %v898
      %v935 = vunpack.c.h.b16 %v898
      %v936 = vunpack.c.l.b16 %v899
      %v937 = vunpack.c.h.b16 %v899
      %v938 = vunpack.c.l.b16 %v900
      %v939 = vunpack.c.h.b16 %v900
      %v940 = vunpack.c.l.b16 %v901
      %v941 = vunpack.c.h.b16 %v901
      %v942 = vunpack.c.l.b16 %v902
      %v943 = vunpack.c.h.b16 %v902
      %v944 = vunpack.c.l.b16 %v903
      %v945 = vunpack.c.h.b16 %v903
      %v946 = vunpack.c.l.b16 %v904
      %v947 = vunpack.c.h.b16 %v904
      %v948 = vunpack.c.l.b16 %v905
      %v949 = vunpack.c.h.b16 %v905
      %v950 = vunpack.c.l.b16 %v906
      %v951 = vunpack.c.h.b16 %v906
      %v952 = vunpack.c.l.b16 %v907
      %v953 = vunpack.c.h.b16 %v907
      %v954 = vunpack.c.l.b16 %v908
      %v955 = vunpack.c.h.b16 %v908
      %v956 = vunpack.c.l.b16 %v909
      %v957 = vunpack.c.h.b16 %v909
      %v958 = vpack.c.b16 %v930, %v926
      %v959 = vpack.c.b16 %v931, %v927
      %v960 = vpack.c.b16 %v932, %v928
      %v961 = vpack.c.b16 %v933, %v929
      %v962 = vpack.c.b16 %v938, %v934
      %v963 = vpack.c.b16 %v939, %v935
      %v964 = vpack.c.b16 %v940, %v936
      %v965 = vpack.c.b16 %v941, %v937
      %v966 = vpack.c.b16 %v946, %v942
      %v967 = vpack.c.b16 %v947, %v943
      %v968 = vpack.c.b16 %v948, %v944
      %v969 = vpack.c.b16 %v949, %v945
      %v970 = vpack.c.b16 %v954, %v950
      %v971 = vpack.c.b16 %v955, %v951
      %v972 = vpack.c.b16 %v956, %v952
      %v973 = vpack.c.b16 %v957, %v953
      %990 = vmatprep.subr.bf16.mxu0 0
      %991 = vmatpush1.bf16.msra.mxu0 %v466
      %992 = vmatprep.subr.bf16.mxu0 0
      %993 = vmatpush1.bf16.msra.mxu0 %v467
      %994 = vmatprep.subr.bf16.mxu0 0
      %995 = vmatpush1.bf16.msra.mxu0 %v468
      %996 = vmatprep.subr.bf16.mxu0 0
      %997 = vmatpush1.bf16.msra.mxu0 %v469
      %998 = vmatprep.subr.bf16.mxu0 0
      %999 = vmatpush1.bf16.msra.mxu0 %v470
      %1000 = vmatprep.subr.bf16.mxu0 0
      %1001 = vmatpush1.bf16.msra.mxu0 %v471
      %1002 = vmatprep.subr.bf16.mxu0 0
      %1003 = vmatpush1.bf16.msra.mxu0 %v472
      %1004 = vmatprep.subr.bf16.mxu0 0
      %1005 = vmatpush1.bf16.msra.mxu0 %v473
      %1006 = vmatprep.subr.bf16.mxu0 0
      %1007 = vmatpush1.bf16.msra.mxu0 %v474
      %1008 = vmatprep.subr.bf16.mxu0 0
      %1009 = vmatpush1.bf16.msra.mxu0 %v475
      %1010 = vmatprep.subr.bf16.mxu0 0
      %1011 = vmatpush1.bf16.msra.mxu0 %v476
      %1012 = vmatprep.subr.bf16.mxu0 0
      %1013 = vmatpush1.bf16.msra.mxu0 %v477
      %1014 = vmatprep.subr.bf16.mxu0 0
      %1015 = vmatpush1.bf16.msra.mxu0 %v478
      %1016 = vmatprep.subr.bf16.mxu0 0
      %1017 = vmatpush1.bf16.msra.mxu0 %v479
      %1018 = vmatprep.subr.bf16.mxu0 0
      %1019 = vmatpush1.bf16.msra.mxu0 %v480
      %1020 = vmatprep.subr.bf16.mxu0 0
      %1021 = vmatpush1.bf16.msra.mxu0 %v481
      %1022 = vmatprep.mubr.bf16.mxu0 %v959
      %1023 = vmatmul.mubr.bf16.gmra.mrb[0].mxu0 %v958
      %v1024 = vpop.f32.mrb[0].mxu0
      %v1025 = vadd.f32 0.0, %v1024
      %v1026 = vpop.f32.mrb[0].mxu0
      %v1027 = vpop.f32.mrb[0].mxu0
      %v1028 = vadd.f32 0.0, %v1027
      %v1029 = vpop.f32.mrb[0].mxu0
      %1030 = vmatprep.mubr.bf16.mxu0 %v963
      %1031 = vmatmul.mubr.bf16.gmra.mrb[0].mxu0 %v962
      %v1032 = vpop.f32.mrb[0].mxu0
      %v1033 = vadd.f32 0.0, %v1032
      %v1034 = vpop.f32.mrb[0].mxu0
      %v1035 = vpop.f32.mrb[0].mxu0
      %v1036 = vadd.f32 0.0, %v1035
      %v1037 = vpop.f32.mrb[0].mxu0
      %1038 = vmatprep.mubr.bf16.mxu0 %v967
      %1039 = vmatmul.mubr.bf16.gmra.mrb[0].mxu0 %v966
      %v1040 = vpop.f32.mrb[0].mxu0
      %v1041 = vadd.f32 0.0, %v1040
      %v1042 = vpop.f32.mrb[0].mxu0
      %v1043 = vpop.f32.mrb[0].mxu0
      %v1044 = vadd.f32 0.0, %v1043
      %v1045 = vpop.f32.mrb[0].mxu0
      %1046 = vmatprep.mubr.bf16.mxu0 %v971
      %1047 = vmatmul.mubr.bf16.gmra.mrb[0].mxu0 %v970
      %v1048 = vpop.f32.mrb[0].mxu0
      %v1049 = vadd.f32 0.0, %v1048
      %v1050 = vpop.f32.mrb[0].mxu0
      %v1051 = vpop.f32.mrb[0].mxu0
      %v1052 = vadd.f32 0.0, %v1051
      %v1053 = vpop.f32.mrb[0].mxu0
      %1054 = vdwg.mxu0
      %1055 = vmatprep.subr.bf16.mxu0 0
      %1056 = vmatpush1.bf16.msra.mxu0 %v482
      %1057 = vmatprep.subr.bf16.mxu0 0
      %1058 = vmatpush1.bf16.msra.mxu0 %v483
      %1059 = vmatprep.subr.bf16.mxu0 0
      %1060 = vmatpush1.bf16.msra.mxu0 %v484
      %1061 = vmatprep.subr.bf16.mxu0 0
      %1062 = vmatpush1.bf16.msra.mxu0 %v485
      %1063 = vmatprep.subr.bf16.mxu0 0
      %1064 = vmatpush1.bf16.msra.mxu0 %v486
      %1065 = vmatprep.subr.bf16.mxu0 0
      %1066 = vmatpush1.bf16.msra.mxu0 %v487
      %1067 = vmatprep.subr.bf16.mxu0 0
      %1068 = vmatpush1.bf16.msra.mxu0 %v488
      %1069 = vmatprep.subr.bf16.mxu0 0
      %1070 = vmatpush1.bf16.msra.mxu0 %v489
      %1071 = vmatprep.subr.bf16.mxu0 0
      %1072 = vmatpush1.bf16.msra.mxu0 %v490
      %1073 = vmatprep.subr.bf16.mxu0 0
      %1074 = vmatpush1.bf16.msra.mxu0 %v491
      %1075 = vmatprep.subr.bf16.mxu0 0
      %1076 = vmatpush1.bf16.msra.mxu0 %v492
      %1077 = vmatprep.subr.bf16.mxu0 0
      %1078 = vmatpush1.bf16.msra.mxu0 %v493
      %1079 = vmatprep.subr.bf16.mxu0 0
      %1080 = vmatpush1.bf16.msra.mxu0 %v494
      %1081 = vmatprep.subr.bf16.mxu0 0
      %1082 = vmatpush1.bf16.msra.mxu0 %v495
      %1083 = vmatprep.subr.bf16.mxu0 0
      %1084 = vmatpush1.bf16.msra.mxu0 %v496
      %1085 = vmatprep.subr.bf16.mxu0 0
      %1086 = vmatpush1.bf16.msra.mxu0 %v497
      %1087 = vmatprep.mubr.bf16.mxu0 %v961
      %1088 = vmatmul.mubr.bf16.gmra.mrb[0].mxu0 %v960
      %v1089 = vpop.f32.mrb[0].mxu0
      %v1090 = vadd.f32 %v1025, %v1089
      %v1091 = vpop.f32.mrb[0].mxu0
      %v1092 = vpop.f32.mrb[0].mxu0
      %v1093 = vadd.f32 %v1028, %v1092
      %v1094 = vpop.f32.mrb[0].mxu0
      %1095 = vmatprep.mubr.bf16.mxu0 %v965
      %1096 = vmatmul.mubr.bf16.gmra.mrb[0].mxu0 %v964
      %v1097 = vpop.f32.mrb[0].mxu0
      %v1098 = vadd.f32 %v1033, %v1097
      %v1099 = vpop.f32.mrb[0].mxu0
      %v1100 = vpop.f32.mrb[0].mxu0
      %v1101 = vadd.f32 %v1036, %v1100
      %v1102 = vpop.f32.mrb[0].mxu0
      %1103 = vmatprep.mubr.bf16.mxu0 %v969
      %1104 = vmatmul.mubr.bf16.gmra.mrb[0].mxu0 %v968
      %v1105 = vpop.f32.mrb[0].mxu0
      %v1106 = vadd.f32 %v1041, %v1105
      %v1107 = vpop.f32.mrb[0].mxu0
      %v1108 = vpop.f32.mrb[0].mxu0
      %v1109 = vadd.f32 %v1044, %v1108
      %v1110 = vpop.f32.mrb[0].mxu0
      %1111 = vmatprep.mubr.bf16.mxu0 %v973
      %1112 = vmatmul.mubr.bf16.gmra.mrb[0].mxu0 %v972
      %v1113 = vpop.f32.mrb[0].mxu0
      %v1114 = vadd.f32 %v1049, %v1113
      %v1115 = vpop.f32.mrb[0].mxu0
      %v1116 = vpop.f32.mrb[0].mxu0
      %v1117 = vadd.f32 %v1052, %v1116
      %v1118 = vpop.f32.mrb[0].mxu0
      %1119 = vdwg.mxu0
      %v1120 = vmax.f32 %v886, %v1090
      %v1121 = vmax.f32 %v887, %v1093
      %v1122 = vmax.f32 %v888, %v1098
      %v1123 = vmax.f32 %v889, %v1101
      %v1124 = vmax.f32 %v890, %v1106
      %v1125 = vmax.f32 %v891, %v1109
      %v1126 = vmax.f32 %v892, %v1114
      %v1127 = vmax.f32 %v893, %v1117
      %v1128 = vld [vmem:[%s169 + $0x180] sm:$0xff]
      %v1129 = vld [vmem:[%s169 + $0x188] sm:$0xff]
      %v1130 = vld [vmem:[%s169 + $0x190] sm:$0xff]
      %v1131 = vld [vmem:[%s169 + $0x198] sm:$0xff]
      %v1132 = vld [vmem:[%s169 + $0x1a0] sm:$0xff]
      %v1133 = vld [vmem:[%s169 + $0x1a8] sm:$0xff]
      %v1134 = vld [vmem:[%s169 + $0x1b0] sm:$0xff]
      %v1135 = vld [vmem:[%s169 + $0x1b8] sm:$0xff]
      %v1136 = vld [vmem:[%s169 + $0x1c0] sm:$0xff]
      %v1137 = vld [vmem:[%s169 + $0x1c8] sm:$0xff]
      %v1138 = vld [vmem:[%s169 + $0x1d0] sm:$0xff]
      %v1139 = vld [vmem:[%s169 + $0x1d8] sm:$0xff]
      %v1140 = vld [vmem:[%s169 + $0x1e0] sm:$0xff]
      %v1141 = vld [vmem:[%s169 + $0x1e8] sm:$0xff]
      %v1142 = vld [vmem:[%s169 + $0x1f0] sm:$0xff]
      %v1143 = vld [vmem:[%s169 + $0x1f8] sm:$0xff]
      %v1160 = vunpack.c.l.b16 %v1128
      %v1161 = vunpack.c.h.b16 %v1128
      %v1162 = vunpack.c.l.b16 %v1129
      %v1163 = vunpack.c.h.b16 %v1129
      %v1164 = vunpack.c.l.b16 %v1130
      %v1165 = vunpack.c.h.b16 %v1130
      %v1166 = vunpack.c.l.b16 %v1131
      %v1167 = vunpack.c.h.b16 %v1131
      %v1168 = vunpack.c.l.b16 %v1132
      %v1169 = vunpack.c.h.b16 %v1132
      %v1170 = vunpack.c.l.b16 %v1133
      %v1171 = vunpack.c.h.b16 %v1133
      %v1172 = vunpack.c.l.b16 %v1134
      %v1173 = vunpack.c.h.b16 %v1134
      %v1174 = vunpack.c.l.b16 %v1135
      %v1175 = vunpack.c.h.b16 %v1135
      %v1176 = vunpack.c.l.b16 %v1136
      %v1177 = vunpack.c.h.b16 %v1136
      %v1178 = vunpack.c.l.b16 %v1137
      %v1179 = vunpack.c.h.b16 %v1137
      %v1180 = vunpack.c.l.b16 %v1138
      %v1181 = vunpack.c.h.b16 %v1138
      %v1182 = vunpack.c.l.b16 %v1139
      %v1183 = vunpack.c.h.b16 %v1139
      %v1184 = vunpack.c.l.b16 %v1140
      %v1185 = vunpack.c.h.b16 %v1140
      %v1186 = vunpack.c.l.b16 %v1141
      %v1187 = vunpack.c.h.b16 %v1141
      %v1188 = vunpack.c.l.b16 %v1142
      %v1189 = vunpack.c.h.b16 %v1142
      %v1190 = vunpack.c.l.b16 %v1143
      %v1191 = vunpack.c.h.b16 %v1143
      %v1192 = vpack.c.b16 %v1164, %v1160
      %v1193 = vpack.c.b16 %v1165, %v1161
      %v1194 = vpack.c.b16 %v1166, %v1162
      %v1195 = vpack.c.b16 %v1167, %v1163
      %v1196 = vpack.c.b16 %v1172, %v1168
      %v1197 = vpack.c.b16 %v1173, %v1169
      %v1198 = vpack.c.b16 %v1174, %v1170
      %v1199 = vpack.c.b16 %v1175, %v1171
      %v1200 = vpack.c.b16 %v1180, %v1176
      %v1201 = vpack.c.b16 %v1181, %v1177
      %v1202 = vpack.c.b16 %v1182, %v1178
      %v1203 = vpack.c.b16 %v1183, %v1179
      %v1204 = vpack.c.b16 %v1188, %v1184
      %v1205 = vpack.c.b16 %v1189, %v1185
      %v1206 = vpack.c.b16 %v1190, %v1186
      %v1207 = vpack.c.b16 %v1191, %v1187
      %1224 = vmatprep.subr.bf16.mxu0 0
      %1225 = vmatpush1.bf16.msra.mxu0 %v466
      %1226 = vmatprep.subr.bf16.mxu0 0
      %1227 = vmatpush1.bf16.msra.mxu0 %v467
      %1228 = vmatprep.subr.bf16.mxu0 0
      %1229 = vmatpush1.bf16.msra.mxu0 %v468
      %1230 = vmatprep.subr.bf16.mxu0 0
      %1231 = vmatpush1.bf16.msra.mxu0 %v469
      %1232 = vmatprep.subr.bf16.mxu0 0
      %1233 = vmatpush1.bf16.msra.mxu0 %v470
      %1234 = vmatprep.subr.bf16.mxu0 0
      %1235 = vmatpush1.bf16.msra.mxu0 %v471
      %1236 = vmatprep.subr.bf16.mxu0 0
      %1237 = vmatpush1.bf16.msra.mxu0 %v472
      %1238 = vmatprep.subr.bf16.mxu0 0
      %1239 = vmatpush1.bf16.msra.mxu0 %v473
      %1240 = vmatprep.subr.bf16.mxu0 0
      %1241 = vmatpush1.bf16.msra.mxu0 %v474
      %1242 = vmatprep.subr.bf16.mxu0 0
      %1243 = vmatpush1.bf16.msra.mxu0 %v475
      %1244 = vmatprep.subr.bf16.mxu0 0
      %1245 = vmatpush1.bf16.msra.mxu0 %v476
      %1246 = vmatprep.subr.bf16.mxu0 0
      %1247 = vmatpush1.bf16.msra.mxu0 %v477
      %1248 = vmatprep.subr.bf16.mxu0 0
      %1249 = vmatpush1.bf16.msra.mxu0 %v478
      %1250 = vmatprep.subr.bf16.mxu0 0
      %1251 = vmatpush1.bf16.msra.mxu0 %v479
      %1252 = vmatprep.subr.bf16.mxu0 0
      %1253 = vmatpush1.bf16.msra.mxu0 %v480
      %1254 = vmatprep.subr.bf16.mxu0 0
      %1255 = vmatpush1.bf16.msra.mxu0 %v481
      %1256 = vmatprep.mubr.bf16.mxu0 %v1193
      %1257 = vmatmul.mubr.bf16.gmra.mrb[0].mxu0 %v1192
      %v1258 = vpop.f32.mrb[0].mxu0
      %v1259 = vadd.f32 0.0, %v1258
      %v1260 = vpop.f32.mrb[0].mxu0
      %v1261 = vpop.f32.mrb[0].mxu0
      %v1262 = vadd.f32 0.0, %v1261
      %v1263 = vpop.f32.mrb[0].mxu0
      %1264 = vmatprep.mubr.bf16.mxu0 %v1197
      %1265 = vmatmul.mubr.bf16.gmra.mrb[0].mxu0 %v1196
      %v1266 = vpop.f32.mrb[0].mxu0
      %v1267 = vadd.f32 0.0, %v1266
      %v1268 = vpop.f32.mrb[0].mxu0
      %v1269 = vpop.f32.mrb[0].mxu0
      %v1270 = vadd.f32 0.0, %v1269
      %v1271 = vpop.f32.mrb[0].mxu0
      %1272 = vmatprep.mubr.bf16.mxu0 %v1201
      %1273 = vmatmul.mubr.bf16.gmra.mrb[0].mxu0 %v1200
      %v1274 = vpop.f32.mrb[0].mxu0
      %v1275 = vadd.f32 0.0, %v1274
      %v1276 = vpop.f32.mrb[0].mxu0
      %v1277 = vpop.f32.mrb[0].mxu0
      %v1278 = vadd.f32 0.0, %v1277
      %v1279 = vpop.f32.mrb[0].mxu0
      %1280 = vmatprep.mubr.bf16.mxu0 %v1205
      %1281 = vmatmul.mubr.bf16.gmra.mrb[0].mxu0 %v1204
      %v1282 = vpop.f32.mrb[0].mxu0
      %v1283 = vadd.f32 0.0, %v1282
      %v1284 = vpop.f32.mrb[0].mxu0
      %v1285 = vpop.f32.mrb[0].mxu0
      %v1286 = vadd.f32 0.0, %v1285
      %v1287 = vpop.f32.mrb[0].mxu0
      %1288 = vdwg.mxu0
      %1289 = vmatprep.subr.bf16.mxu0 0
      %1290 = vmatpush1.bf16.msra.mxu0 %v482
      %1291 = vmatprep.subr.bf16.mxu0 0
      %1292 = vmatpush1.bf16.msra.mxu0 %v483
      %1293 = vmatprep.subr.bf16.mxu0 0
      %1294 = vmatpush1.bf16.msra.mxu0 %v484
      %1295 = vmatprep.subr.bf16.mxu0 0
      %1296 = vmatpush1.bf16.msra.mxu0 %v485
      %1297 = vmatprep.subr.bf16.mxu0 0
      %1298 = vmatpush1.bf16.msra.mxu0 %v486
      %1299 = vmatprep.subr.bf16.mxu0 0
      %1300 = vmatpush1.bf16.msra.mxu0 %v487
      %1301 = vmatprep.subr.bf16.mxu0 0
      %1302 = vmatpush1.bf16.msra.mxu0 %v488
      %1303 = vmatprep.subr.bf16.mxu0 0
      %1304 = vmatpush1.bf16.msra.mxu0 %v489
      %1305 = vmatprep.subr.bf16.mxu0 0
      %1306 = vmatpush1.bf16.msra.mxu0 %v490
      %1307 = vmatprep.subr.bf16.mxu0 0
      %1308 = vmatpush1.bf16.msra.mxu0 %v491
      %1309 = vmatprep.subr.bf16.mxu0 0
      %1310 = vmatpush1.bf16.msra.mxu0 %v492
      %1311 = vmatprep.subr.bf16.mxu0 0
      %1312 = vmatpush1.bf16.msra.mxu0 %v493
      %1313 = vmatprep.subr.bf16.mxu0 0
      %1314 = vmatpush1.bf16.msra.mxu0 %v494
      %1315 = vmatprep.subr.bf16.mxu0 0
      %1316 = vmatpush1.bf16.msra.mxu0 %v495
      %1317 = vmatprep.subr.bf16.mxu0 0
      %1318 = vmatpush1.bf16.msra.mxu0 %v496
      %1319 = vmatprep.subr.bf16.mxu0 0
      %1320 = vmatpush1.bf16.msra.mxu0 %v497
      %1321 = vmatprep.mubr.bf16.mxu0 %v1195
      %1322 = vmatmul.mubr.bf16.gmra.mrb[0].mxu0 %v1194
      %v1323 = vpop.f32.mrb[0].mxu0
      %v1324 = vadd.f32 %v1259, %v1323
      %v1325 = vpop.f32.mrb[0].mxu0
      %v1326 = vpop.f32.mrb[0].mxu0
      %v1327 = vadd.f32 %v1262, %v1326
      %v1328 = vpop.f32.mrb[0].mxu0
      %1329 = vmatprep.mubr.bf16.mxu0 %v1199
      %1330 = vmatmul.mubr.bf16.gmra.mrb[0].mxu0 %v1198
      %v1331 = vpop.f32.mrb[0].mxu0
      %v1332 = vadd.f32 %v1267, %v1331
      %v1333 = vpop.f32.mrb[0].mxu0
      %v1334 = vpop.f32.mrb[0].mxu0
      %v1335 = vadd.f32 %v1270, %v1334
      %v1336 = vpop.f32.mrb[0].mxu0
      %1337 = vmatprep.mubr.bf16.mxu0 %v1203
      %1338 = vmatmul.mubr.bf16.gmra.mrb[0].mxu0 %v1202
      %v1339 = vpop.f32.mrb[0].mxu0
      %v1340 = vadd.f32 %v1275, %v1339
      %v1341 = vpop.f32.mrb[0].mxu0
      %v1342 = vpop.f32.mrb[0].mxu0
      %v1343 = vadd.f32 %v1278, %v1342
      %v1344 = vpop.f32.mrb[0].mxu0
      %1345 = vmatprep.mubr.bf16.mxu0 %v1207
      %1346 = vmatmul.mubr.bf16.gmra.mrb[0].mxu0 %v1206
      %v1347 = vpop.f32.mrb[0].mxu0
      %v1348 = vadd.f32 %v1283, %v1347
      %v1349 = vpop.f32.mrb[0].mxu0
      %v1350 = vpop.f32.mrb[0].mxu0
      %v1351 = vadd.f32 %v1286, %v1350
      %v1352 = vpop.f32.mrb[0].mxu0
      %1353 = vdwg.mxu0
      %v1354 = vmax.f32 %v1120, %v1324
      %v1355 = vmax.f32 %v1121, %v1327
      %v1356 = vmax.f32 %v1122, %v1332
      %v1357 = vmax.f32 %v1123, %v1335
      %v1358 = vmax.f32 %v1124, %v1340
      %v1359 = vmax.f32 %v1125, %v1343
      %v1360 = vmax.f32 %v1126, %v1348
      %v1361 = vmax.f32 %v1127, %v1351
      %v1362 = vld [vmem:[%s2] sm:$0x1]
      %v1364 = vlaneseq
      %v1365 = vshrl.u32 %v1364, 7
      %v1366 = vsub.s32 0, %v1365
      %v1367 = vrot.slane %v1362, %v1366
      %v1369 = vadd.f32 %v1354, %v1367
      %v1370 = vadd.f32 %v1355, %v1367
      %v1371 = vadd.f32 %v1356, %v1367
      %v1372 = vadd.f32 %v1357, %v1367
      %v1373 = vadd.f32 %v1358, %v1367
      %v1374 = vadd.f32 %v1359, %v1367
      %v1375 = vadd.f32 %v1360, %v1367
      %v1376 = vadd.f32 %v1361, %v1367
      %v1377 = vmax.f32 %v1369, 0.0
      %v1378 = vmax.f32 %v1370, 0.0
      %v1379 = vmax.f32 %v1371, 0.0
      %v1380 = vmax.f32 %v1372, 0.0
      %v1381 = vmax.f32 %v1373, 0.0
      %v1382 = vmax.f32 %v1374, 0.0
      %v1383 = vmax.f32 %v1375, 0.0
      %v1384 = vmax.f32 %v1376, 0.0
      %v1385 = vpack.c.bf16 %v1378, %v1377
      %v1386 = vpack.c.bf16 %v1380, %v1379
      %v1387 = vpack.c.bf16 %v1382, %v1381
      %v1388 = vpack.c.bf16 %v1384, %v1383
      %v1393 = vunpack.c.l.b16 %v1385
      %v1394 = vunpack.c.h.b16 %v1385
      %v1395 = vunpack.c.l.b16 %v1386
      %v1396 = vunpack.c.h.b16 %v1386
      %v1397 = vunpack.c.l.b16 %v1387
      %v1398 = vunpack.c.h.b16 %v1387
      %v1399 = vunpack.c.l.b16 %v1388
      %v1400 = vunpack.c.h.b16 %v1388
      %v1401 = vpack.c.b16 %v1393, %v1393
      %v1402 = vpack.c.b16 %v1394, %v1394
      %v1403 = vpack.c.b16 %v1395, %v1395
      %v1404 = vpack.c.b16 %v1396, %v1396
      %v1405 = vpack.c.b16 %v1397, %v1397
      %v1406 = vpack.c.b16 %v1398, %v1398
      %v1407 = vpack.c.b16 %v1399, %v1399
      %v1408 = vpack.c.b16 %v1400, %v1400
      %1417 = vst [vmem:[%s175] sm:$0xf] %v1401
      %1418 = vst [vmem:[%s175 + $0x4] sm:$0xf] %v1402
      %1419 = vst [vmem:[%s175 + $0x8] sm:$0xf] %v1403
      %1420 = vst [vmem:[%s175 + $0xc] sm:$0xf] %v1404
      %1421 = vst [vmem:[%s175 + $0x10] sm:$0xf] %v1405
      %1422 = vst [vmem:[%s175 + $0x14] sm:$0xf] %v1406
      %1423 = vst [vmem:[%s175 + $0x18] sm:$0xf] %v1407
      %1424 = vst [vmem:[%s175 + $0x1c] sm:$0xf] %v1408
      %s1425 = smul.u32 8, %s14
      %p1426 = scmp.lt.s32.totalorder %s1425, 15
      %s1427 = scalar_select %p1426, %s1425, 15
      %s1428 = smul.addr %s1427, 4
      %s1429 = scalar_lea.vmem %s3, %s1428
      // Predicated region
      $region33: #{cnn_forward.4} parent=31 // pred_check
        %p1430 = pneg %p100
      $region34: #{cnn_forward.4} parent=31 // pred_check_branch
        %1432 = sbr.rel (%p1430) target = $region36
      $region35: #{cnn_forward.4} parent=31 // pred_region
        %s1433 = smul.u32 8, %s14
      $region36: #{cnn_forward.4} parent=31 // pred_fallthru
        _
    $region32: #{cnn_forward.4} parent=5 // pred_fallthru
      _
    %p1434 = scmp.le.s32.totalorder 2, %s9
    // Predicated region
    $region37: #{cnn_forward.4} parent=5 // pred_check
      %p1435 = pneg %p1434
    $region38: #{cnn_forward.4} parent=5 // pred_check_branch
      %1437 = sbr.rel (%p1435) target = $region40
    $region39: #{cnn_forward.4} parent=5 // pred_region
      %s1438 = ssub.s32 %s9, 2
      // Predicated region
      $region41: #{cnn_forward.4} parent=39 // pred_check
        %p1439 = pneg %p106
      $region42: #{cnn_forward.4} parent=39 // pred_check_branch
        %1441 = sbr.rel (%p1439) target = $region44
      $region43: #{cnn_forward.4} parent=39 // pred_region
        %s1442 = smul.u32 8, %s15
        %p1443 = scmp.lt.s32.totalorder %s1442, 15
        %s1444 = scalar_select %p1443, %s1442, 15
        %s1445 = smul.addr %s1444, 4
        %s1446 = scalar_lea.vmem %s3, %s1445
      $region44: #{cnn_forward.4} parent=39 // pred_fallthru
        _
    $region40: #{cnn_forward.4} parent=5 // pred_fallthru
      _
  $region6: #{cnn_forward.4} parent=0 // loop_footer
    %s13 = sadd.s32 1, %s9
  $region7: #{cnn_forward.4} parent=0 // loop_footer_branch
    %8 = sbr.rel target = $region3
  $region8: #{cnn_forward.4} parent=0 // loop_exit
    _

// kernel: cnn_forward.5
$region0: #{cnn_forward.5}
  #allocation0 [shape = 'u32[]', space=smem, size = 0x4, offset = 0x4, fixed_abs, tag = 'smem constant byte address 0x4 - core index']
  #allocation1 [shape = 'u32[144,128]{1,0:T(1,128)}', space=vmem, size = 0x12000, scoped, tag = 'internal scratch']
  %s0 = inlined_call_operand.vmem [shape: bf16[32,1664], index: 0, kind: input, shape index: {}]
  %s1 = inlined_call_operand.vmem [shape: bf16[1664,128], index: 1, kind: input, shape index: {}]
  %s2 = inlined_call_operand.vmem [shape: f32[1,128], index: 2, kind: input, shape index: {}]
  %s3 = inlined_call_operand.vmem [shape: f32[32,128], index: 3, kind: output, shape index: {}]
  %s4 = sld [smem:[#allocation0]]
  $region45: #{cnn_forward.5} parent=0
    _
  %s6 = ssub.s32 1, %s4
  %s7 = scalar_select 0, %s6, %s4
  loop: start=0, step=1, limit=4
  $region2: #{cnn_forward.5} parent=0 // loop_pre_header
    _
  $region3: #{cnn_forward.5} parent=0 // loop_header
    %s9 = sphi 0, %s13
    %p10 = scmp.ge.s32.totalorder %s9, 4
    %s19 = sphi 0, %s21
    %s22 = sphi 0, %s19
    %s23 = sphi 0, %s22
    %s39 = sphi 0, %s23
    %s43 = sphi 0, %s43
    %s45 = sphi 0, %s43
    %s46 = sphi 0, %s45
    %s60 = sphi 0, %s46
    %s64 = sphi 0, %s64
    %s66 = sphi 0, %s64
    %s67 = sphi 0, %s66
    %s81 = sphi 0, %s67
    %s87 = sphi 0, %s89
    %s90 = sphi 0, %s87
    %s91 = sphi 0, %s90
    %s107 = sphi 0, %s91
  $region4: #{cnn_forward.5} parent=0 // loop_header_branch
    %12 = sbr.rel (%p10) target = $region8
  $region5: #{cnn_forward.5} parent=0 // loop_body
    %s14 = ssub.s32 %s9, 1
    %s15 = ssub.s32 %s9, 2
    %s16 = sadd.s32 %s9, 1
    %s17 = ssub.s32 %s9, %s16
    %p18 = scmp.eq.s32.totalorder %s17, 0
    %s20 = sadd.s32 %s19, 1
    %s21 = scalar_select %p18, %s19, %s20
    %p24 = pneg %p18
    %p25 = scmp.eq.s32.totalorder %s9, 1
    %p26 = por %p24, %p25
    %p27 = scmp.ne.s32.totalorder %s19, %s22
    %p28 = scmp.eq.s32.totalorder %s9, 0
    %p29 = por %p27, %p28
    %p30 = scmp.ne.s32.totalorder %s19, %s22
    %p31 = scmp.eq.s32.totalorder %s14, 1
    %p32 = por %p30, %p31
    %p33 = scmp.ne.s32.totalorder %s22, %s23
    %p34 = scmp.eq.s32.totalorder %s14, 0
    %p35 = por %p33, %p34
    %p36 = scmp.ne.s32.totalorder %s22, %s23
    %p37 = scmp.eq.s32.totalorder %s15, 1
    %p38 = por %p36, %p37
    %p40 = scmp.ne.s32.totalorder %s23, %s39
    %p41 = scmp.eq.s32.totalorder %s15, 0
    %p42 = por %p40, %p41
    %s44 = sadd.s32 %s43, 1
    %p47 = scmp.eq.s32.totalorder %s9, 1
    %p48 = scmp.ne.s32.totalorder %s43, %s45
    %p49 = scmp.eq.s32.totalorder %s9, 0
    %p50 = por %p48, %p49
    %p51 = scmp.ne.s32.totalorder %s43, %s45
    %p52 = scmp.eq.s32.totalorder %s14, 1
    %p53 = por %p51, %p52
    %p54 = scmp.ne.s32.totalorder %s45, %s46
    %p55 = scmp.eq.s32.totalorder %s14, 0
    %p56 = por %p54, %p55
    %p57 = scmp.ne.s32.totalorder %s45, %s46
    %p58 = scmp.eq.s32.totalorder %s15, 1
    %p59 = por %p57, %p58
    %p61 = scmp.ne.s32.totalorder %s46, %s60
    %p62 = scmp.eq.s32.totalorder %s15, 0
    %p63 = por %p61, %p62
    %s65 = sadd.s32 %s64, 1
    %p68 = scmp.eq.s32.totalorder %s9, 1
    %p69 = scmp.ne.s32.totalorder %s64, %s66
    %p70 = scmp.eq.s32.totalorder %s9, 0
    %p71 = por %p69, %p70
    %p72 = scmp.ne.s32.totalorder %s64, %s66
    %p73 = scmp.eq.s32.totalorder %s14, 1
    %p74 = por %p72, %p73
    %p75 = scmp.ne.s32.totalorder %s66, %s67
    %p76 = scmp.eq.s32.totalorder %s14, 0
    %p77 = por %p75, %p76
    %p78 = scmp.ne.s32.totalorder %s66, %s67
    %p79 = scmp.eq.s32.totalorder %s15, 1
    %p80 = por %p78, %p79
    %p82 = scmp.ne.s32.totalorder %s67, %s81
    %p83 = scmp.eq.s32.totalorder %s15, 0
    %p84 = por %p82, %p83
    %s85 = ssub.s32 %s9, %s16
    %p86 = scmp.eq.s32.totalorder %s85, 0
    %s88 = sadd.s32 %s87, 1
    %s89 = scalar_select %p86, %s87, %s88
    %p92 = pneg %p86
    %p93 = scmp.eq.s32.totalorder %s9, 1
    %p94 = por %p92, %p93
    %p95 = scmp.ne.s32.totalorder %s87, %s90
    %p96 = scmp.eq.s32.totalorder %s9, 0
    %p97 = por %p95, %p96
    %p98 = scmp.ne.s32.totalorder %s87, %s90
    %p99 = scmp.eq.s32.totalorder %s14, 1
    %p100 = por %p98, %p99
    %p101 = scmp.ne.s32.totalorder %s90, %s91
    %p102 = scmp.eq.s32.totalorder %s14, 0
    %p103 = por %p101, %p102
    %p104 = scmp.ne.s32.totalorder %s90, %s91
    %p105 = scmp.eq.s32.totalorder %s15, 1
    %p106 = por %p104, %p105
    %p108 = scmp.ne.s32.totalorder %s91, %s107
    %p109 = scmp.eq.s32.totalorder %s15, 0
    %p110 = por %p108, %p109
    %p111 = scmp.le.s32.totalorder 1, %s9
    %p112 = scmp.lt.s32.totalorder %s9, 3
    %p113 = pnand %p111, %p112
    %p114 = pneg %p113
    // Predicated region
    $region9: #{cnn_forward.5} parent=5 // pred_check
      _
    $region10: #{cnn_forward.5} parent=5 // pred_check_branch
      %116 = sbr.rel (%p113) target = $region12
    $region11: #{cnn_forward.5} parent=5 // pred_region
      %s117 = ssub.s32 %s9, 1
      // Predicated region
      $region13: #{cnn_forward.5} parent=11 // pred_check
        %p118 = pneg %p56
      $region14: #{cnn_forward.5} parent=11 // pred_check_branch
        %120 = sbr.rel (%p118) target = $region16
      $region15: #{cnn_forward.5} parent=11 // pred_region
        _
      $region16: #{cnn_forward.5} parent=11 // pred_fallthru
        _
      // Predicated region
      $region17: #{cnn_forward.5} parent=11 // pred_check
        %p121 = pneg %p77
      $region18: #{cnn_forward.5} parent=11 // pred_check_branch
        %123 = sbr.rel (%p121) target = $region20
      $region19: #{cnn_forward.5} parent=11 // pred_region
        _
      $region20: #{cnn_forward.5} parent=11 // pred_fallthru
        _
    $region12: #{cnn_forward.5} parent=5 // pred_fallthru
      _
    %p124 = scmp.lt.s32.totalorder %s9, 2
    // Predicated region
    $region21: #{cnn_forward.5} parent=5 // pred_check
      %p125 = pneg %p124
    $region22: #{cnn_forward.5} parent=5 // pred_check_branch
      %127 = sbr.rel (%p125) target = $region24
    $region23: #{cnn_forward.5} parent=5 // pred_region
      // Predicated region
      $region25: #{cnn_forward.5} parent=23 // pred_check
        %p128 = pneg %p29
      $region26: #{cnn_forward.5} parent=23 // pred_check_branch
        %130 = sbr.rel (%p128) target = $region28
      $region27: #{cnn_forward.5} parent=23 // pred_region
        %s131 = smul.u32 2, %s9
        %p132 = scmp.lt.s32.totalorder %s131, 3
        %s133 = scalar_select %p132, %s131, 3
        %s134 = smul.addr %s133, 13
        %s135 = smul.addr %s134, 4
        %s136 = scalar_lea.vmem %s0, %s135
        %s137 = smul.u32 2, %s9
      $region28: #{cnn_forward.5} parent=23 // pred_fallthru
        _
    $region24: #{cnn_forward.5} parent=5 // pred_fallthru
      _
    %p138 = scmp.le.s32.totalorder 1, %s9
    %p139 = scmp.lt.s32.totalorder %s9, 3
    %p140 = pnand %p138, %p139
    %p141 = pneg %p140
    // Predicated region
    $region29: #{cnn_forward.5} parent=5 // pred_check
      _
    $region30: #{cnn_forward.5} parent=5 // pred_check_branch
      %143 = sbr.rel (%p140) target = $region32
    $region31: #{cnn_forward.5} parent=5 // pred_region
      %s144 = ssub.s32 %s9, 1
      %s145 = smul.u32 2, %s14
      %p146 = scmp.lt.s32.totalorder %s145, 3
      %s147 = scalar_select %p146, %s145, 3
      %s148 = smul.addr %s147, 13
      %s149 = smul.addr %s148, 4
      %s150 = scalar_lea.vmem %s0, %s149
      %p151 = pneg %p35
      %p152 = pneg %p32
      %p153 = pneg %p56
      %p154 = pneg %p53
      %p155 = pneg %p77
      %p156 = pneg %p74
      %p157 = pneg %p103
      %p158 = pneg %p100
      %s159 = smul.u32 2, %s14
      %p160 = scmp.lt.s32.totalorder %s159, 3
      %s161 = scalar_select %p160, %s159, 3
      %s162 = smul.addr %s161, 8
      %s163 = scalar_lea.vmem %s3, %s162
      %s164 = smul.u32 2, %s14
      %p165 = scmp.lt.s32.totalorder %s164, 3
      %s166 = scalar_select %p165, %s164, 3
      %s167 = smul.addr %s166, 13
      %s168 = smul.addr %s167, 4
      %s169 = scalar_lea.vmem %s0, %s168
      %s170 = smul.u32 2, %s14
      %s171 = smul.u32 2, %s14
      %p172 = scmp.lt.s32.totalorder %s171, 3
      %s173 = scalar_select %p172, %s171, 3
      %s174 = smul.addr %s173, 8
      %s175 = scalar_lea.vmem %s3, %s174
      %s176 = smul.u32 2, %s14
      %v178 = vld [vmem:[%s169] sm:$0xff]
      %v179 = vld [vmem:[%s169 + $0x8] sm:$0xff]
      %v180 = vld [vmem:[%s169 + $0x10] sm:$0xff]
      %v181 = vld [vmem:[%s169 + $0x18] sm:$0xff]
      %v182 = vld [vmem:[%s169 + $0x20] sm:$0xff]
      %v183 = vld [vmem:[%s169 + $0x28] sm:$0xff]
      %v184 = vld [vmem:[%s169 + $0x30] sm:$0xf]
      %v185 = vld [vmem:[%s169 + $0x34] sm:$0xff]
      %v186 = vld [vmem:[%s169 + $0x3c] sm:$0xff]
      %v187 = vld [vmem:[%s169 + $0x44] sm:$0xff]
      %v188 = vld [vmem:[%s169 + $0x4c] sm:$0xff]
      %v189 = vld [vmem:[%s169 + $0x54] sm:$0xff]
      %v190 = vld [vmem:[%s169 + $0x5c] sm:$0xff]
      %v191 = vld [vmem:[%s169 + $0x64] sm:$0xf]
      %v192 = vld [vmem:[%s1] sm:$0xf]
      %v193 = vld [vmem:[%s1 + $0x4] sm:$0xf]
      %v194 = vld [vmem:[%s1 + $0x8] sm:$0xf]
      %v195 = vld [vmem:[%s1 + $0xc] sm:$0xf]
      %v196 = vld [vmem:[%s1 + $0x10] sm:$0xf]
      %v197 = vld [vmem:[%s1 + $0x14] sm:$0xf]
      %v198 = vld [vmem:[%s1 + $0x18] sm:$0xf]
      %v199 = vld [vmem:[%s1 + $0x1c] sm:$0xf]
      %v200 = vld [vmem:[%s1 + $0x20] sm:$0xf]
      %v201 = vld [vmem:[%s1 + $0x24] sm:$0xf]
      %v202 = vld [vmem:[%s1 + $0x28] sm:$0xf]
      %v203 = vld [vmem:[%s1 + $0x2c] sm:$0xf]
      %v204 = vld [vmem:[%s1 + $0x30] sm:$0xf]
      %v205 = vld [vmem:[%s1 + $0x34] sm:$0xf]
      %v206 = vld [vmem:[%s1 + $0x38] sm:$0xf]
      %v207 = vld [vmem:[%s1 + $0x3c] sm:$0xf]
      %v208 = vld [vmem:[%s1 + $0x40] sm:$0xf]
      %v209 = vld [vmem:[%s1 + $0x44] sm:$0xf]
      %v210 = vld [vmem:[%s1 + $0x48] sm:$0xf]
      %v211 = vld [vmem:[%s1 + $0x4c] sm:$0xf]
      %v212 = vld [vmem:[%s1 + $0x50] sm:$0xf]
      %v213 = vld [vmem:[%s1 + $0x54] sm:$0xf]
      %v214 = vld [vmem:[%s1 + $0x58] sm:$0xf]
      %v215 = vld [vmem:[%s1 + $0x5c] sm:$0xf]
      %v216 = vld [vmem:[%s1 + $0x60] sm:$0xf]
      %v217 = vld [vmem:[%s1 + $0x64] sm:$0xf]
      %v218 = vld [vmem:[%s1 + $0x68] sm:$0xf]
      %v219 = vld [vmem:[%s1 + $0x6c] sm:$0xf]
      %v220 = vld [vmem:[%s1 + $0x70] sm:$0xf]
      %v221 = vld [vmem:[%s1 + $0x74] sm:$0xf]
      %v222 = vld [vmem:[%s1 + $0x78] sm:$0xf]
      %v223 = vld [vmem:[%s1 + $0x7c] sm:$0xf]
      %v224 = vld [vmem:[%s1 + $0x80] sm:$0xf]
      %v225 = vld [vmem:[%s1 + $0x84] sm:$0xf]
      %v226 = vld [vmem:[%s1 + $0x88] sm:$0xf]
      %v227 = vld [vmem:[%s1 + $0x8c] sm:$0xf]
      %v228 = vld [vmem:[%s1 + $0x90] sm:$0xf]
      %v229 = vld [vmem:[%s1 + $0x94] sm:$0xf]
      %v230 = vld [vmem:[%s1 + $0x98] sm:$0xf]
      %v231 = vld [vmem:[%s1 + $0x9c] sm:$0xf]
      %v232 = vld [vmem:[%s1 + $0xa0] sm:$0xf]
      %v233 = vld [vmem:[%s1 + $0xa4] sm:$0xf]
      %v234 = vld [vmem:[%s1 + $0xa8] sm:$0xf]
      %v235 = vld [vmem:[%s1 + $0xac] sm:$0xf]
      %v236 = vld [vmem:[%s1 + $0xb0] sm:$0xf]
      %v237 = vld [vmem:[%s1 + $0xb4] sm:$0xf]
      %v238 = vld [vmem:[%s1 + $0xb8] sm:$0xf]
      %v239 = vld [vmem:[%s1 + $0xbc] sm:$0xf]
      %v240 = vld [vmem:[%s1 + $0xc0] sm:$0xf]
      %v241 = vld [vmem:[%s1 + $0xc4] sm:$0xf]
      %v242 = vld [vmem:[%s1 + $0xc8] sm:$0xf]
      %v243 = vld [vmem:[%s1 + $0xcc] sm:$0xf]
      %v244 = vld [vmem:[%s1 + $0xd0] sm:$0xf]
      %v245 = vld [vmem:[%s1 + $0xd4] sm:$0xf]
      %v246 = vld [vmem:[%s1 + $0xd8] sm:$0xf]
      %v247 = vld [vmem:[%s1 + $0xdc] sm:$0xf]
      %v248 = vld [vmem:[%s1 + $0xe0] sm:$0xf]
      %v249 = vld [vmem:[%s1 + $0xe4] sm:$0xf]
      %v250 = vld [vmem:[%s1 + $0xe8] sm:$0xf]
      %v251 = vld [vmem:[%s1 + $0xec] sm:$0xf]
      %v252 = vld [vmem:[%s1 + $0xf0] sm:$0xf]
      %v253 = vld [vmem:[%s1 + $0xf4] sm:$0xf]
      %v254 = vld [vmem:[%s1 + $0xf8] sm:$0xf]
      %v255 = vld [vmem:[%s1 + $0xfc] sm:$0xf]
      %v256 = vld [vmem:[%s1 + $0x100] sm:$0xf]
      %v257 = vld [vmem:[%s1 + $0x104] sm:$0xf]
      %v258 = vld [vmem:[%s1 + $0x108] sm:$0xf]
      %v259 = vld [vmem:[%s1 + $0x10c] sm:$0xf]
      %v260 = vld [vmem:[%s1 + $0x110] sm:$0xf]
      %v261 = vld [vmem:[%s1 + $0x114] sm:$0xf]
      %v262 = vld [vmem:[%s1 + $0x118] sm:$0xf]
      %v263 = vld [vmem:[%s1 + $0x11c] sm:$0xf]
      %v264 = vld [vmem:[%s1 + $0x120] sm:$0xf]
      %v265 = vld [vmem:[%s1 + $0x124] sm:$0xf]
      %v266 = vld [vmem:[%s1 + $0x128] sm:$0xf]
      %v267 = vld [vmem:[%s1 + $0x12c] sm:$0xf]
      %v268 = vld [vmem:[%s1 + $0x130] sm:$0xf]
      %v269 = vld [vmem:[%s1 + $0x134] sm:$0xf]
      %v270 = vld [vmem:[%s1 + $0x138] sm:$0xf]
      %v271 = vld [vmem:[%s1 + $0x13c] sm:$0xf]
      %v272 = vld [vmem:[%s1 + $0x140] sm:$0xf]
      %v273 = vld [vmem:[%s1 + $0x144] sm:$0xf]
      %v274 = vld [vmem:[%s1 + $0x148] sm:$0xf]
      %v275 = vld [vmem:[%s1 + $0x14c] sm:$0xf]
      %v276 = vld [vmem:[%s1 + $0x150] sm:$0xf]
      %v277 = vld [vmem:[%s1 + $0x154] sm:$0xf]
      %v278 = vld [vmem:[%s1 + $0x158] sm:$0xf]
      %v279 = vld [vmem:[%s1 + $0x15c] sm:$0xf]
      %v280 = vld [vmem:[%s1 + $0x160] sm:$0xf]
      %v281 = vld [vmem:[%s1 + $0x164] sm:$0xf]
      %v282 = vld [vmem:[%s1 + $0x168] sm:$0xf]
      %v283 = vld [vmem:[%s1 + $0x16c] sm:$0xf]
      %v284 = vld [vmem:[%s1 + $0x170] sm:$0xf]
      %v285 = vld [vmem:[%s1 + $0x174] sm:$0xf]
      %v286 = vld [vmem:[%s1 + $0x178] sm:$0xf]
      %v287 = vld [vmem:[%s1 + $0x17c] sm:$0xf]
      %v288 = vld [vmem:[%s1 + $0x180] sm:$0xf]
      %v289 = vld [vmem:[%s1 + $0x184] sm:$0xf]
      %v290 = vld [vmem:[%s1 + $0x188] sm:$0xf]
      %v291 = vld [vmem:[%s1 + $0x18c] sm:$0xf]
      %v292 = vld [vmem:[%s1 + $0x190] sm:$0xf]
      %v293 = vld [vmem:[%s1 + $0x194] sm:$0xf]
      %v294 = vld [vmem:[%s1 + $0x198] sm:$0xf]
      %v295 = vld [vmem:[%s1 + $0x19c] sm:$0xf]
      %v296 = vld [vmem:[%s1 + $0x1a0] sm:$0xf]
      %v297 = vld [vmem:[%s1 + $0x1a4] sm:$0xf]
      %v298 = vld [vmem:[%s1 + $0x1a8] sm:$0xf]
      %v299 = vld [vmem:[%s1 + $0x1ac] sm:$0xf]
      %v300 = vld [vmem:[%s1 + $0x1b0] sm:$0xf]
      %v301 = vld [vmem:[%s1 + $0x1b4] sm:$0xf]
      %v302 = vld [vmem:[%s1 + $0x1b8] sm:$0xf]
      %v303 = vld [vmem:[%s1 + $0x1bc] sm:$0xf]
      %v304 = vld [vmem:[%s1 + $0x1c0] sm:$0xf]
      %v305 = vld [vmem:[%s1 + $0x1c4] sm:$0xf]
      %v306 = vld [vmem:[%s1 + $0x1c8] sm:$0xf]
      %v307 = vld [vmem:[%s1 + $0x1cc] sm:$0xf]
      %v308 = vld [vmem:[%s1 + $0x1d0] sm:$0xf]
      %v309 = vld [vmem:[%s1 + $0x1d4] sm:$0xf]
      %v310 = vld [vmem:[%s1 + $0x1d8] sm:$0xf]
      %v311 = vld [vmem:[%s1 + $0x1dc] sm:$0xf]
      %v312 = vld [vmem:[%s1 + $0x1e0] sm:$0xf]
      %v313 = vld [vmem:[%s1 + $0x1e4] sm:$0xf]
      %v314 = vld [vmem:[%s1 + $0x1e8] sm:$0xf]
      %v315 = vld [vmem:[%s1 + $0x1ec] sm:$0xf]
      %v316 = vld [vmem:[%s1 + $0x1f0] sm:$0xf]
      %v317 = vld [vmem:[%s1 + $0x1f4] sm:$0xf]
      %v318 = vld [vmem:[%s1 + $0x1f8] sm:$0xf]
      %v319 = vld [vmem:[%s1 + $0x1fc] sm:$0xf]
      %v320 = vld [vmem:[%s1 + $0x200] sm:$0xf]
      %v321 = vld [vmem:[%s1 + $0x204] sm:$0xf]
      %v322 = vld [vmem:[%s1 + $0x208] sm:$0xf]
      %v323 = vld [vmem:[%s1 + $0x20c] sm:$0xf]
      %v324 = vld [vmem:[%s1 + $0x210] sm:$0xf]
      %v325 = vld [vmem:[%s1 + $0x214] sm:$0xf]
      %v326 = vld [vmem:[%s1 + $0x218] sm:$0xf]
      %v327 = vld [vmem:[%s1 + $0x21c] sm:$0xf]
      %v328 = vld [vmem:[%s1 + $0x220] sm:$0xf]
      %v329 = vld [vmem:[%s1 + $0x224] sm:$0xf]
      %v330 = vld [vmem:[%s1 + $0x228] sm:$0xf]
      %v331 = vld [vmem:[%s1 + $0x22c] sm:$0xf]
      %v332 = vld [vmem:[%s1 + $0x230] sm:$0xf]
      %v333 = vld [vmem:[%s1 + $0x234] sm:$0xf]
      %v334 = vld [vmem:[%s1 + $0x238] sm:$0xf]
      %v335 = vld [vmem:[%s1 + $0x23c] sm:$0xf]
      %v336 = vld [vmem:[%s1 + $0x240] sm:$0xf]
      %v337 = vld [vmem:[%s1 + $0x244] sm:$0xf]
      %v338 = vld [vmem:[%s1 + $0x248] sm:$0xf]
      %v339 = vld [vmem:[%s1 + $0x24c] sm:$0xf]
      %v340 = vld [vmem:[%s1 + $0x250] sm:$0xf]
      %v341 = vld [vmem:[%s1 + $0x254] sm:$0xf]
      %v342 = vld [vmem:[%s1 + $0x258] sm:$0xf]
      %v343 = vld [vmem:[%s1 + $0x25c] sm:$0xf]
      %v344 = vld [vmem:[%s1 + $0x260] sm:$0xf]
      %v345 = vld [vmem:[%s1 + $0x264] sm:$0xf]
      %v346 = vld [vmem:[%s1 + $0x268] sm:$0xf]
      %v347 = vld [vmem:[%s1 + $0x26c] sm:$0xf]
      %v348 = vld [vmem:[%s1 + $0x270] sm:$0xf]
      %v349 = vld [vmem:[%s1 + $0x274] sm:$0xf]
      %v350 = vld [vmem:[%s1 + $0x278] sm:$0xf]
      %v351 = vld [vmem:[%s1 + $0x27c] sm:$0xf]
      %v352 = vld [vmem:[%s1 + $0x280] sm:$0xf]
      %v353 = vld [vmem:[%s1 + $0x284] sm:$0xf]
      %v354 = vld [vmem:[%s1 + $0x288] sm:$0xf]
      %v355 = vld [vmem:[%s1 + $0x28c] sm:$0xf]
      %v356 = vld [vmem:[%s1 + $0x290] sm:$0xf]
      %v357 = vld [vmem:[%s1 + $0x294] sm:$0xf]
      %v358 = vld [vmem:[%s1 + $0x298] sm:$0xf]
      %v359 = vld [vmem:[%s1 + $0x29c] sm:$0xf]
      %v360 = vld [vmem:[%s1 + $0x2a0] sm:$0xf]
      %v361 = vld [vmem:[%s1 + $0x2a4] sm:$0xf]
      %v362 = vld [vmem:[%s1 + $0x2a8] sm:$0xf]
      %v363 = vld [vmem:[%s1 + $0x2ac] sm:$0xf]
      %v364 = vld [vmem:[%s1 + $0x2b0] sm:$0xf]
      %v365 = vld [vmem:[%s1 + $0x2b4] sm:$0xf]
      %v366 = vld [vmem:[%s1 + $0x2b8] sm:$0xf]
      %v367 = vld [vmem:[%s1 + $0x2bc] sm:$0xf]
      %v368 = vld [vmem:[%s1 + $0x2c0] sm:$0xf]
      %v369 = vld [vmem:[%s1 + $0x2c4] sm:$0xf]
      %v370 = vld [vmem:[%s1 + $0x2c8] sm:$0xf]
      %v371 = vld [vmem:[%s1 + $0x2cc] sm:$0xf]
      %v372 = vld [vmem:[%s1 + $0x2d0] sm:$0xf]
      %v373 = vld [vmem:[%s1 + $0x2d4] sm:$0xf]
      %v374 = vld [vmem:[%s1 + $0x2d8] sm:$0xf]
      %v375 = vld [vmem:[%s1 + $0x2dc] sm:$0xf]
      %v376 = vld [vmem:[%s1 + $0x2e0] sm:$0xf]
      %v377 = vld [vmem:[%s1 + $0x2e4] sm:$0xf]
      %v378 = vld [vmem:[%s1 + $0x2e8] sm:$0xf]
      %v379 = vld [vmem:[%s1 + $0x2ec] sm:$0xf]
      %v380 = vld [vmem:[%s1 + $0x2f0] sm:$0xf]
      %v381 = vld [vmem:[%s1 + $0x2f4] sm:$0xf]
      %v382 = vld [vmem:[%s1 + $0x2f8] sm:$0xf]
      %v383 = vld [vmem:[%s1 + $0x2fc] sm:$0xf]
      %v384 = vld [vmem:[%s1 + $0x300] sm:$0xf]
      %v385 = vld [vmem:[%s1 + $0x304] sm:$0xf]
      %v386 = vld [vmem:[%s1 + $0x308] sm:$0xf]
      %v387 = vld [vmem:[%s1 + $0x30c] sm:$0xf]
      %v388 = vld [vmem:[%s1 + $0x310] sm:$0xf]
      %v389 = vld [vmem:[%s1 + $0x314] sm:$0xf]
      %v390 = vld [vmem:[%s1 + $0x318] sm:$0xf]
      %v391 = vld [vmem:[%s1 + $0x31c] sm:$0xf]
      %v392 = vld [vmem:[%s1 + $0x320] sm:$0xf]
      %v393 = vld [vmem:[%s1 + $0x324] sm:$0xf]
      %v394 = vld [vmem:[%s1 + $0x328] sm:$0xf]
      %v395 = vld [vmem:[%s1 + $0x32c] sm:$0xf]
      %v396 = vld [vmem:[%s1 + $0x330] sm:$0xf]
      %v397 = vld [vmem:[%s1 + $0x334] sm:$0xf]
      %v398 = vld [vmem:[%s1 + $0x338] sm:$0xf]
      %v399 = vld [vmem:[%s1 + $0x33c] sm:$0xf]
      %v400 = vld [vmem:[%s2] sm:$0x1]
      %v402 = vlaneseq
      %v403 = vshrl.u32 %v402, 7
      %v404 = vsub.s32 0, %v403
      %v405 = vrot.slane %v400, %v404
      %v421 = vunpack.c.l.b16 %v178
      %v422 = vunpack.c.h.b16 %v178
      %v423 = vunpack.c.l.b16 %v179
      %v424 = vunpack.c.h.b16 %v179
      %v425 = vunpack.c.l.b16 %v180
      %v426 = vunpack.c.h.b16 %v180
      %v427 = vunpack.c.l.b16 %v181
      %v428 = vunpack.c.h.b16 %v181
      %v429 = vunpack.c.l.b16 %v182
      %v430 = vunpack.c.h.b16 %v182
      %v431 = vunpack.c.l.b16 %v183
      %v432 = vunpack.c.h.b16 %v183
      %v433 = vunpack.c.l.b16 %v184
      %v434 = vunpack.c.l.b16 %v185
      %v435 = vunpack.c.h.b16 %v185
      %v436 = vunpack.c.l.b16 %v186
      %v437 = vunpack.c.h.b16 %v186
      %v438 = vunpack.c.l.b16 %v187
      %v439 = vunpack.c.h.b16 %v187
      %v440 = vunpack.c.l.b16 %v188
      %v441 = vunpack.c.h.b16 %v188
      %v442 = vunpack.c.l.b16 %v189
      %v443 = vunpack.c.h.b16 %v189
      %v444 = vunpack.c.l.b16 %v190
      %v445 = vunpack.c.h.b16 %v190
      %v446 = vunpack.c.l.b16 %v191
      %v447 = vpack.c.b16 %v434, %v421
      %v448 = vpack.c.b16 %v435, %v422
      %v449 = vpack.c.b16 %v436, %v423
      %v450 = vpack.c.b16 %v437, %v424
      %v451 = vpack.c.b16 %v438, %v425
      %v452 = vpack.c.b16 %v439, %v426
      %v453 = vpack.c.b16 %v440, %v427
      %v454 = vpack.c.b16 %v441, %v428
      %v455 = vpack.c.b16 %v442, %v429
      %v456 = vpack.c.b16 %v443, %v430
      %v457 = vpack.c.b16 %v444, %v431
      %v458 = vpack.c.b16 %v445, %v432
      %v459 = vpack.c.b16 %v446, %v433
      %v681 = vunpack.c.l.b16 %v192
      %v682 = vunpack.c.l.b16 %v193
      %v683 = vunpack.c.l.b16 %v194
      %v684 = vunpack.c.l.b16 %v195
      %v685 = vunpack.c.l.b16 %v196
      %v686 = vunpack.c.l.b16 %v197
      %v687 = vunpack.c.l.b16 %v198
      %v688 = vunpack.c.l.b16 %v199
      %v689 = vunpack.c.l.b16 %v200
      %v690 = vunpack.c.l.b16 %v201
      %v691 = vunpack.c.l.b16 %v202
      %v692 = vunpack.c.l.b16 %v203
      %v693 = vunpack.c.l.b16 %v204
      %v694 = vunpack.c.l.b16 %v205
      %v695 = vunpack.c.l.b16 %v206
      %v696 = vunpack.c.l.b16 %v207
      %v697 = vunpack.c.l.b16 %v208
      %v698 = vunpack.c.l.b16 %v209
      %v699 = vunpack.c.l.b16 %v210
      %v700 = vunpack.c.l.b16 %v211
      %v701 = vunpack.c.l.b16 %v212
      %v702 = vunpack.c.l.b16 %v213
      %v703 = vunpack.c.l.b16 %v214
      %v704 = vunpack.c.l.b16 %v215
      %v705 = vunpack.c.l.b16 %v216
      %v706 = vunpack.c.l.b16 %v217
      %v707 = vunpack.c.l.b16 %v218
      %v708 = vunpack.c.l.b16 %v219
      %v709 = vunpack.c.l.b16 %v220
      %v710 = vunpack.c.l.b16 %v221
      %v711 = vunpack.c.l.b16 %v222
      %v712 = vunpack.c.l.b16 %v223
      %v713 = vunpack.c.l.b16 %v224
      %v714 = vunpack.c.l.b16 %v225
      %v715 = vunpack.c.l.b16 %v226
      %v716 = vunpack.c.l.b16 %v227
      %v717 = vunpack.c.l.b16 %v228
      %v718 = vunpack.c.l.b16 %v229
      %v719 = vunpack.c.l.b16 %v230
      %v720 = vunpack.c.l.b16 %v231
      %v721 = vunpack.c.l.b16 %v232
      %v722 = vunpack.c.l.b16 %v233
      %v723 = vunpack.c.l.b16 %v234
      %v724 = vunpack.c.l.b16 %v235
      %v725 = vunpack.c.l.b16 %v236
      %v726 = vunpack.c.l.b16 %v237
      %v727 = vunpack.c.l.b16 %v238
      %v728 = vunpack.c.l.b16 %v239
      %v729 = vunpack.c.l.b16 %v240
      %v730 = vunpack.c.l.b16 %v241
      %v731 = vunpack.c.l.b16 %v242
      %v732 = vunpack.c.l.b16 %v243
      %v733 = vunpack.c.l.b16 %v244
      %v734 = vunpack.c.l.b16 %v245
      %v735 = vunpack.c.l.b16 %v246
      %v736 = vunpack.c.l.b16 %v247
      %v737 = vunpack.c.l.b16 %v248
      %v738 = vunpack.c.l.b16 %v249
      %v739 = vunpack.c.l.b16 %v250
      %v740 = vunpack.c.l.b16 %v251
      %v741 = vunpack.c.l.b16 %v252
      %v742 = vunpack.c.l.b16 %v253
      %v743 = vunpack.c.l.b16 %v254
      %v744 = vunpack.c.l.b16 %v255
      %v745 = vunpack.c.l.b16 %v256
      %v746 = vunpack.c.l.b16 %v257
      %v747 = vunpack.c.l.b16 %v258
      %v748 = vunpack.c.l.b16 %v259
      %v749 = vunpack.c.l.b16 %v260
      %v750 = vunpack.c.l.b16 %v261
      %v751 = vunpack.c.l.b16 %v262
      %v752 = vunpack.c.l.b16 %v263
      %v753 = vunpack.c.l.b16 %v264
      %v754 = vunpack.c.l.b16 %v265
      %v755 = vunpack.c.l.b16 %v266
      %v756 = vunpack.c.l.b16 %v267
      %v757 = vunpack.c.l.b16 %v268
      %v758 = vunpack.c.l.b16 %v269
      %v759 = vunpack.c.l.b16 %v270
      %v760 = vunpack.c.l.b16 %v271
      %v761 = vunpack.c.l.b16 %v272
      %v762 = vunpack.c.l.b16 %v273
      %v763 = vunpack.c.l.b16 %v274
      %v764 = vunpack.c.l.b16 %v275
      %v765 = vunpack.c.l.b16 %v276
      %v766 = vunpack.c.l.b16 %v277
      %v767 = vunpack.c.l.b16 %v278
      %v768 = vunpack.c.l.b16 %v279
      %v769 = vunpack.c.l.b16 %v280
      %v770 = vunpack.c.l.b16 %v281
      %v771 = vunpack.c.l.b16 %v282
      %v772 = vunpack.c.l.b16 %v283
      %v773 = vunpack.c.l.b16 %v284
      %v774 = vunpack.c.l.b16 %v285
      %v775 = vunpack.c.l.b16 %v286
      %v776 = vunpack.c.l.b16 %v287
      %v777 = vunpack.c.l.b16 %v288
      %v778 = vunpack.c.l.b16 %v289
      %v779 = vunpack.c.l.b16 %v290
      %v780 = vunpack.c.l.b16 %v291
      %v781 = vunpack.c.l.b16 %v292
      %v782 = vunpack.c.l.b16 %v293
      %v783 = vunpack.c.l.b16 %v294
      %v784 = vunpack.c.l.b16 %v295
      %v785 = vunpack.c.l.b16 %v296
      %v786 = vunpack.c.l.b16 %v297
      %v787 = vunpack.c.l.b16 %v298
      %v788 = vunpack.c.l.b16 %v299
      %v789 = vunpack.c.l.b16 %v300
      %v790 = vunpack.c.l.b16 %v301
      %v791 = vunpack.c.l.b16 %v302
      %v792 = vunpack.c.l.b16 %v303
      %v793 = vunpack.c.l.b16 %v304
      %v794 = vunpack.c.l.b16 %v305
      %v795 = vunpack.c.l.b16 %v306
      %v796 = vunpack.c.l.b16 %v307
      %v797 = vunpack.c.l.b16 %v308
      %v798 = vunpack.c.l.b16 %v309
      %v799 = vunpack.c.l.b16 %v310
      %v800 = vunpack.c.l.b16 %v311
      %v801 = vunpack.c.l.b16 %v312
      %v802 = vunpack.c.l.b16 %v313
      %v803 = vunpack.c.l.b16 %v314
      %v804 = vunpack.c.l.b16 %v315
      %v805 = vunpack.c.l.b16 %v316
      %v806 = vunpack.c.l.b16 %v317
      %v807 = vunpack.c.l.b16 %v318
      %v808 = vunpack.c.l.b16 %v319
      %v809 = vunpack.c.l.b16 %v320
      %v810 = vunpack.c.l.b16 %v321
      %v811 = vunpack.c.l.b16 %v322
      %v812 = vunpack.c.l.b16 %v323
      %v813 = vunpack.c.l.b16 %v324
      %v814 = vunpack.c.l.b16 %v325
      %v815 = vunpack.c.l.b16 %v326
      %v816 = vunpack.c.l.b16 %v327
      %v817 = vunpack.c.l.b16 %v328
      %v818 = vunpack.c.l.b16 %v329
      %v819 = vunpack.c.l.b16 %v330
      %v820 = vunpack.c.l.b16 %v331
      %v821 = vunpack.c.l.b16 %v332
      %v822 = vunpack.c.l.b16 %v333
      %v823 = vunpack.c.l.b16 %v334
      %v824 = vunpack.c.l.b16 %v335
      %v825 = vunpack.c.l.b16 %v336
      %v826 = vunpack.c.l.b16 %v337
      %v827 = vunpack.c.l.b16 %v338
      %v828 = vunpack.c.l.b16 %v339
      %v829 = vunpack.c.l.b16 %v340
      %v830 = vunpack.c.l.b16 %v341
      %v831 = vunpack.c.l.b16 %v342
      %v832 = vunpack.c.l.b16 %v343
      %v833 = vunpack.c.l.b16 %v344
      %v834 = vunpack.c.l.b16 %v345
      %v835 = vunpack.c.l.b16 %v346
      %v836 = vunpack.c.l.b16 %v347
      %v837 = vunpack.c.l.b16 %v348
      %v838 = vunpack.c.l.b16 %v349
      %v839 = vunpack.c.l.b16 %v350
      %v840 = vunpack.c.l.b16 %v351
      %v841 = vunpack.c.l.b16 %v352
      %v842 = vunpack.c.l.b16 %v353
      %v843 = vunpack.c.l.b16 %v354
      %v844 = vunpack.c.l.b16 %v355
      %v845 = vunpack.c.l.b16 %v356
      %v846 = vunpack.c.l.b16 %v357
      %v847 = vunpack.c.l.b16 %v358
      %v848 = vunpack.c.l.b16 %v359
      %v849 = vunpack.c.l.b16 %v360
      %v850 = vunpack.c.l.b16 %v361
      %v851 = vunpack.c.l.b16 %v362
      %v852 = vunpack.c.l.b16 %v363
      %v853 = vunpack.c.l.b16 %v364
      %v854 = vunpack.c.l.b16 %v365
      %v855 = vunpack.c.l.b16 %v366
      %v856 = vunpack.c.l.b16 %v367
      %v857 = vunpack.c.l.b16 %v368
      %v858 = vunpack.c.l.b16 %v369
      %v859 = vunpack.c.l.b16 %v370
      %v860 = vunpack.c.l.b16 %v371
      %v861 = vunpack.c.l.b16 %v372
      %v862 = vunpack.c.l.b16 %v373
      %v863 = vunpack.c.l.b16 %v374
      %v864 = vunpack.c.l.b16 %v375
      %v865 = vunpack.c.l.b16 %v376
      %v866 = vunpack.c.l.b16 %v377
      %v867 = vunpack.c.l.b16 %v378
      %v868 = vunpack.c.l.b16 %v379
      %v869 = vunpack.c.l.b16 %v380
      %v870 = vunpack.c.l.b16 %v381
      %v871 = vunpack.c.l.b16 %v382
      %v872 = vunpack.c.l.b16 %v383
      %v873 = vunpack.c.l.b16 %v384
      %v874 = vunpack.c.l.b16 %v385
      %v875 = vunpack.c.l.b16 %v386
      %v876 = vunpack.c.l.b16 %v387
      %v877 = vunpack.c.l.b16 %v388
      %v878 = vunpack.c.l.b16 %v389
      %v879 = vunpack.c.l.b16 %v390
      %v880 = vunpack.c.l.b16 %v391
      %v881 = vunpack.c.l.b16 %v392
      %v882 = vunpack.c.l.b16 %v393
      %v883 = vunpack.c.l.b16 %v394
      %v884 = vunpack.c.l.b16 %v395
      %v885 = vunpack.c.l.b16 %v396
      %v886 = vunpack.c.l.b16 %v397
      %v887 = vunpack.c.l.b16 %v398
      %v888 = vunpack.c.l.b16 %v399
      %v889 = vpack.c.b16 %v682, %v681
      %v890 = vpack.c.b16 %v684, %v683
      %v891 = vpack.c.b16 %v686, %v685
      %v892 = vpack.c.b16 %v688, %v687
      %v893 = vpack.c.b16 %v690, %v689
      %v894 = vpack.c.b16 %v692, %v691
      %v895 = vpack.c.b16 %v694, %v693
      %v896 = vpack.c.b16 %v696, %v695
      %v897 = vpack.c.b16 %v698, %v697
      %v898 = vpack.c.b16 %v700, %v699
      %v899 = vpack.c.b16 %v702, %v701
      %v900 = vpack.c.b16 %v704, %v703
      %v901 = vpack.c.b16 %v706, %v705
      %v902 = vpack.c.b16 %v708, %v707
      %v903 = vpack.c.b16 %v710, %v709
      %v904 = vpack.c.b16 %v712, %v711
      %v905 = vpack.c.b16 %v714, %v713
      %v906 = vpack.c.b16 %v716, %v715
      %v907 = vpack.c.b16 %v718, %v717
      %v908 = vpack.c.b16 %v720, %v719
      %v909 = vpack.c.b16 %v722, %v721
      %v910 = vpack.c.b16 %v724, %v723
      %v911 = vpack.c.b16 %v726, %v725
      %v912 = vpack.c.b16 %v728, %v727
      %v913 = vpack.c.b16 %v730, %v729
      %v914 = vpack.c.b16 %v732, %v731
      %v915 = vpack.c.b16 %v734, %v733
      %v916 = vpack.c.b16 %v736, %v735
      %v917 = vpack.c.b16 %v738, %v737
      %v918 = vpack.c.b16 %v740, %v739
      %v919 = vpack.c.b16 %v742, %v741
      %v920 = vpack.c.b16 %v744, %v743
      %v921 = vpack.c.b16 %v746, %v745
      %v922 = vpack.c.b16 %v748, %v747
      %v923 = vpack.c.b16 %v750, %v749
      %v924 = vpack.c.b16 %v752, %v751
      %v925 = vpack.c.b16 %v754, %v753
      %v926 = vpack.c.b16 %v756, %v755
      %v927 = vpack.c.b16 %v758, %v757
      %v928 = vpack.c.b16 %v760, %v759
      %v929 = vpack.c.b16 %v762, %v761
      %v930 = vpack.c.b16 %v764, %v763
      %v931 = vpack.c.b16 %v766, %v765
      %v932 = vpack.c.b16 %v768, %v767
      %v933 = vpack.c.b16 %v770, %v769
      %v934 = vpack.c.b16 %v772, %v771
      %v935 = vpack.c.b16 %v774, %v773
      %v936 = vpack.c.b16 %v776, %v775
      %v937 = vpack.c.b16 %v778, %v777
      %v938 = vpack.c.b16 %v780, %v779
      %v939 = vpack.c.b16 %v782, %v781
      %v940 = vpack.c.b16 %v784, %v783
      %v941 = vpack.c.b16 %v786, %v785
      %v942 = vpack.c.b16 %v788, %v787
      %v943 = vpack.c.b16 %v790, %v789
      %v944 = vpack.c.b16 %v792, %v791
      %v945 = vpack.c.b16 %v794, %v793
      %v946 = vpack.c.b16 %v796, %v795
      %v947 = vpack.c.b16 %v798, %v797
      %v948 = vpack.c.b16 %v800, %v799
      %v949 = vpack.c.b16 %v802, %v801
      %v950 = vpack.c.b16 %v804, %v803
      %v951 = vpack.c.b16 %v806, %v805
      %v952 = vpack.c.b16 %v808, %v807
      %v953 = vpack.c.b16 %v810, %v809
      %v954 = vpack.c.b16 %v812, %v811
      %v955 = vpack.c.b16 %v814, %v813
      %v956 = vpack.c.b16 %v816, %v815
      %v957 = vpack.c.b16 %v818, %v817
      %v958 = vpack.c.b16 %v820, %v819
      %v959 = vpack.c.b16 %v822, %v821
      %v960 = vpack.c.b16 %v824, %v823
      %v961 = vpack.c.b16 %v826, %v825
      %v962 = vpack.c.b16 %v828, %v827
      %v963 = vpack.c.b16 %v830, %v829
      %v964 = vpack.c.b16 %v832, %v831
      %v965 = vpack.c.b16 %v834, %v833
      %v966 = vpack.c.b16 %v836, %v835
      %v967 = vpack.c.b16 %v838, %v837
      %v968 = vpack.c.b16 %v840, %v839
      %v969 = vpack.c.b16 %v842, %v841
      %v970 = vpack.c.b16 %v844, %v843
      %v971 = vpack.c.b16 %v846, %v845
      %v972 = vpack.c.b16 %v848, %v847
      %v973 = vpack.c.b16 %v850, %v849
      %v974 = vpack.c.b16 %v852, %v851
      %v975 = vpack.c.b16 %v854, %v853
      %v976 = vpack.c.b16 %v856, %v855
      %v977 = vpack.c.b16 %v858, %v857
      %v978 = vpack.c.b16 %v860, %v859
      %v979 = vpack.c.b16 %v862, %v861
      %v980 = vpack.c.b16 %v864, %v863
      %v981 = vpack.c.b16 %v866, %v865
      %v982 = vpack.c.b16 %v868, %v867
      %v983 = vpack.c.b16 %v870, %v869
      %v984 = vpack.c.b16 %v872, %v871
      %v985 = vpack.c.b16 %v874, %v873
      %v986 = vpack.c.b16 %v876, %v875
      %v987 = vpack.c.b16 %v878, %v877
      %v988 = vpack.c.b16 %v880, %v879
      %v989 = vpack.c.b16 %v882, %v881
      %v990 = vpack.c.b16 %v884, %v883
      %v991 = vpack.c.b16 %v886, %v885
      %v992 = vpack.c.b16 %v888, %v887
      %1097 = vmatprep.subr.bf16.mxu0 0
      %1098 = vmatpush1.bf16.msra.mxu0 %v889
      %1099 = vmatprep.subr.bf16.mxu0 0
      %1100 = vmatpush1.bf16.msra.mxu0 %v890
      %1101 = vmatprep.subr.bf16.mxu0 0
      %1102 = vmatpush1.bf16.msra.mxu0 %v891
      %1103 = vmatprep.subr.bf16.mxu0 0
      %1104 = vmatpush1.bf16.msra.mxu0 %v892
      %1105 = vmatprep.subr.bf16.mxu0 0
      %1106 = vmatpush1.bf16.msra.mxu0 %v893
      %1107 = vmatprep.subr.bf16.mxu0 0
      %1108 = vmatpush1.bf16.msra.mxu0 %v894
      %1109 = vmatprep.subr.bf16.mxu0 0
      %1110 = vmatpush1.bf16.msra.mxu0 %v895
      %1111 = vmatprep.subr.bf16.mxu0 0
      %1112 = vmatpush1.bf16.msra.mxu0 %v896
      %1113 = vmatprep.subr.bf16.mxu0 0
      %1114 = vmatpush1.bf16.msra.mxu0 %v897
      %1115 = vmatprep.subr.bf16.mxu0 0
      %1116 = vmatpush1.bf16.msra.mxu0 %v898
      %1117 = vmatprep.subr.bf16.mxu0 0
      %1118 = vmatpush1.bf16.msra.mxu0 %v899
      %1119 = vmatprep.subr.bf16.mxu0 0
      %1120 = vmatpush1.bf16.msra.mxu0 %v900
      %1121 = vmatprep.subr.bf16.mxu0 0
      %1122 = vmatpush1.bf16.msra.mxu0 %v901
      %1123 = vmatprep.subr.bf16.mxu0 0
      %1124 = vmatpush1.bf16.msra.mxu0 %v902
      %1125 = vmatprep.subr.bf16.mxu0 0
      %1126 = vmatpush1.bf16.msra.mxu0 %v903
      %1127 = vmatprep.subr.bf16.mxu0 0
      %1128 = vmatpush1.bf16.msra.mxu0 %v904
      %1129 = vmatprep.mubr.bf16.mxu0 %v448
      %1130 = vmatmul.mubr.bf16.gmra.mrb[0].mxu0 %v447
      %v1131 = vpop.f32.mrb[0].mxu0
      %v1132 = vadd.f32 %v405, %v1131
      %v1133 = vpop.f32.mrb[0].mxu0
      %v1134 = vpop.f32.mrb[0].mxu0
      %v1135 = vadd.f32 %v405, %v1134
      %v1136 = vpop.f32.mrb[0].mxu0
      %1137 = vdwg.mxu0
      %1138 = vmatprep.subr.bf16.mxu0 0
      %1139 = vmatpush1.bf16.msra.mxu0 %v905
      %1140 = vmatprep.subr.bf16.mxu0 0
      %1141 = vmatpush1.bf16.msra.mxu0 %v906
      %1142 = vmatprep.subr.bf16.mxu0 0
      %1143 = vmatpush1.bf16.msra.mxu0 %v907
      %1144 = vmatprep.subr.bf16.mxu0 0
      %1145 = vmatpush1.bf16.msra.mxu0 %v908
      %1146 = vmatprep.subr.bf16.mxu0 0
      %1147 = vmatpush1.bf16.msra.mxu0 %v909
      %1148 = vmatprep.subr.bf16.mxu0 0
      %1149 = vmatpush1.bf16.msra.mxu0 %v910
      %1150 = vmatprep.subr.bf16.mxu0 0
      %1151 = vmatpush1.bf16.msra.mxu0 %v911
      %1152 = vmatprep.subr.bf16.mxu0 0
      %1153 = vmatpush1.bf16.msra.mxu0 %v912
      %1154 = vmatprep.subr.bf16.mxu0 0
      %1155 = vmatpush1.bf16.msra.mxu0 %v913
      %1156 = vmatprep.subr.bf16.mxu0 0
      %1157 = vmatpush1.bf16.msra.mxu0 %v914
      %1158 = vmatprep.subr.bf16.mxu0 0
      %1159 = vmatpush1.bf16.msra.mxu0 %v915
      %1160 = vmatprep.subr.bf16.mxu0 0
      %1161 = vmatpush1.bf16.msra.mxu0 %v916
      %1162 = vmatprep.subr.bf16.mxu0 0
      %1163 = vmatpush1.bf16.msra.mxu0 %v917
      %1164 = vmatprep.subr.bf16.mxu0 0
      %1165 = vmatpush1.bf16.msra.mxu0 %v918
      %1166 = vmatprep.subr.bf16.mxu0 0
      %1167 = vmatpush1.bf16.msra.mxu0 %v919
      %1168 = vmatprep.subr.bf16.mxu0 0
      %1169 = vmatpush1.bf16.msra.mxu0 %v920
      %1170 = vmatprep.mubr.bf16.mxu0 %v450
      %1171 = vmatmul.mubr.bf16.gmra.mrb[0].mxu0 %v449
      %v1172 = vpop.f32.mrb[0].mxu0
      %v1173 = vadd.f32 %v1132, %v1172
      %v1174 = vpop.f32.mrb[0].mxu0
      %v1175 = vpop.f32.mrb[0].mxu0
      %v1176 = vadd.f32 %v1135, %v1175
      %v1177 = vpop.f32.mrb[0].mxu0
      %1178 = vdwg.mxu0
      %1179 = vmatprep.subr.bf16.mxu0 0
      %1180 = vmatpush1.bf16.msra.mxu0 %v921
      %1181 = vmatprep.subr.bf16.mxu0 0
      %1182 = vmatpush1.bf16.msra.mxu0 %v922
      %1183 = vmatprep.subr.bf16.mxu0 0
      %1184 = vmatpush1.bf16.msra.mxu0 %v923
      %1185 = vmatprep.subr.bf16.mxu0 0
      %1186 = vmatpush1.bf16.msra.mxu0 %v924
      %1187 = vmatprep.subr.bf16.mxu0 0
      %1188 = vmatpush1.bf16.msra.mxu0 %v925
      %1189 = vmatprep.subr.bf16.mxu0 0
      %1190 = vmatpush1.bf16.msra.mxu0 %v926
      %1191 = vmatprep.subr.bf16.mxu0 0
      %1192 = vmatpush1.bf16.msra.mxu0 %v927
      %1193 = vmatprep.subr.bf16.mxu0 0
      %1194 = vmatpush1.bf16.msra.mxu0 %v928
      %1195 = vmatprep.subr.bf16.mxu0 0
      %1196 = vmatpush1.bf16.msra.mxu0 %v929
      %1197 = vmatprep.subr.bf16.mxu0 0
      %1198 = vmatpush1.bf16.msra.mxu0 %v930
      %1199 = vmatprep.subr.bf16.mxu0 0
      %1200 = vmatpush1.bf16.msra.mxu0 %v931
      %1201 = vmatprep.subr.bf16.mxu0 0
      %1202 = vmatpush1.bf16.msra.mxu0 %v932
      %1203 = vmatprep.subr.bf16.mxu0 0
      %1204 = vmatpush1.bf16.msra.mxu0 %v933
      %1205 = vmatprep.subr.bf16.mxu0 0
      %1206 = vmatpush1.bf16.msra.mxu0 %v934
      %1207 = vmatprep.subr.bf16.mxu0 0
      %1208 = vmatpush1.bf16.msra.mxu0 %v935
      %1209 = vmatprep.subr.bf16.mxu0 0
      %1210 = vmatpush1.bf16.msra.mxu0 %v936
      %1211 = vmatprep.mubr.bf16.mxu0 %v452
      %1212 = vmatmul.mubr.bf16.gmra.mrb[0].mxu0 %v451
      %v1213 = vpop.f32.mrb[0].mxu0
      %v1214 = vadd.f32 %v1173, %v1213
      %v1215 = vpop.f32.mrb[0].mxu0
      %v1216 = vpop.f32.mrb[0].mxu0
      %v1217 = vadd.f32 %v1176, %v1216
      %v1218 = vpop.f32.mrb[0].mxu0
      %1219 = vdwg.mxu0
      %1220 = vmatprep.subr.bf16.mxu0 0
      %1221 = vmatpush1.bf16.msra.mxu0 %v937
      %1222 = vmatprep.subr.bf16.mxu0 0
      %1223 = vmatpush1.bf16.msra.mxu0 %v938
      %1224 = vmatprep.subr.bf16.mxu0 0
      %1225 = vmatpush1.bf16.msra.mxu0 %v939
      %1226 = vmatprep.subr.bf16.mxu0 0
      %1227 = vmatpush1.bf16.msra.mxu0 %v940
      %1228 = vmatprep.subr.bf16.mxu0 0
      %1229 = vmatpush1.bf16.msra.mxu0 %v941
      %1230 = vmatprep.subr.bf16.mxu0 0
      %1231 = vmatpush1.bf16.msra.mxu0 %v942
      %1232 = vmatprep.subr.bf16.mxu0 0
      %1233 = vmatpush1.bf16.msra.mxu0 %v943
      %1234 = vmatprep.subr.bf16.mxu0 0
      %1235 = vmatpush1.bf16.msra.mxu0 %v944
      %1236 = vmatprep.subr.bf16.mxu0 0
      %1237 = vmatpush1.bf16.msra.mxu0 %v945
      %1238 = vmatprep.subr.bf16.mxu0 0
      %1239 = vmatpush1.bf16.msra.mxu0 %v946
      %1240 = vmatprep.subr.bf16.mxu0 0
      %1241 = vmatpush1.bf16.msra.mxu0 %v947
      %1242 = vmatprep.subr.bf16.mxu0 0
      %1243 = vmatpush1.bf16.msra.mxu0 %v948
      %1244 = vmatprep.subr.bf16.mxu0 0
      %1245 = vmatpush1.bf16.msra.mxu0 %v949
      %1246 = vmatprep.subr.bf16.mxu0 0
      %1247 = vmatpush1.bf16.msra.mxu0 %v950
      %1248 = vmatprep.subr.bf16.mxu0 0
      %1249 = vmatpush1.bf16.msra.mxu0 %v951
      %1250 = vmatprep.subr.bf16.mxu0 0
      %1251 = vmatpush1.bf16.msra.mxu0 %v952
      %1252 = vmatprep.mubr.bf16.mxu0 %v454
      %1253 = vmatmul.mubr.bf16.gmra.mrb[0].mxu0 %v453
      %v1254 = vpop.f32.mrb[0].mxu0
      %v1255 = vadd.f32 %v1214, %v1254
      %v1256 = vpop.f32.mrb[0].mxu0
      %v1257 = vpop.f32.mrb[0].mxu0
      %v1258 = vadd.f32 %v1217, %v1257
      %v1259 = vpop.f32.mrb[0].mxu0
      %1260 = vdwg.mxu0
      %1261 = vmatprep.subr.bf16.mxu0 0
      %1262 = vmatpush1.bf16.msra.mxu0 %v953
      %1263 = vmatprep.subr.bf16.mxu0 0
      %1264 = vmatpush1.bf16.msra.mxu0 %v954
      %1265 = vmatprep.subr.bf16.mxu0 0
      %1266 = vmatpush1.bf16.msra.mxu0 %v955
      %1267 = vmatprep.subr.bf16.mxu0 0
      %1268 = vmatpush1.bf16.msra.mxu0 %v956
      %1269 = vmatprep.subr.bf16.mxu0 0
      %1270 = vmatpush1.bf16.msra.mxu0 %v957
      %1271 = vmatprep.subr.bf16.mxu0 0
      %1272 = vmatpush1.bf16.msra.mxu0 %v958
      %1273 = vmatprep.subr.bf16.mxu0 0
      %1274 = vmatpush1.bf16.msra.mxu0 %v959
      %1275 = vmatprep.subr.bf16.mxu0 0
      %1276 = vmatpush1.bf16.msra.mxu0 %v960
      %1277 = vmatprep.subr.bf16.mxu0 0
      %1278 = vmatpush1.bf16.msra.mxu0 %v961
      %1279 = vmatprep.subr.bf16.mxu0 0
      %1280 = vmatpush1.bf16.msra.mxu0 %v962
      %1281 = vmatprep.subr.bf16.mxu0 0
      %1282 = vmatpush1.bf16.msra.mxu0 %v963
      %1283 = vmatprep.subr.bf16.mxu0 0
      %1284 = vmatpush1.bf16.msra.mxu0 %v964
      %1285 = vmatprep.subr.bf16.mxu0 0
      %1286 = vmatpush1.bf16.msra.mxu0 %v965
      %1287 = vmatprep.subr.bf16.mxu0 0
      %1288 = vmatpush1.bf16.msra.mxu0 %v966
      %1289 = vmatprep.subr.bf16.mxu0 0
      %1290 = vmatpush1.bf16.msra.mxu0 %v967
      %1291 = vmatprep.subr.bf16.mxu0 0
      %1292 = vmatpush1.bf16.msra.mxu0 %v968
      %1293 = vmatprep.mubr.bf16.mxu0 %v456
      %1294 = vmatmul.mubr.bf16.gmra.mrb[0].mxu0 %v455
      %v1295 = vpop.f32.mrb[0].mxu0
      %v1296 = vadd.f32 %v1255, %v1295
      %v1297 = vpop.f32.mrb[0].mxu0
      %v1298 = vpop.f32.mrb[0].mxu0
      %v1299 = vadd.f32 %v1258, %v1298
      %v1300 = vpop.f32.mrb[0].mxu0
      %1301 = vdwg.mxu0
      %1302 = vmatprep.subr.bf16.mxu0 0
      %1303 = vmatpush1.bf16.msra.mxu0 %v969
      %1304 = vmatprep.subr.bf16.mxu0 0
      %1305 = vmatpush1.bf16.msra.mxu0 %v970
      %1306 = vmatprep.subr.bf16.mxu0 0
      %1307 = vmatpush1.bf16.msra.mxu0 %v971
      %1308 = vmatprep.subr.bf16.mxu0 0
      %1309 = vmatpush1.bf16.msra.mxu0 %v972
      %1310 = vmatprep.subr.bf16.mxu0 0
      %1311 = vmatpush1.bf16.msra.mxu0 %v973
      %1312 = vmatprep.subr.bf16.mxu0 0
      %1313 = vmatpush1.bf16.msra.mxu0 %v974
      %1314 = vmatprep.subr.bf16.mxu0 0
      %1315 = vmatpush1.bf16.msra.mxu0 %v975
      %1316 = vmatprep.subr.bf16.mxu0 0
      %1317 = vmatpush1.bf16.msra.mxu0 %v976
      %1318 = vmatprep.subr.bf16.mxu0 0
      %1319 = vmatpush1.bf16.msra.mxu0 %v977
      %1320 = vmatprep.subr.bf16.mxu0 0
      %1321 = vmatpush1.bf16.msra.mxu0 %v978
      %1322 = vmatprep.subr.bf16.mxu0 0
      %1323 = vmatpush1.bf16.msra.mxu0 %v979
      %1324 = vmatprep.subr.bf16.mxu0 0
      %1325 = vmatpush1.bf16.msra.mxu0 %v980
      %1326 = vmatprep.subr.bf16.mxu0 0
      %1327 = vmatpush1.bf16.msra.mxu0 %v981
      %1328 = vmatprep.subr.bf16.mxu0 0
      %1329 = vmatpush1.bf16.msra.mxu0 %v982
      %1330 = vmatprep.subr.bf16.mxu0 0
      %1331 = vmatpush1.bf16.msra.mxu0 %v983
      %1332 = vmatprep.subr.bf16.mxu0 0
      %1333 = vmatpush1.bf16.msra.mxu0 %v984
      %1334 = vmatprep.mubr.bf16.mxu0 %v458
      %1335 = vmatmul.mubr.bf16.gmra.mrb[0].mxu0 %v457
      %v1336 = vpop.f32.mrb[0].mxu0
      %v1337 = vadd.f32 %v1296, %v1336
      %v1338 = vpop.f32.mrb[0].mxu0
      %v1339 = vpop.f32.mrb[0].mxu0
      %v1340 = vadd.f32 %v1299, %v1339
      %v1341 = vpop.f32.mrb[0].mxu0
      %1342 = vdwg.mxu0
      %1343 = vmatprep.subr.bf16.mxu0 0
      %1344 = vmatpush1.bf16.msra.mxu0 %v985
      %1345 = vmatprep.subr.bf16.mxu0 0
      %1346 = vmatpush1.bf16.msra.mxu0 %v986
      %1347 = vmatprep.subr.bf16.mxu0 0
      %1348 = vmatpush1.bf16.msra.mxu0 %v987
      %1349 = vmatprep.subr.bf16.mxu0 0
      %1350 = vmatpush1.bf16.msra.mxu0 %v988
      %1351 = vmatprep.subr.bf16.mxu0 0
      %1352 = vmatpush1.bf16.msra.mxu0 %v989
      %1353 = vmatprep.subr.bf16.mxu0 0
      %1354 = vmatpush1.bf16.msra.mxu0 %v990
      %1355 = vmatprep.subr.bf16.mxu0 0
      %1356 = vmatpush1.bf16.msra.mxu0 %v991
      %1357 = vmatprep.subr.bf16.mxu0 0
      %1358 = vmatpush1.bf16.msra.mxu0 %v992
      %1359 = vmatprep.subr.bf16.mxu0 0
      %1360 = vmatpush1.bf16.msra.mxu0 0
      %1361 = vmatprep.subr.bf16.mxu0 0
      %1362 = vmatpush1.bf16.msra.mxu0 0
      %1363 = vmatprep.subr.bf16.mxu0 0
      %1364 = vmatpush1.bf16.msra.mxu0 0
      %1365 = vmatprep.subr.bf16.mxu0 0
      %1366 = vmatpush1.bf16.msra.mxu0 0
      %1367 = vmatprep.subr.bf16.mxu0 0
      %1368 = vmatpush1.bf16.msra.mxu0 0
      %1369 = vmatprep.subr.bf16.mxu0 0
      %1370 = vmatpush1.bf16.msra.mxu0 0
      %1371 = vmatprep.subr.bf16.mxu0 0
      %1372 = vmatpush1.bf16.msra.mxu0 0
      %1373 = vmatprep.subr.bf16.mxu0 0
      %1374 = vmatpush1.bf16.msra.mxu0 0
      %1375 = vmatprep.mubr.bf16.mxu0 0
      %1376 = vmatmul.mubr.bf16.gmra.mrb[0].mxu0 %v459
      %v1377 = vpop.f32.mrb[0].mxu0
      %v1378 = vadd.f32 %v1337, %v1377
      %v1379 = vpop.f32.mrb[0].mxu0
      %v1380 = vpop.f32.mrb[0].mxu0
      %v1381 = vadd.f32 %v1340, %v1380
      %v1382 = vpop.f32.mrb[0].mxu0
      %1383 = vdwg.mxu0
      %1384 = vst [vmem:[%s175] sm:$0xff] %v1378
      %1385 = vst [vmem:[%s175 + $0x8] sm:$0xff] %v1381
      %s1386 = smul.u32 2, %s14
      %p1387 = scmp.lt.s32.totalorder %s1386, 3
      %s1388 = scalar_select %p1387, %s1386, 3
      %s1389 = smul.addr %s1388, 8
      %s1390 = scalar_lea.vmem %s3, %s1389
      // Predicated region
      $region33: #{cnn_forward.5} parent=31 // pred_check
        %p1391 = pneg %p100
      $region34: #{cnn_forward.5} parent=31 // pred_check_branch
        %1393 = sbr.rel (%p1391) target = $region36
      $region35: #{cnn_forward.5} parent=31 // pred_region
        %s1394 = smul.u32 2, %s14
      $region36: #{cnn_forward.5} parent=31 // pred_fallthru
        _
    $region32: #{cnn_forward.5} parent=5 // pred_fallthru
      _
    %p1395 = scmp.le.s32.totalorder 2, %s9
    // Predicated region
    $region37: #{cnn_forward.5} parent=5 // pred_check
      %p1396 = pneg %p1395
    $region38: #{cnn_forward.5} parent=5 // pred_check_branch
      %1398 = sbr.rel (%p1396) target = $region40
    $region39: #{cnn_forward.5} parent=5 // pred_region
      %s1399 = ssub.s32 %s9, 2
      // Predicated region
      $region41: #{cnn_forward.5} parent=39 // pred_check
        %p1400 = pneg %p106
      $region42: #{cnn_forward.5} parent=39 // pred_check_branch
        %1402 = sbr.rel (%p1400) target = $region44
      $region43: #{cnn_forward.5} parent=39 // pred_region
        %s1403 = smul.u32 2, %s15
        %p1404 = scmp.lt.s32.totalorder %s1403, 3
        %s1405 = scalar_select %p1404, %s1403, 3
        %s1406 = smul.addr %s1405, 8
        %s1407 = scalar_lea.vmem %s3, %s1406
      $region44: #{cnn_forward.5} parent=39 // pred_fallthru
        _
    $region40: #{cnn_forward.5} parent=5 // pred_fallthru
      _
  $region6: #{cnn_forward.5} parent=0 // loop_footer
    %s13 = sadd.s32 1, %s9
  $region7: #{cnn_forward.5} parent=0 // loop_footer_branch
    %8 = sbr.rel target = $region3
  $region8: #{cnn_forward.5} parent=0 // loop_exit
    _

</llo_original>
